<compile_context>
chip_gen: v7x
topology: tpu7x:2x2x1
jax: 0.10.0
libtpu: 0.0.40
codegen_flags: <defaults>
</compile_context>

<pallas_src>
import jax
import jax.numpy as jnp
from jax import lax
from jax.experimental import pallas as pl
from jax.experimental.pallas import tpu as pltpu


def _make_kernel(tm, tn, n_valid, scrub_nan):
    """Kernel over one (tm, tn) tile of the pairwise-energy plane."""

    def kernel(a_ref, a2_ref, mcol_ref, bt_ref, b2_ref, mrow_ref, vvm_ref, p_ref):
        j = pl.program_id(1)

        @pl.when(j == 0)
        def _init():
            p_ref[...] = jnp.zeros_like(p_ref)

        # G[r, c] = -2 * A[r, :] . B[c, :]  (-2 folded into the LHS in the wrapper).
        # Lane-dense NN matmul: (tm, H) x (H, tn) -> (tm, tn) on the MXU.
        g = jnp.dot(a_ref[...], bt_ref[...], preferred_element_type=jnp.float32)

        # ||B_c - A_r||^2 via the Gram identity; clamp tiny f32 cancellation negatives.
        sq = jnp.maximum(a2_ref[...] + b2_ref[...] + g, 0.0)

        # PyTorch Softplus(beta=1, threshold=20).  exp overflow to +inf is
        # discarded by the select (sq > 20 picks sq), so no inner min is needed.
        sp = jnp.where(sq > 20.0, sq, jnp.log1p(jnp.exp(sq)))

        # EUP approximate reciprocal + one Newton step (~f32 divide accuracy,
        # keeps the multi-op divide off the VALU).
        inv = pl.reciprocal(sp, approx=True)
        inv = inv * (2.0 - sp * inv)

        # energy[r, c] = m[r] * (vvm[r, c] * m[c]) * (inv^2 - inv);
        # the m[r] factor is applied once per row tile at finalize.
        e = (vvm_ref[...].astype(jnp.float32) * mrow_ref[...]) * (inv * inv - inv)
        if scrub_nan:
            # TODO(synk): reference scrubs NaN of the *final* energy (after m[r]);
            # with finite inputs no NaN arises, so this stays opt-in.
            e = jnp.where(jnp.isnan(e), 0.0, e)

        ones = jnp.ones((tn, 1), dtype=jnp.float32)

        row_start = pl.program_id(0) * tm
        col_start = j * tn
        # Tiles touching the diagonal need the r == c zeroing (reference forces
        # distance = 1 there => contribution 0); the ragged last column tile
        # reads undefined (possibly non-finite) vvm past N and must be masked.
        diag_tile = jnp.logical_and(row_start < col_start + tn,
                                    col_start < row_start + tm)
        edge_tile = col_start + tn > n_valid
        special = jnp.logical_or(diag_tile, edge_tile)

        @pl.when(jnp.logical_not(special))
        def _acc_fast():
            # Interior tile: no masking work at all; row-reduce on the idle MXU.
            p_ref[...] += jnp.dot(e, ones, preferred_element_type=jnp.float32)

        @pl.when(special)
        def _acc_masked():
            rows = row_start + lax.broadcasted_iota(jnp.int32, (tm, tn), 0)
            cols = col_start + lax.broadcasted_iota(jnp.int32, (tm, tn), 1)
            keep = jnp.logical_and(cols < n_valid, rows != cols)
            em = jnp.where(keep, e, 0.0)
            p_ref[...] += jnp.dot(em, ones, preferred_element_type=jnp.float32)

        @pl.when(j == pl.num_programs(1) - 1)
        def _finalize():
            p_ref[...] = p_ref[...] * mcol_ref[...]

    return kernel


def potential_energy(v, q, m, vvm, weight, bias, *, tm=256, tn=1024,
                     scrub_nan=False, vmem_limit_bytes=None):
    """v: (N, v_dim), q: (N, q_dim), m: (N, 1), vvm: (N, N).
    weight: (h_dim, v_dim + q_dim) torch layout, bias: (h_dim,)."""
    assert tm % 8 == 0 and tn % 128 == 0, "tile shape must satisfy (8, 128) tiling"

    vq = jnp.concatenate([v, q], axis=1).astype(jnp.float32)          # (N, D)
    N = vq.shape[0]
    H = weight.shape[0]

    # ---- O(N*H) prologue in plain XLA (hoisted out of the O(N^2) hot loop) ----
    A = jnp.dot(vq, weight.T.astype(jnp.float32))                     # (N, H)
    B = A + bias.reshape(1, H).astype(jnp.float32)                    # (N, H)
    a2 = jnp.sum(A * A, axis=1, keepdims=True)                        # (N, 1)
    b2 = jnp.sum(B * B, axis=1).reshape(1, N)                         # (1, N)
    a_neg2 = -2.0 * A                                                 # fold the -2 (O(N*H))
    bt = B.T                                                          # (H, N) lane-dense for MXU
    m_col = m.reshape(N, 1).astype(jnp.float32)
    m_row = m.reshape(1, N).astype(jnp.float32)

    npr = pl.cdiv(N, tm) * tm
    npc = pl.cdiv(N, tn) * tn
    # Pad only the cheap O(N*H)/O(N) side inputs.  vvm -- the only O(N^2)
    # stream -- is consumed unpadded in its native dtype; the diagonal and the
    # ragged edge are handled in-kernel (no extra HBM passes over N^2 data).
    a_neg2 = jnp.pad(a_neg2, ((0, npr - N), (0, 0)))
    a2 = jnp.pad(a2, ((0, npr - N), (0, 0)))
    m_col = jnp.pad(m_col, ((0, npr - N), (0, 0)))
    bt = jnp.pad(bt, ((0, 0), (0, npc - N)))
    b2 = jnp.pad(b2, ((0, 0), (0, npc - N)))
    m_row = jnp.pad(m_row, ((0, 0), (0, npc - N)))

    if vmem_limit_bytes is None:
        # ~2x double-buffered vvm tile + ~8 materialized (tm, tn) f32
        # intermediates + headroom; fits every generation at the defaults.
        vmem_limit_bytes = 10 * tm * tn * 4 + (4 << 20)

    grid = (npr // tm, npc // tn)
    kernel = _make_kernel(tm, tn, N, scrub_nan)

    p_full = pl.pallas_call(
        kernel,
        out_shape=jax.ShapeDtypeStruct((npr, 1), jnp.float32),
        grid_spec=pltpu.PrefetchScalarGridSpec(
            num_scalar_prefetch=0,
            grid=grid,
            in_specs=[
                pl.BlockSpec((tm, H), lambda i, j: (i, 0)),    # -2*A  (row tile)
                pl.BlockSpec((tm, 1), lambda i, j: (i, 0)),    # ||A||^2
                pl.BlockSpec((tm, 1), lambda i, j: (i, 0)),    # m (column vector)
                pl.BlockSpec((H, tn), lambda i, j: (0, j)),    # B^T   (col tile, lane-dense)
                pl.BlockSpec((1, tn), lambda i, j: (0, j)),    # ||B||^2
                pl.BlockSpec((1, tn), lambda i, j: (0, j)),    # m (row vector)
                pl.BlockSpec((tm, tn), lambda i, j: (i, j)),   # vvm  (pair tile, native dtype)
            ],
            out_specs=pl.BlockSpec((tm, 1), lambda i, j: (i, 0)),
        ),
        compiler_params=pltpu.CompilerParams(
            dimension_semantics=("parallel", "arbitrary"),
            vmem_limit_bytes=int(vmem_limit_bytes)),
    )(a_neg2, a2, m_col, bt, b2, m_row, vvm)

    return p_full[:N]


def potential_energy_ref(v, q, m, vvm, weight, bias):
    """Pure-JAX reference mirroring the PyTorch forward literally."""
    norm_m = m
    mm = norm_m * norm_m.reshape(1, -1)
    eye = jnp.eye(vvm.shape[1], dtype=jnp.float32)
    mask = vvm * mm
    vq = jnp.concatenate([v, q], axis=1)
    delta_vq = vq[None, :, :] - vq[:, None, :]
    root = jnp.einsum('ijd,hd->ijh', delta_vq, weight) + bias
    sq = jnp.sum(root ** 2, axis=2)
    sp = jnp.where(sq > 20.0, sq, jnp.log1p(jnp.exp(jnp.minimum(sq, 20.0))))
    distance = sp * (-eye + 1.0) + eye
    energy = mask * (distance ** (-2) - distance ** (-1))
    energy = jnp.where(jnp.isnan(energy), 0.0, energy)
    return jnp.sum(energy, axis=1, keepdims=True)


if __name__ == "__main__":
    # N=320 particles (exercises interior / diagonal / ragged-edge tiles),
    # v_dim=4, q_dim=4, h_dim=16.
    N, v_dim, q_dim, h_dim = 320, 4, 4, 16
    key = jax.random.PRNGKey(0)
    kv, kq, km, kvvm, kw, kb = jax.random.split(key, 6)

    v = jax.random.normal(kv, (N, v_dim), dtype=jnp.float32)
    q = jax.random.normal(kq, (N, q_dim), dtype=jnp.float32)
    m = jnp.abs(jax.random.normal(km, (N, 1), dtype=jnp.float32)) + 0.5
    vvm = (jax.random.uniform(kvvm, (N, N)) > 0.3).astype(jnp.float32)

    # Deterministic parameter init (nn.Linear-like uniform).
    fan_in = v_dim + q_dim
    bound = 1.0 / (fan_in ** 0.5)
    weight = jax.random.uniform(kw, (h_dim, fan_in), minval=-bound, maxval=bound,
                                dtype=jnp.float32)
    bias = jax.random.uniform(kb, (h_dim,), minval=-bound, maxval=bound,
                              dtype=jnp.float32)

    p_ref = potential_energy_ref(v, q, m, vvm, weight, bias)

    # Small tiles: grid (3, 2) -> interior fast path, diagonal tiles and the
    # ragged last column tile are all exercised.
    p_small = jax.block_until_ready(
        potential_energy(v, q, m, vvm, weight, bias, tm=128, tn=256))
    assert p_small.shape == (N, 1)
    assert jnp.allclose(p_small, p_ref, rtol=1e-3, atol=1e-3), (
        float(jnp.max(jnp.abs(p_small - p_ref))))

    # Default (large) tiles: tm=256, tn=1024.
    p_big = jax.block_until_ready(potential_energy(v, q, m, vvm, weight, bias))
    assert jnp.allclose(p_big, p_ref, rtol=1e-3, atol=1e-3), (
        float(jnp.max(jnp.abs(p_big - p_ref))))

    print("KERNEL_OK")
</pallas_src>

<mosaic_0001>
module attributes {stable_mosaic.version = 11 : i64} {
  func.func @kernel(%arg0: i32, %arg1: i32, %arg2: memref<128x16xf32, #tpu.memory_space<vmem>>, %arg3: memref<128x1xf32, #tpu.memory_space<vmem>>, %arg4: memref<128x1xf32, #tpu.memory_space<vmem>>, %arg5: memref<16x256xf32, #tpu.memory_space<vmem>>, %arg6: memref<1x256xf32, #tpu.memory_space<vmem>>, %arg7: memref<1x256xf32, #tpu.memory_space<vmem>>, %arg8: memref<128x256xf32, #tpu.memory_space<vmem>>, %arg9: memref<128x1xf32, #tpu.memory_space<vmem>>) attributes {dimension_semantics = [#tpu.dimension_semantics<parallel>, #tpu.dimension_semantics<arbitrary>], iteration_bounds = array<i64: 3, 2>, scalar_prefetch = 0 : i64, scratch_operands = 0 : i64, tpu.core_type = #tpu.core_type<tc>, window_params = [{transform_indices = @transform_0, window_bounds = array<i64: 128, 16>}, {transform_indices = @transform_1, window_bounds = array<i64: 128, 1>}, {transform_indices = @transform_2, window_bounds = array<i64: 128, 1>}, {transform_indices = @transform_3, window_bounds = array<i64: 16, 256>}, {transform_indices = @transform_4, window_bounds = array<i64: 1, 256>}, {transform_indices = @transform_5, window_bounds = array<i64: 1, 256>}, {transform_indices = @transform_6, window_bounds = array<i64: 128, 256>}, {transform_indices = @transform_7, window_bounds = array<i64: 128, 1>}]} {
    %c0_i32 = arith.constant 0 : i32
    %0 = arith.cmpi eq, %arg1, %c0_i32 : i32
    %1 = arith.extui %0 : i1 to i32
    %c0_i32_0 = arith.constant 0 : i32
    %2 = arith.cmpi ne, %1, %c0_i32_0 : i32
    scf.if %2 {
      %cst_22 = arith.constant 0.000000e+00 : f32
      %50 = vector.broadcast %cst_22 : f32 to vector<128x1xf32>
      %c0_23 = arith.constant 0 : index
      %c0_24 = arith.constant 0 : index
      %51 = vector.load %arg9[%c0_23, %c0_24] : memref<128x1xf32, #tpu.memory_space<vmem>>, vector<128x1xf32>
      tpu.vector_store %arg9[%c0_23, %c0_24], %50 {strides = array<i32>} : memref<128x1xf32, #tpu.memory_space<vmem>>, vector<128x1xf32>,
    } else {
    }
    %c0 = arith.constant 0 : index
    %c0_1 = arith.constant 0 : index
    %3 = vector.load %arg2[%c0, %c0_1] : memref<128x16xf32, #tpu.memory_space<vmem>>, vector<128x16xf32>
    %c0_2 = arith.constant 0 : index
    %c0_3 = arith.constant 0 : index
    %4 = vector.load %arg5[%c0_2, %c0_3] : memref<16x256xf32, #tpu.memory_space<vmem>>, vector<16x256xf32>
    %cst = arith.constant dense<0.000000e+00> : vector<128x256xf32>
    %5 = tpu.matmul %3, %4, %cst {dimension_numbers = #tpu.dot_dimension_numbers<[1], [0], [0], [1], [0, 0, 1, 1], [], []>} : vector<128x16xf32>, vector<16x256xf32>, vector<128x256xf32> -> vector<128x256xf32>
    %c0_4 = arith.constant 0 : index
    %c0_5 = arith.constant 0 : index
    %6 = vector.load %arg3[%c0_4, %c0_5] : memref<128x1xf32, #tpu.memory_space<vmem>>, vector<128x1xf32>
    %c0_6 = arith.constant 0 : index
    %c0_7 = arith.constant 0 : index
    %7 = vector.load %arg6[%c0_6, %c0_7] : memref<1x256xf32, #tpu.memory_space<vmem>>, vector<1x256xf32>
    %8 = vector.broadcast %6 : vector<128x1xf32> to vector<128x256xf32>
    %9 = vector.broadcast %7 : vector<1x256xf32> to vector<128x256xf32>
    %10 = arith.addf %8, %9 : vector<128x256xf32>
    %11 = arith.addf %10, %5 : vector<128x256xf32>
    %cst_8 = arith.constant 0.000000e+00 : f32
    %12 = vector.broadcast %cst_8 : f32 to vector<128x256xf32>
    %13 = arith.maximumf %11, %12 : vector<128x256xf32>
    %cst_9 = arith.constant 2.000000e+01 : f32
    %14 = vector.broadcast %cst_9 : f32 to vector<128x256xf32>
    %15 = arith.cmpf ogt, %13, %14 : vector<128x256xf32>
    %16 = math.exp %13 : vector<128x256xf32>
    %17 = math.log1p %16 : vector<128x256xf32>
    %18 = arith.select %15, %13, %17 : vector<128x256xi1>, vector<128x256xf32>
    %19 = tpu.reciprocal %18 {approx = true} : vector<128x256xf32> -> vector<128x256xf32>
    %20 = arith.mulf %18, %19 : vector<128x256xf32>
    %cst_10 = arith.constant 2.000000e+00 : f32
    %21 = vector.broadcast %cst_10 : f32 to vector<128x256xf32>
    %22 = arith.subf %21, %20 : vector<128x256xf32>
    %23 = arith.mulf %19, %22 : vector<128x256xf32>
    %c0_11 = arith.constant 0 : index
    %c0_12 = arith.constant 0 : index
    %24 = vector.load %arg8[%c0_11, %c0_12] : memref<128x256xf32, #tpu.memory_space<vmem>>, vector<128x256xf32>
    %c0_13 = arith.constant 0 : index
    %c0_14 = arith.constant 0 : index
    %25 = vector.load %arg7[%c0_13, %c0_14] : memref<1x256xf32, #tpu.memory_space<vmem>>, vector<1x256xf32>
    %26 = vector.broadcast %25 : vector<1x256xf32> to vector<128x256xf32>
    %27 = arith.mulf %24, %26 : vector<128x256xf32>
    %28 = arith.mulf %23, %23 : vector<128x256xf32>
    %29 = arith.subf %28, %23 : vector<128x256xf32>
    %30 = arith.mulf %27, %29 : vector<128x256xf32>
    %cst_15 = arith.constant 1.000000e+00 : f32
    %31 = vector.broadcast %cst_15 : f32 to vector<256x1xf32>
    %c128_i32 = arith.constant 128 : i32
    %32 = arith.muli %arg0, %c128_i32 : i32
    %c256_i32 = arith.constant 256 : i32
    %33 = arith.muli %arg1, %c256_i32 : i32
    %c256_i32_16 = arith.constant 256 : i32
    %34 = arith.addi %33, %c256_i32_16 : i32
    %35 = arith.cmpi slt, %32, %34 : i32
    %c128_i32_17 = arith.constant 128 : i32
    %36 = arith.addi %32, %c128_i32_17 : i32
    %37 = arith.cmpi slt, %33, %36 : i32
    %38 = arith.andi %35, %37 : i1
    %c256_i32_18 = arith.constant 256 : i32
    %39 = arith.addi %33, %c256_i32_18 : i32
    %c320_i32 = arith.constant 320 : i32
    %40 = arith.cmpi sgt, %39, %c320_i32 : i32
    %41 = arith.ori %38, %40 : i1
    %true = arith.constant true
    %42 = arith.xori %41, %true : i1
    %43 = arith.extui %42 : i1 to i32
    %c0_i32_19 = arith.constant 0 : i32
    %44 = arith.cmpi ne, %43, %c0_i32_19 : i32
    scf.if %44 {
      %c0_22 = arith.constant 0 : index
      %c0_23 = arith.constant 0 : index
      %50 = vector.load %arg9[%c0_22, %c0_23] : memref<128x1xf32, #tpu.memory_space<vmem>>, vector<128x1xf32>
      %cst_24 = arith.constant dense<0.000000e+00> : vector<128x1xf32>
      %51 = tpu.matmul %30, %31, %cst_24 {dimension_numbers = #tpu.dot_dimension_numbers<[1], [0], [0], [1], [0, 0, 1, 1], [], []>} : vector<128x256xf32>, vector<256x1xf32>, vector<128x1xf32> -> vector<128x1xf32>
      %52 = arith.addf %50, %51 : vector<128x1xf32>
      %c0_25 = arith.constant 0 : index
      %c0_26 = arith.constant 0 : index
      %53 = vector.load %arg9[%c0_25, %c0_26] : memref<128x1xf32, #tpu.memory_space<vmem>>, vector<128x1xf32>
      tpu.vector_store %arg9[%c0_25, %c0_26], %52 {strides = array<i32>} : memref<128x1xf32, #tpu.memory_space<vmem>>, vector<128x1xf32>,
    } else {
    }
    %45 = arith.extui %41 : i1 to i32
    %c0_i32_20 = arith.constant 0 : i32
    %46 = arith.cmpi ne, %45, %c0_i32_20 : i32
    scf.if %46 {
      %50 = tpu.iota {dimensions = array<i32: 0>} : vector<128x256xi32>
      %51 = vector.broadcast %32 : i32 to vector<128x256xi32>
      %52 = arith.addi %51, %50 : vector<128x256xi32>
      %53 = tpu.iota {dimensions = array<i32: 1>} : vector<128x256xi32>
      %54 = vector.broadcast %33 : i32 to vector<128x256xi32>
      %55 = arith.addi %54, %53 : vector<128x256xi32>
      %c320_i32_22 = arith.constant 320 : i32
      %56 = vector.broadcast %c320_i32_22 : i32 to vector<128x256xi32>
      %57 = arith.cmpi slt, %55, %56 : vector<128x256xi32>
      %58 = arith.cmpi ne, %52, %55 : vector<128x256xi32>
      %59 = arith.andi %57, %58 : vector<128x256xi1>
      %cst_23 = arith.constant 0.000000e+00 : f32
      %60 = vector.broadcast %cst_23 : f32 to vector<128x256xf32>
      %61 = arith.select %59, %30, %60 : vector<128x256xi1>, vector<128x256xf32>
      %c0_24 = arith.constant 0 : index
      %c0_25 = arith.constant 0 : index
      %62 = vector.load %arg9[%c0_24, %c0_25] : memref<128x1xf32, #tpu.memory_space<vmem>>, vector<128x1xf32>
      %cst_26 = arith.constant dense<0.000000e+00> : vector<128x1xf32>
      %63 = tpu.matmul %61, %31, %cst_26 {dimension_numbers = #tpu.dot_dimension_numbers<[1], [0], [0], [1], [0, 0, 1, 1], [], []>} : vector<128x256xf32>, vector<256x1xf32>, vector<128x1xf32> -> vector<128x1xf32>
      %64 = arith.addf %62, %63 : vector<128x1xf32>
      %c0_27 = arith.constant 0 : index
      %c0_28 = arith.constant 0 : index
      %65 = vector.load %arg9[%c0_27, %c0_28] : memref<128x1xf32, #tpu.memory_space<vmem>>, vector<128x1xf32>
      tpu.vector_store %arg9[%c0_27, %c0_28], %64 {strides = array<i32>} : memref<128x1xf32, #tpu.memory_space<vmem>>, vector<128x1xf32>,
    } else {
    }
    %c1_i32 = arith.constant 1 : i32
    %47 = arith.cmpi eq, %arg1, %c1_i32 : i32
    %48 = arith.extui %47 : i1 to i32
    %c0_i32_21 = arith.constant 0 : i32
    %49 = arith.cmpi ne, %48, %c0_i32_21 : i32
    scf.if %49 {
      %c0_22 = arith.constant 0 : index
      %c0_23 = arith.constant 0 : index
      %50 = vector.load %arg9[%c0_22, %c0_23] : memref<128x1xf32, #tpu.memory_space<vmem>>, vector<128x1xf32>
      %c0_24 = arith.constant 0 : index
      %c0_25 = arith.constant 0 : index
      %51 = vector.load %arg4[%c0_24, %c0_25] : memref<128x1xf32, #tpu.memory_space<vmem>>, vector<128x1xf32>
      %52 = arith.mulf %50, %51 : vector<128x1xf32>
      %c0_26 = arith.constant 0 : index
      %c0_27 = arith.constant 0 : index
      %53 = vector.load %arg9[%c0_26, %c0_27] : memref<128x1xf32, #tpu.memory_space<vmem>>, vector<128x1xf32>
      tpu.vector_store %arg9[%c0_26, %c0_27], %52 {strides = array<i32>} : memref<128x1xf32, #tpu.memory_space<vmem>>, vector<128x1xf32>,
    } else {
    }
    return
  }
  func.func @transform_0(%arg0: i32, %arg1: i32) -> (i32, i32) {
    %c0_i32 = arith.constant 0 : i32
    %c0_i32_0 = arith.constant 0 : i32
    return %arg0, %c0_i32 : i32, i32
  }
  func.func @transform_1(%arg0: i32, %arg1: i32) -> (i32, i32) {
    %c0_i32 = arith.constant 0 : i32
    %c0_i32_0 = arith.constant 0 : i32
    return %arg0, %c0_i32 : i32, i32
  }
  func.func @transform_2(%arg0: i32, %arg1: i32) -> (i32, i32) {
    %c0_i32 = arith.constant 0 : i32
    %c0_i32_0 = arith.constant 0 : i32
    return %arg0, %c0_i32 : i32, i32
  }
  func.func @transform_3(%arg0: i32, %arg1: i32) -> (i32, i32) {
    %c0_i32 = arith.constant 0 : i32
    %c0_i32_0 = arith.constant 0 : i32
    return %c0_i32, %arg1 : i32, i32
  }
  func.func @transform_4(%arg0: i32, %arg1: i32) -> (i32, i32) {
    %c0_i32 = arith.constant 0 : i32
    %c0_i32_0 = arith.constant 0 : i32
    return %c0_i32, %arg1 : i32, i32
  }
  func.func @transform_5(%arg0: i32, %arg1: i32) -> (i32, i32) {
    %c0_i32 = arith.constant 0 : i32
    %c0_i32_0 = arith.constant 0 : i32
    return %c0_i32, %arg1 : i32, i32
  }
  func.func @transform_6(%arg0: i32, %arg1: i32) -> (i32, i32) {
    %c0_i32 = arith.constant 0 : i32
    return %arg0, %arg1 : i32, i32
  }
  func.func @transform_7(%arg0: i32, %arg1: i32) -> (i32, i32) {
    %c0_i32 = arith.constant 0 : i32
    %c0_i32_0 = arith.constant 0 : i32
    return %arg0, %c0_i32 : i32, i32
  }
}

</mosaic_0001>

<llo_original>
// kernel: tpu_custom_call.1
$region0: #{tpu_custom_call.1}
  #allocation0 [shape = 'u32[]', space=smem, size = 0x4, offset = 0x4, fixed_abs, tag = 'smem constant byte address 0x4 - core index']
  #allocation1 [shape = 'u32[144,128]{1,0:T(1,128)}', space=vmem, size = 0x12000, scoped, tag = 'internal scratch']
  %s0 = inlined_call_operand.vmem [shape: f32[384,16], index: 0, kind: input, shape index: {}]
  %s1 = inlined_call_operand.vmem [shape: f32[384,1], index: 1, kind: input, shape index: {}]
  %s2 = inlined_call_operand.vmem [shape: f32[384,1], index: 2, kind: input, shape index: {}]
  %s3 = inlined_call_operand.vmem [shape: f32[16,512], index: 3, kind: input, shape index: {}]
  %s4 = inlined_call_operand.vmem [shape: f32[1,512], index: 4, kind: input, shape index: {}]
  %s5 = inlined_call_operand.vmem [shape: f32[1,512], index: 5, kind: input, shape index: {}]
  %s6 = inlined_call_operand.vmem [shape: f32[320,320], index: 6, kind: input, shape index: {}]
  %s7 = inlined_call_operand.vmem [shape: f32[384,1], index: 7, kind: output, shape index: {}]
  %s8 = sld [smem:[#allocation0]]
  $region194: #{tpu_custom_call.1} parent=0
    _
  %s10 = ssub.s32 1, %s8
  %s11 = scalar_select 0, %s10, %s8
  $region1: #{tpu_custom_call.1} parent=0
    #allocation2 [shape = 'u8[32768]{0}', space=vmem, size = 0x8000, scoped, tag = 'input window, operand 3']
    #allocation3 [shape = 'u8[262144]{0}', space=vmem, size = 0x40000, scoped, tag = 'input window, operand 6']
    loop: start=0, step=1, limit=8
    $region2: #{tpu_custom_call.1} parent=1 // loop_pre_header
      _
    $region3: #{tpu_custom_call.1} parent=1 // loop_header
      %s13 = sphi 0, %s17
      %p14 = scmp.ge.s32.totalorder %s13, 8
      %s20 = sphi 0, %s32
      %s21 = sphi 0, %s28
      %s22 = sphi 0, %s20
      %s23 = sphi 0, %s21
      %s24 = sphi 0, %s22
      %s25 = sphi 0, %s23
      %s35 = sphi 0, %s37
      %s38 = sphi 0, %s35
      %s39 = sphi 0, %s38
      %s55 = sphi 0, %s39
      %s61 = sphi 0, %s63
      %s64 = sphi 0, %s61
      %s65 = sphi 0, %s64
      %s81 = sphi 0, %s65
      %s87 = sphi 0, %s89
      %s90 = sphi 0, %s87
      %s91 = sphi 0, %s90
      %s107 = sphi 0, %s91
      %s113 = sphi 0, %s115
      %s116 = sphi 0, %s113
      %s117 = sphi 0, %s116
      %s133 = sphi 0, %s117
      %s139 = sphi 0, %s141
      %s142 = sphi 0, %s139
      %s143 = sphi 0, %s142
      %s159 = sphi 0, %s143
      %s165 = sphi 0, %s167
      %s168 = sphi 0, %s165
      %s169 = sphi 0, %s168
      %s185 = sphi 0, %s169
      %s193 = sphi 0, %s195
      %s196 = sphi 0, %s193
      %s197 = sphi 0, %s196
      %s213 = sphi 0, %s197
      %s219 = sphi 0, %s221
      %s222 = sphi 0, %s219
      %s223 = sphi 0, %s222
      %s239 = sphi 0, %s223
    $region4: #{tpu_custom_call.1} parent=1 // loop_header_branch
      %16 = sbr.rel (%p14) target = $region8
    $region5: #{tpu_custom_call.1} parent=1 // loop_body
      %s18 = ssub.s32 %s13, 1
      %s19 = ssub.s32 %s13, 2
      %s26 = sadd.s32 1, %s21
      %p27 = scmp.ge.s32.totalorder %s26, 2
      %s28 = scalar_select %p27, 0, %s26
      %s29 = sadd.s32 1, %s20
      %s30 = scalar_select %p27, %s29, %s20
      %p31 = scmp.ge.s32.totalorder %s30, 3
      %s32 = scalar_select %p31, 0, %s30
      %s33 = ssub.s32 %s20, %s32
      %p34 = scmp.eq.s32.totalorder %s33, 0
      %s36 = sadd.s32 %s35, 1
      %s37 = scalar_select %p34, %s35, %s36
      %p40 = pneg %p34
      %p41 = scmp.eq.s32.totalorder %s13, 5
      %p42 = por %p40, %p41
      %p43 = scmp.ne.s32.totalorder %s35, %s38
      %p44 = scmp.eq.s32.totalorder %s13, 0
      %p45 = por %p43, %p44
      %p46 = scmp.ne.s32.totalorder %s35, %s38
      %p47 = scmp.eq.s32.totalorder %s18, 5
      %p48 = por %p46, %p47
      %p49 = scmp.ne.s32.totalorder %s38, %s39
      %p50 = scmp.eq.s32.totalorder %s18, 0
      %p51 = por %p49, %p50
      %p52 = scmp.ne.s32.totalorder %s38, %s39
      %p53 = scmp.eq.s32.totalorder %s19, 5
      %p54 = por %p52, %p53
      %p56 = scmp.ne.s32.totalorder %s39, %s55
      %p57 = scmp.eq.s32.totalorder %s19, 0
      %p58 = por %p56, %p57
      %s59 = ssub.s32 %s20, %s32
      %p60 = scmp.eq.s32.totalorder %s59, 0
      %s62 = sadd.s32 %s61, 1
      %s63 = scalar_select %p60, %s61, %s62
      %p66 = pneg %p60
      %p67 = scmp.eq.s32.totalorder %s13, 5
      %p68 = por %p66, %p67
      %p69 = scmp.ne.s32.totalorder %s61, %s64
      %p70 = scmp.eq.s32.totalorder %s13, 0
      %p71 = por %p69, %p70
      %p72 = scmp.ne.s32.totalorder %s61, %s64
      %p73 = scmp.eq.s32.totalorder %s18, 5
      %p74 = por %p72, %p73
      %p75 = scmp.ne.s32.totalorder %s64, %s65
      %p76 = scmp.eq.s32.totalorder %s18, 0
      %p77 = por %p75, %p76
      %p78 = scmp.ne.s32.totalorder %s64, %s65
      %p79 = scmp.eq.s32.totalorder %s19, 5
      %p80 = por %p78, %p79
      %p82 = scmp.ne.s32.totalorder %s65, %s81
      %p83 = scmp.eq.s32.totalorder %s19, 0
      %p84 = por %p82, %p83
      %s85 = ssub.s32 %s20, %s32
      %p86 = scmp.eq.s32.totalorder %s85, 0
      %s88 = sadd.s32 %s87, 1
      %s89 = scalar_select %p86, %s87, %s88
      %p92 = pneg %p86
      %p93 = scmp.eq.s32.totalorder %s13, 5
      %p94 = por %p92, %p93
      %p95 = scmp.ne.s32.totalorder %s87, %s90
      %p96 = scmp.eq.s32.totalorder %s13, 0
      %p97 = por %p95, %p96
      %p98 = scmp.ne.s32.totalorder %s87, %s90
      %p99 = scmp.eq.s32.totalorder %s18, 5
      %p100 = por %p98, %p99
      %p101 = scmp.ne.s32.totalorder %s90, %s91
      %p102 = scmp.eq.s32.totalorder %s18, 0
      %p103 = por %p101, %p102
      %p104 = scmp.ne.s32.totalorder %s90, %s91
      %p105 = scmp.eq.s32.totalorder %s19, 5
      %p106 = por %p104, %p105
      %p108 = scmp.ne.s32.totalorder %s91, %s107
      %p109 = scmp.eq.s32.totalorder %s19, 0
      %p110 = por %p108, %p109
      %s111 = ssub.s32 %s21, %s28
      %p112 = scmp.eq.s32.totalorder %s111, 0
      %s114 = sadd.s32 %s113, 1
      %s115 = scalar_select %p112, %s113, %s114
      %p118 = pneg %p112
      %p119 = scmp.eq.s32.totalorder %s13, 5
      %p120 = por %p118, %p119
      %p121 = scmp.ne.s32.totalorder %s113, %s116
      %p122 = scmp.eq.s32.totalorder %s13, 0
      %p123 = por %p121, %p122
      %p124 = scmp.ne.s32.totalorder %s113, %s116
      %p125 = scmp.eq.s32.totalorder %s18, 5
      %p126 = por %p124, %p125
      %p127 = scmp.ne.s32.totalorder %s116, %s117
      %p128 = scmp.eq.s32.totalorder %s18, 0
      %p129 = por %p127, %p128
      %p130 = scmp.ne.s32.totalorder %s116, %s117
      %p131 = scmp.eq.s32.totalorder %s19, 5
      %p132 = por %p130, %p131
      %p134 = scmp.ne.s32.totalorder %s117, %s133
      %p135 = scmp.eq.s32.totalorder %s19, 0
      %p136 = por %p134, %p135
      %s137 = ssub.s32 %s21, %s28
      %p138 = scmp.eq.s32.totalorder %s137, 0
      %s140 = sadd.s32 %s139, 1
      %s141 = scalar_select %p138, %s139, %s140
      %p144 = pneg %p138
      %p145 = scmp.eq.s32.totalorder %s13, 5
      %p146 = por %p144, %p145
      %p147 = scmp.ne.s32.totalorder %s139, %s142
      %p148 = scmp.eq.s32.totalorder %s13, 0
      %p149 = por %p147, %p148
      %p150 = scmp.ne.s32.totalorder %s139, %s142
      %p151 = scmp.eq.s32.totalorder %s18, 5
      %p152 = por %p150, %p151
      %p153 = scmp.ne.s32.totalorder %s142, %s143
      %p154 = scmp.eq.s32.totalorder %s18, 0
      %p155 = por %p153, %p154
      %p156 = scmp.ne.s32.totalorder %s142, %s143
      %p157 = scmp.eq.s32.totalorder %s19, 5
      %p158 = por %p156, %p157
      %p160 = scmp.ne.s32.totalorder %s143, %s159
      %p161 = scmp.eq.s32.totalorder %s19, 0
      %p162 = por %p160, %p161
      %s163 = ssub.s32 %s21, %s28
      %p164 = scmp.eq.s32.totalorder %s163, 0
      %s166 = sadd.s32 %s165, 1
      %s167 = scalar_select %p164, %s165, %s166
      %p170 = pneg %p164
      %p171 = scmp.eq.s32.totalorder %s13, 5
      %p172 = por %p170, %p171
      %p173 = scmp.ne.s32.totalorder %s165, %s168
      %p174 = scmp.eq.s32.totalorder %s13, 0
      %p175 = por %p173, %p174
      %p176 = scmp.ne.s32.totalorder %s165, %s168
      %p177 = scmp.eq.s32.totalorder %s18, 5
      %p178 = por %p176, %p177
      %p179 = scmp.ne.s32.totalorder %s168, %s169
      %p180 = scmp.eq.s32.totalorder %s18, 0
      %p181 = por %p179, %p180
      %p182 = scmp.ne.s32.totalorder %s168, %s169
      %p183 = scmp.eq.s32.totalorder %s19, 5
      %p184 = por %p182, %p183
      %p186 = scmp.ne.s32.totalorder %s169, %s185
      %p187 = scmp.eq.s32.totalorder %s19, 0
      %p188 = por %p186, %p187
      %s189 = ssub.s32 %s20, %s32
      %s190 = ssub.s32 %s21, %s28
      %s191 = sor.u32 %s189, %s190
      %p192 = scmp.eq.s32.totalorder %s191, 0
      %s194 = sadd.s32 %s193, 1
      %s195 = scalar_select %p192, %s193, %s194
      %p198 = pneg %p192
      %p199 = scmp.eq.s32.totalorder %s13, 5
      %p200 = por %p198, %p199
      %p201 = scmp.ne.s32.totalorder %s193, %s196
      %p202 = scmp.eq.s32.totalorder %s13, 0
      %p203 = por %p201, %p202
      %p204 = scmp.ne.s32.totalorder %s193, %s196
      %p205 = scmp.eq.s32.totalorder %s18, 5
      %p206 = por %p204, %p205
      %p207 = scmp.ne.s32.totalorder %s196, %s197
      %p208 = scmp.eq.s32.totalorder %s18, 0
      %p209 = por %p207, %p208
      %p210 = scmp.ne.s32.totalorder %s196, %s197
      %p211 = scmp.eq.s32.totalorder %s19, 5
      %p212 = por %p210, %p211
      %p214 = scmp.ne.s32.totalorder %s197, %s213
      %p215 = scmp.eq.s32.totalorder %s19, 0
      %p216 = por %p214, %p215
      %s217 = ssub.s32 %s20, %s32
      %p218 = scmp.eq.s32.totalorder %s217, 0
      %s220 = sadd.s32 %s219, 1
      %s221 = scalar_select %p218, %s219, %s220
      %p224 = pneg %p218
      %p225 = scmp.eq.s32.totalorder %s13, 5
      %p226 = por %p224, %p225
      %p227 = scmp.ne.s32.totalorder %s219, %s222
      %p228 = scmp.eq.s32.totalorder %s13, 0
      %p229 = por %p227, %p228
      %p230 = scmp.ne.s32.totalorder %s219, %s222
      %p231 = scmp.eq.s32.totalorder %s18, 5
      %p232 = por %p230, %p231
      %p233 = scmp.ne.s32.totalorder %s222, %s223
      %p234 = scmp.eq.s32.totalorder %s18, 0
      %p235 = por %p233, %p234
      %p236 = scmp.ne.s32.totalorder %s222, %s223
      %p237 = scmp.eq.s32.totalorder %s19, 5
      %p238 = por %p236, %p237
      %p240 = scmp.ne.s32.totalorder %s223, %s239
      %p241 = scmp.eq.s32.totalorder %s19, 0
      %p242 = por %p240, %p241
      %p243 = scmp.le.s32.totalorder 1, %s13
      %p244 = scmp.lt.s32.totalorder %s13, 7
      %p245 = pnand %p243, %p244
      %p246 = pneg %p245
      // Predicated region
      $region9: #{tpu_custom_call.1} parent=5 // pred_check
        _
      $region10: #{tpu_custom_call.1} parent=5 // pred_check_branch
        %248 = sbr.rel (%p245) target = $region12
      $region11: #{tpu_custom_call.1} parent=5 // pred_region
        %s249 = ssub.s32 %s13, 1
      $region12: #{tpu_custom_call.1} parent=5 // pred_fallthru
        _
      %p250 = scmp.lt.s32.totalorder %s13, 6
      // Predicated region
      $region13: #{tpu_custom_call.1} parent=5 // pred_check
        %p251 = pneg %p250
      $region14: #{tpu_custom_call.1} parent=5 // pred_check_branch
        %253 = sbr.rel (%p251) target = $region16
      $region15: #{tpu_custom_call.1} parent=5 // pred_region
        // Predicated region
        $region17: #{tpu_custom_call.1} parent=15 // pred_check
          %p254 = pneg %p45
        $region18: #{tpu_custom_call.1} parent=15 // pred_check_branch
          %256 = sbr.rel (%p254) target = $region20
        $region19: #{tpu_custom_call.1} parent=15 // pred_region
          %s257 = smul.u32 16, %s20
          %p258 = scmp.lt.s32.totalorder %s257, 47
          %s259 = scalar_select %p258, %s257, 47
          %s260 = smul.addr %s259, 8
          %s261 = scalar_lea.vmem %s0, %s260
          %s262 = smul.u32 16, %s20
        $region20: #{tpu_custom_call.1} parent=15 // pred_fallthru
          _
        // Predicated region
        $region21: #{tpu_custom_call.1} parent=15 // pred_check
          %p263 = pneg %p71
        $region22: #{tpu_custom_call.1} parent=15 // pred_check_branch
          %265 = sbr.rel (%p263) target = $region24
        $region23: #{tpu_custom_call.1} parent=15 // pred_region
          %s266 = smul.u32 16, %s20
          %p267 = scmp.lt.s32.totalorder %s266, 47
          %s268 = scalar_select %p267, %s266, 47
          %s269 = smul.addr %s268, 8
          %s270 = scalar_lea.vmem %s1, %s269
          %s271 = smul.u32 16, %s20
        $region24: #{tpu_custom_call.1} parent=15 // pred_fallthru
          _
        // Predicated region
        $region25: #{tpu_custom_call.1} parent=15 // pred_check
          %p272 = pneg %p97
        $region26: #{tpu_custom_call.1} parent=15 // pred_check_branch
          %274 = sbr.rel (%p272) target = $region28
        $region27: #{tpu_custom_call.1} parent=15 // pred_region
          %s275 = smul.u32 16, %s20
          %p276 = scmp.lt.s32.totalorder %s275, 47
          %s277 = scalar_select %p276, %s275, 47
          %s278 = smul.addr %s277, 8
          %s279 = scalar_lea.vmem %s2, %s278
          %s280 = smul.u32 16, %s20
        $region28: #{tpu_custom_call.1} parent=15 // pred_fallthru
          _
        // Predicated region
        $region29: #{tpu_custom_call.1} parent=15 // pred_check
          %p281 = pneg %p123
        $region30: #{tpu_custom_call.1} parent=15 // pred_check_branch
          %283 = sbr.rel (%p281) target = $region32
        $region31: #{tpu_custom_call.1} parent=15 // pred_region
          %s284 = sand.u32 %s113, 1
          %s285 = sand.u32 %s113, 1
          %s286 = smul.addr %s285, 32
          %s287 = scalar_lea.vmem [#allocation2], %s286
          %s288 = smul.u32 2, %s21
          %s289 = smul.addr %s288, 8
          %s290 = scalar_lea.vmem %s3, %s289
          // Predicated region
          $region33: #{tpu_custom_call.1} parent=31 // pred_check
            _
          $region34: #{tpu_custom_call.1} parent=31 // pred_check_branch
            %292 = sbr.rel (0) target = $region36
          $region35: #{tpu_custom_call.1} parent=31 // pred_region
            // Predicated region
            $region37: #{tpu_custom_call.1} parent=35 // pred_check
              _
            $region38: #{tpu_custom_call.1} parent=35 // pred_check_branch
              %294 = sbr.rel (0) target = $region40
            $region39: #{tpu_custom_call.1} parent=35 // pred_region
              loop: start=0, step=1, limit=1
              $region41: #{tpu_custom_call.1} parent=39 // loop_pre_header
                _
              $region42: #{tpu_custom_call.1} parent=39 // loop_header
                %s296 = sphi 0, %s300
                %p297 = scmp.ge.s32.totalorder %s296, 1
                %s301 = sphi %s290, %s290
                %s302 = sphi %s287, %s287
              $region43: #{tpu_custom_call.1} parent=39 // loop_header_branch
                %299 = sbr.rel (%p297) target = $region47
              $region44: #{tpu_custom_call.1} parent=39 // loop_body
                %v303 = vld [vmem:[%s301] sm:$0xff]
                %304 = vst [vmem:[%s302] sm:$0xff] %v303
                %v305 = vld [vmem:[%s301 + $0x8] sm:$0xff]
                %306 = vst [vmem:[%s302 + $0x8] sm:$0xff] %v305
                %v307 = vld [vmem:[%s301 + $0x20] sm:$0xff]
                %308 = vst [vmem:[%s302 + $0x10] sm:$0xff] %v307
                %v309 = vld [vmem:[%s301 + $0x28] sm:$0xff]
                %310 = vst [vmem:[%s302 + $0x18] sm:$0xff] %v309
              $region45: #{tpu_custom_call.1} parent=39 // loop_footer
                %s300 = sadd.s32 1, %s296
              $region46: #{tpu_custom_call.1} parent=39 // loop_footer_branch
                %295 = sbr.rel target = $region42
              $region47: #{tpu_custom_call.1} parent=39 // loop_exit
                _
            $region40: #{tpu_custom_call.1} parent=35 // pred_fallthru
              _
            // Predicated region
            $region48: #{tpu_custom_call.1} parent=35 // pred_check
              _
            $region49: #{tpu_custom_call.1} parent=35 // pred_check_branch
              %312 = sbr.rel target = $region51
            $region50: #{tpu_custom_call.1} parent=35 // pred_region
              _
            $region51: #{tpu_custom_call.1} parent=35 // pred_fallthru
              _
          $region36: #{tpu_custom_call.1} parent=31 // pred_fallthru
            _
          %313 = vnop
        $region32: #{tpu_custom_call.1} parent=15 // pred_fallthru
          _
        // Predicated region
        $region52: #{tpu_custom_call.1} parent=15 // pred_check
          %p314 = pneg %p149
        $region53: #{tpu_custom_call.1} parent=15 // pred_check_branch
          %316 = sbr.rel (%p314) target = $region55
        $region54: #{tpu_custom_call.1} parent=15 // pred_region
          %s317 = smul.u32 2, %s21
          %p318 = scmp.lt.s32.totalorder %s317, 3
          %s319 = scalar_select %p318, %s317, 3
          %s320 = scalar_lea.vmem %s4, %s319
          %s321 = smul.u32 2, %s21
        $region55: #{tpu_custom_call.1} parent=15 // pred_fallthru
          _
        // Predicated region
        $region56: #{tpu_custom_call.1} parent=15 // pred_check
          %p322 = pneg %p175
        $region57: #{tpu_custom_call.1} parent=15 // pred_check_branch
          %324 = sbr.rel (%p322) target = $region59
        $region58: #{tpu_custom_call.1} parent=15 // pred_region
          %s325 = smul.u32 2, %s21
          %p326 = scmp.lt.s32.totalorder %s325, 3
          %s327 = scalar_select %p326, %s325, 3
          %s328 = scalar_lea.vmem %s5, %s327
          %s329 = smul.u32 2, %s21
        $region59: #{tpu_custom_call.1} parent=15 // pred_fallthru
          _
        // Predicated region
        $region60: #{tpu_custom_call.1} parent=15 // pred_check
          %p330 = pneg %p203
        $region61: #{tpu_custom_call.1} parent=15 // pred_check_branch
          %332 = sbr.rel (%p330) target = $region63
        $region62: #{tpu_custom_call.1} parent=15 // pred_region
          %s333 = sand.u32 %s193, 1
          %s334 = sand.u32 %s193, 1
          %s335 = smul.addr %s334, 256
          %s336 = scalar_lea.vmem [#allocation3], %s335
          %s337 = smul.u32 16, %s20
          %s338 = smul.u32 2, %s21
          %s339 = ssub.s32 40, %s337
          %p340 = scmp.lt.s32.totalorder %s339, 16
          %s341 = scalar_select %p340, %s339, 16
          %s342 = smul.u32 128, %s341
          %s343 = ssub.s32 3, %s338
          %p344 = scmp.lt.s32.totalorder %s343, 2
          %s345 = scalar_select %p344, %s343, 2
          %s346 = smul.u32 %s342, %s345
          %p347 = scmp.ne.s32.totalorder 0, %s346
          %s348 = smul.addr %s337, 3
          %s349 = sadd.s32 %s338, %s348
          %s350 = smul.addr %s349, 8
          %s351 = scalar_lea.vmem %s6, %s350
          %s352 = smul.u32 %s345, 8
          // Predicated region
          $region64: #{tpu_custom_call.1} parent=62 // pred_check
            %p353 = pneg %p347
          $region65: #{tpu_custom_call.1} parent=62 // pred_check_branch
            %355 = sbr.rel (%p353) target = $region67
          $region66: #{tpu_custom_call.1} parent=62 // pred_region
            %p356 = scmp.lt.u32.totalorder %s352, 8
            %p357 = pneg %p356
            // Predicated region
            $region68: #{tpu_custom_call.1} parent=66 // pred_check
              _
            $region69: #{tpu_custom_call.1} parent=66 // pred_check_branch
              %359 = sbr.rel (%p356) target = $region71
            $region70: #{tpu_custom_call.1} parent=66 // pred_region
              %s438 = sand.u32 %s352, 7
              %p439 = scmp.eq.s32.totalorder %s438, 0
              // Predicated region
              $region90: #{tpu_custom_call.1} parent=70 // pred_check
                %p440 = pneg %p439
              $region91: #{tpu_custom_call.1} parent=70 // pred_check_branch
                %442 = sbr.rel (%p440) target = $region93
              $region92: #{tpu_custom_call.1} parent=70 // pred_region
                %s443 = sshrl.u32 %s352, 3
                %s444 = sshrl.u32 %s341, 4
                %s445 = sshrl.u32 %s443, 2
                %s446 = smul.u32 %s444, %s445
                // While loop
                $region94: #{tpu_custom_call.1} parent=92 // loop_pre_header
                  _
                $region95: #{tpu_custom_call.1} parent=92 // loop_header
                  %s450 = sphi 0, %s452
                  %p451 = scmp.ge.s32.totalorder %s450, %s446
                  %s455 = sphi 0, %s593
                  %s456 = sphi 0, %s589
                  %s457 = sphi %s351, %s600
                  %s458 = sphi %s336, %s601
                $region96: #{tpu_custom_call.1} parent=92 // loop_header_branch
                  %454 = sbr.rel (%p451) target = $region100
                $region97: #{tpu_custom_call.1} parent=92 // loop_body
                  %v459 = vld [vmem:[%s457] sm:$0xff]
                  %460 = vst [vmem:[%s458] sm:$0xff] %v459
                  %v461 = vld [vmem:[%s457 + $0x8] sm:$0xff]
                  %462 = vst [vmem:[%s458 + $0x8] sm:$0xff] %v461
                  %v463 = vld [vmem:[%s457 + $0x10] sm:$0xff]
                  %464 = vst [vmem:[%s458 + $0x10] sm:$0xff] %v463
                  %v465 = vld [vmem:[%s457 + $0x18] sm:$0xff]
                  %466 = vst [vmem:[%s458 + $0x18] sm:$0xff] %v465
                  %v467 = vld [vmem:[%s457 + $0x18] sm:$0xff]
                  %468 = vst [vmem:[%s458 + $0x10] sm:$0xff] %v467
                  %v469 = vld [vmem:[%s457 + $0x20] sm:$0xff]
                  %470 = vst [vmem:[%s458 + $0x18] sm:$0xff] %v469
                  %v471 = vld [vmem:[%s457 + $0x28] sm:$0xff]
                  %472 = vst [vmem:[%s458 + $0x20] sm:$0xff] %v471
                  %v473 = vld [vmem:[%s457 + $0x30] sm:$0xff]
                  %474 = vst [vmem:[%s458 + $0x28] sm:$0xff] %v473
                  %v475 = vld [vmem:[%s457 + $0x30] sm:$0xff]
                  %476 = vst [vmem:[%s458 + $0x20] sm:$0xff] %v475
                  %v477 = vld [vmem:[%s457 + $0x38] sm:$0xff]
                  %478 = vst [vmem:[%s458 + $0x28] sm:$0xff] %v477
                  %v479 = vld [vmem:[%s457 + $0x40] sm:$0xff]
                  %480 = vst [vmem:[%s458 + $0x30] sm:$0xff] %v479
                  %v481 = vld [vmem:[%s457 + $0x48] sm:$0xff]
                  %482 = vst [vmem:[%s458 + $0x38] sm:$0xff] %v481
                  %v483 = vld [vmem:[%s457 + $0x48] sm:$0xff]
                  %484 = vst [vmem:[%s458 + $0x30] sm:$0xff] %v483
                  %v485 = vld [vmem:[%s457 + $0x50] sm:$0xff]
                  %486 = vst [vmem:[%s458 + $0x38] sm:$0xff] %v485
                  %v487 = vld [vmem:[%s457 + $0x58] sm:$0xff]
                  %488 = vst [vmem:[%s458 + $0x40] sm:$0xff] %v487
                  %v489 = vld [vmem:[%s457 + $0x60] sm:$0xff]
                  %490 = vst [vmem:[%s458 + $0x48] sm:$0xff] %v489
                  %v491 = vld [vmem:[%s457 + $0x60] sm:$0xff]
                  %492 = vst [vmem:[%s458 + $0x40] sm:$0xff] %v491
                  %v493 = vld [vmem:[%s457 + $0x68] sm:$0xff]
                  %494 = vst [vmem:[%s458 + $0x48] sm:$0xff] %v493
                  %v495 = vld [vmem:[%s457 + $0x70] sm:$0xff]
                  %496 = vst [vmem:[%s458 + $0x50] sm:$0xff] %v495
                  %v497 = vld [vmem:[%s457 + $0x78] sm:$0xff]
                  %498 = vst [vmem:[%s458 + $0x58] sm:$0xff] %v497
                  %v499 = vld [vmem:[%s457 + $0x78] sm:$0xff]
                  %500 = vst [vmem:[%s458 + $0x50] sm:$0xff] %v499
                  %v501 = vld [vmem:[%s457 + $0x80] sm:$0xff]
                  %502 = vst [vmem:[%s458 + $0x58] sm:$0xff] %v501
                  %v503 = vld [vmem:[%s457 + $0x88] sm:$0xff]
                  %504 = vst [vmem:[%s458 + $0x60] sm:$0xff] %v503
                  %v505 = vld [vmem:[%s457 + $0x90] sm:$0xff]
                  %506 = vst [vmem:[%s458 + $0x68] sm:$0xff] %v505
                  %v507 = vld [vmem:[%s457 + $0x90] sm:$0xff]
                  %508 = vst [vmem:[%s458 + $0x60] sm:$0xff] %v507
                  %v509 = vld [vmem:[%s457 + $0x98] sm:$0xff]
                  %510 = vst [vmem:[%s458 + $0x68] sm:$0xff] %v509
                  %v511 = vld [vmem:[%s457 + $0xa0] sm:$0xff]
                  %512 = vst [vmem:[%s458 + $0x70] sm:$0xff] %v511
                  %v513 = vld [vmem:[%s457 + $0xa8] sm:$0xff]
                  %514 = vst [vmem:[%s458 + $0x78] sm:$0xff] %v513
                  %v515 = vld [vmem:[%s457 + $0xa8] sm:$0xff]
                  %516 = vst [vmem:[%s458 + $0x70] sm:$0xff] %v515
                  %v517 = vld [vmem:[%s457 + $0xb0] sm:$0xff]
                  %518 = vst [vmem:[%s458 + $0x78] sm:$0xff] %v517
                  %v519 = vld [vmem:[%s457 + $0xb8] sm:$0xff]
                  %520 = vst [vmem:[%s458 + $0x80] sm:$0xff] %v519
                  %v521 = vld [vmem:[%s457 + $0xc0] sm:$0xff]
                  %522 = vst [vmem:[%s458 + $0x88] sm:$0xff] %v521
                  %v523 = vld [vmem:[%s457 + $0xc0] sm:$0xff]
                  %524 = vst [vmem:[%s458 + $0x80] sm:$0xff] %v523
                  %v525 = vld [vmem:[%s457 + $0xc8] sm:$0xff]
                  %526 = vst [vmem:[%s458 + $0x88] sm:$0xff] %v525
                  %v527 = vld [vmem:[%s457 + $0xd0] sm:$0xff]
                  %528 = vst [vmem:[%s458 + $0x90] sm:$0xff] %v527
                  %v529 = vld [vmem:[%s457 + $0xd8] sm:$0xff]
                  %530 = vst [vmem:[%s458 + $0x98] sm:$0xff] %v529
                  %v531 = vld [vmem:[%s457 + $0xd8] sm:$0xff]
                  %532 = vst [vmem:[%s458 + $0x90] sm:$0xff] %v531
                  %v533 = vld [vmem:[%s457 + $0xe0] sm:$0xff]
                  %534 = vst [vmem:[%s458 + $0x98] sm:$0xff] %v533
                  %v535 = vld [vmem:[%s457 + $0xe8] sm:$0xff]
                  %536 = vst [vmem:[%s458 + $0xa0] sm:$0xff] %v535
                  %v537 = vld [vmem:[%s457 + $0xf0] sm:$0xff]
                  %538 = vst [vmem:[%s458 + $0xa8] sm:$0xff] %v537
                  %v539 = vld [vmem:[%s457 + $0xf0] sm:$0xff]
                  %540 = vst [vmem:[%s458 + $0xa0] sm:$0xff] %v539
                  %v541 = vld [vmem:[%s457 + $0xf8] sm:$0xff]
                  %542 = vst [vmem:[%s458 + $0xa8] sm:$0xff] %v541
                  %v543 = vld [vmem:[%s457 + $0x100] sm:$0xff]
                  %544 = vst [vmem:[%s458 + $0xb0] sm:$0xff] %v543
                  %v545 = vld [vmem:[%s457 + $0x108] sm:$0xff]
                  %546 = vst [vmem:[%s458 + $0xb8] sm:$0xff] %v545
                  %v547 = vld [vmem:[%s457 + $0x108] sm:$0xff]
                  %548 = vst [vmem:[%s458 + $0xb0] sm:$0xff] %v547
                  %v549 = vld [vmem:[%s457 + $0x110] sm:$0xff]
                  %550 = vst [vmem:[%s458 + $0xb8] sm:$0xff] %v549
                  %v551 = vld [vmem:[%s457 + $0x118] sm:$0xff]
                  %552 = vst [vmem:[%s458 + $0xc0] sm:$0xff] %v551
                  %v553 = vld [vmem:[%s457 + $0x120] sm:$0xff]
                  %554 = vst [vmem:[%s458 + $0xc8] sm:$0xff] %v553
                  %v555 = vld [vmem:[%s457 + $0x120] sm:$0xff]
                  %556 = vst [vmem:[%s458 + $0xc0] sm:$0xff] %v555
                  %v557 = vld [vmem:[%s457 + $0x128] sm:$0xff]
                  %558 = vst [vmem:[%s458 + $0xc8] sm:$0xff] %v557
                  %v559 = vld [vmem:[%s457 + $0x130] sm:$0xff]
                  %560 = vst [vmem:[%s458 + $0xd0] sm:$0xff] %v559
                  %v561 = vld [vmem:[%s457 + $0x138] sm:$0xff]
                  %562 = vst [vmem:[%s458 + $0xd8] sm:$0xff] %v561
                  %v563 = vld [vmem:[%s457 + $0x138] sm:$0xff]
                  %564 = vst [vmem:[%s458 + $0xd0] sm:$0xff] %v563
                  %v565 = vld [vmem:[%s457 + $0x140] sm:$0xff]
                  %566 = vst [vmem:[%s458 + $0xd8] sm:$0xff] %v565
                  %v567 = vld [vmem:[%s457 + $0x148] sm:$0xff]
                  %568 = vst [vmem:[%s458 + $0xe0] sm:$0xff] %v567
                  %v569 = vld [vmem:[%s457 + $0x150] sm:$0xff]
                  %570 = vst [vmem:[%s458 + $0xe8] sm:$0xff] %v569
                  %v571 = vld [vmem:[%s457 + $0x150] sm:$0xff]
                  %572 = vst [vmem:[%s458 + $0xe0] sm:$0xff] %v571
                  %v573 = vld [vmem:[%s457 + $0x158] sm:$0xff]
                  %574 = vst [vmem:[%s458 + $0xe8] sm:$0xff] %v573
                  %v575 = vld [vmem:[%s457 + $0x160] sm:$0xff]
                  %576 = vst [vmem:[%s458 + $0xf0] sm:$0xff] %v575
                  %v577 = vld [vmem:[%s457 + $0x168] sm:$0xff]
                  %578 = vst [vmem:[%s458 + $0xf8] sm:$0xff] %v577
                  %v579 = vld [vmem:[%s457 + $0x168] sm:$0xff]
                  %580 = vst [vmem:[%s458 + $0xf0] sm:$0xff] %v579
                  %v581 = vld [vmem:[%s457 + $0x170] sm:$0xff]
                  %582 = vst [vmem:[%s458 + $0xf8] sm:$0xff] %v581
                  %v583 = vld [vmem:[%s457 + $0x178] sm:$0xff]
                  %584 = vst [vmem:[%s458 + $0x100] sm:$0xff] %v583
                  %v585 = vld [vmem:[%s457 + $0x180] sm:$0xff]
                  %586 = vst [vmem:[%s458 + $0x108] sm:$0xff] %v585
                  %s587 = sadd.s32 1, %s456
                  %p588 = scmp.ge.s32.totalorder %s587, %s445
                  %s589 = scalar_select %p588, 0, %s587
                  %s590 = sadd.s32 1, %s455
                  %s591 = scalar_select %p588, %s590, %s455
                  %p592 = scmp.ge.s32.totalorder %s591, %s444
                  %s593 = scalar_select %p592, 0, %s591
                  %s594 = smul.u32 %s593, 384
                  %s595 = smul.u32 %s589, 32
                  %s596 = sadd.s32 %s594, %s595
                  %s597 = smul.u32 %s593, 256
                  %s598 = smul.u32 %s589, 32
                  %s599 = sadd.s32 %s597, %s598
                  %s600 = scalar_lea.vmem %s351, %s596
                  %s601 = scalar_lea.vmem %s336, %s599 [#allocation3]
                $region98: #{tpu_custom_call.1} parent=92 // loop_footer
                  %s452 = sadd.s32 %s450, 1
                $region99: #{tpu_custom_call.1} parent=92 // loop_footer_branch
                  %449 = sbr.rel target = $region95
                $region100: #{tpu_custom_call.1} parent=92 // loop_exit
                  _
                %s602 = sshrl.u32 %s443, 2
                %s603 = sshrl.u32 %s341, 4
                %s604 = sand.u32 %s341, 15
                %s605 = smul.u32 %s603, 16
                %s606 = smul.u32 24, %s605
                %s607 = scalar_lea.vmem %s351, %s606
                %s608 = smul.u32 16, %s605
                %s609 = scalar_lea.vmem %s336, %s608 [#allocation3]
                %s610 = smul.u32 %s604, %s602
                // While loop
                $region101: #{tpu_custom_call.1} parent=92 // loop_pre_header
                  _
                $region102: #{tpu_custom_call.1} parent=92 // loop_header
                  %s614 = sphi 0, %s616
                  %p615 = scmp.ge.s32.totalorder %s614, %s610
                  %s619 = sphi 0, %s637
                  %s620 = sphi 0, %s633
                  %s621 = sphi %s607, %s644
                  %s622 = sphi %s609, %s645
                $region103: #{tpu_custom_call.1} parent=92 // loop_header_branch
                  %618 = sbr.rel (%p615) target = $region107
                $region104: #{tpu_custom_call.1} parent=92 // loop_body
                  %v623 = vld [vmem:[%s621] sm:$0xff]
                  %624 = vst [vmem:[%s622] sm:$0xff] %v623
                  %v625 = vld [vmem:[%s621 + $0x8] sm:$0xff]
                  %626 = vst [vmem:[%s622 + $0x8] sm:$0xff] %v625
                  %v627 = vld [vmem:[%s621 + $0x10] sm:$0xff]
                  %628 = vst [vmem:[%s622 + $0x10] sm:$0xff] %v627
                  %v629 = vld [vmem:[%s621 + $0x18] sm:$0xff]
                  %630 = vst [vmem:[%s622 + $0x18] sm:$0xff] %v629
                  %s631 = sadd.s32 1, %s620
                  %p632 = scmp.ge.s32.totalorder %s631, %s602
                  %s633 = scalar_select %p632, 0, %s631
                  %s634 = sadd.s32 1, %s619
                  %s635 = scalar_select %p632, %s634, %s619
                  %p636 = scmp.ge.s32.totalorder %s635, %s604
                  %s637 = scalar_select %p636, 0, %s635
                  %s638 = smul.u32 %s637, 24
                  %s639 = smul.u32 %s633, 32
                  %s640 = sadd.s32 %s638, %s639
                  %s641 = smul.u32 %s637, 16
                  %s642 = smul.u32 %s633, 32
                  %s643 = sadd.s32 %s641, %s642
                  %s644 = scalar_lea.vmem %s607, %s640
                  %s645 = scalar_lea.vmem %s609, %s643 [#allocation3]
                $region105: #{tpu_custom_call.1} parent=92 // loop_footer
                  %s616 = sadd.s32 %s614, 1
                $region106: #{tpu_custom_call.1} parent=92 // loop_footer_branch
                  %613 = sbr.rel target = $region102
                $region107: #{tpu_custom_call.1} parent=92 // loop_exit
                  _
                %s646 = sshrl.u32 %s443, 2
                %s647 = sand.u32 %s443, 3
                %s648 = smul.u32 %s646, 4
                %s649 = smul.u32 128, %s648
                %s650 = sshra.s32 %s649, 4
                %s651 = scalar_lea.vmem %s351, %s650
                %s652 = smul.u32 128, %s648
                %s653 = sshra.s32 %s652, 4
                %s654 = scalar_lea.vmem %s336, %s653 [#allocation3]
                %s655 = smul.u32 %s341, %s647
                // While loop
                $region108: #{tpu_custom_call.1} parent=92 // loop_pre_header
                  _
                $region109: #{tpu_custom_call.1} parent=92 // loop_header
                  %s659 = sphi 0, %s661
                  %p660 = scmp.ge.s32.totalorder %s659, %s655
                  %s664 = sphi 0, %s676
                  %s665 = sphi 0, %s672
                  %s666 = sphi %s651, %s683
                  %s667 = sphi %s654, %s684
                $region110: #{tpu_custom_call.1} parent=92 // loop_header_branch
                  %663 = sbr.rel (%p660) target = $region114
                $region111: #{tpu_custom_call.1} parent=92 // loop_body
                  %v668 = vld [vmem:[%s666] sm:$0xff]
                  %669 = vst [vmem:[%s667] sm:$0xff] %v668
                  %s670 = sadd.s32 1, %s665
                  %p671 = scmp.ge.s32.totalorder %s670, %s647
                  %s672 = scalar_select %p671, 0, %s670
                  %s673 = sadd.s32 1, %s664
                  %s674 = scalar_select %p671, %s673, %s664
                  %p675 = scmp.ge.s32.totalorder %s674, %s341
                  %s676 = scalar_select %p675, 0, %s674
                  %s677 = smul.u32 %s676, 24
                  %s678 = smul.u32 %s672, 8
                  %s679 = sadd.s32 %s677, %s678
                  %s680 = smul.u32 %s676, 16
                  %s681 = smul.u32 %s672, 8
                  %s682 = sadd.s32 %s680, %s681
                  %s683 = scalar_lea.vmem %s651, %s679
                  %s684 = scalar_lea.vmem %s654, %s682 [#allocation3]
                $region112: #{tpu_custom_call.1} parent=92 // loop_footer
                  %s661 = sadd.s32 %s659, 1
                $region113: #{tpu_custom_call.1} parent=92 // loop_footer_branch
                  %658 = sbr.rel target = $region109
                $region114: #{tpu_custom_call.1} parent=92 // loop_exit
                  _
              $region93: #{tpu_custom_call.1} parent=70 // pred_fallthru
                _
              %p685 = pneg %p439
              // Predicated region
              $region115: #{tpu_custom_call.1} parent=70 // pred_check
                _
              $region116: #{tpu_custom_call.1} parent=70 // pred_check_branch
                %687 = sbr.rel (%p439) target = $region118
              $region117: #{tpu_custom_call.1} parent=70 // pred_region
                %s688 = sand.u32 %s352, 7
                %s689 = ssub.s32 %s352, %s688
                %s690 = scalar_lea.vmem %s351, %s689
                %s691 = ssub.s32 %s352, %s688
                %s692 = scalar_lea.vmem %s336, %s691 [#allocation3]
                %s693 = sshrl.u32 %s352, 3
                %s694 = sshrl.u32 %s341, 4
                %s695 = sshrl.u32 %s693, 2
                %s696 = smul.u32 %s694, %s695
                // While loop
                $region119: #{tpu_custom_call.1} parent=117 // loop_pre_header
                  _
                $region120: #{tpu_custom_call.1} parent=117 // loop_header
                  %s700 = sphi 0, %s702
                  %p701 = scmp.ge.s32.totalorder %s700, %s696
                  %s705 = sphi 0, %s843
                  %s706 = sphi 0, %s839
                  %s707 = sphi %s351, %s850
                  %s708 = sphi %s336, %s851
                $region121: #{tpu_custom_call.1} parent=117 // loop_header_branch
                  %704 = sbr.rel (%p701) target = $region125
                $region122: #{tpu_custom_call.1} parent=117 // loop_body
                  %v709 = vld [vmem:[%s707] sm:$0xff]
                  %710 = vst [vmem:[%s708] sm:$0xff] %v709
                  %v711 = vld [vmem:[%s707 + $0x8] sm:$0xff]
                  %712 = vst [vmem:[%s708 + $0x8] sm:$0xff] %v711
                  %v713 = vld [vmem:[%s707 + $0x10] sm:$0xff]
                  %714 = vst [vmem:[%s708 + $0x10] sm:$0xff] %v713
                  %v715 = vld [vmem:[%s707 + $0x18] sm:$0xff]
                  %716 = vst [vmem:[%s708 + $0x18] sm:$0xff] %v715
                  %v717 = vld [vmem:[%s707 + $0x18] sm:$0xff]
                  %718 = vst [vmem:[%s708 + $0x10] sm:$0xff] %v717
                  %v719 = vld [vmem:[%s707 + $0x20] sm:$0xff]
                  %720 = vst [vmem:[%s708 + $0x18] sm:$0xff] %v719
                  %v721 = vld [vmem:[%s707 + $0x28] sm:$0xff]
                  %722 = vst [vmem:[%s708 + $0x20] sm:$0xff] %v721
                  %v723 = vld [vmem:[%s707 + $0x30] sm:$0xff]
                  %724 = vst [vmem:[%s708 + $0x28] sm:$0xff] %v723
                  %v725 = vld [vmem:[%s707 + $0x30] sm:$0xff]
                  %726 = vst [vmem:[%s708 + $0x20] sm:$0xff] %v725
                  %v727 = vld [vmem:[%s707 + $0x38] sm:$0xff]
                  %728 = vst [vmem:[%s708 + $0x28] sm:$0xff] %v727
                  %v729 = vld [vmem:[%s707 + $0x40] sm:$0xff]
                  %730 = vst [vmem:[%s708 + $0x30] sm:$0xff] %v729
                  %v731 = vld [vmem:[%s707 + $0x48] sm:$0xff]
                  %732 = vst [vmem:[%s708 + $0x38] sm:$0xff] %v731
                  %v733 = vld [vmem:[%s707 + $0x48] sm:$0xff]
                  %734 = vst [vmem:[%s708 + $0x30] sm:$0xff] %v733
                  %v735 = vld [vmem:[%s707 + $0x50] sm:$0xff]
                  %736 = vst [vmem:[%s708 + $0x38] sm:$0xff] %v735
                  %v737 = vld [vmem:[%s707 + $0x58] sm:$0xff]
                  %738 = vst [vmem:[%s708 + $0x40] sm:$0xff] %v737
                  %v739 = vld [vmem:[%s707 + $0x60] sm:$0xff]
                  %740 = vst [vmem:[%s708 + $0x48] sm:$0xff] %v739
                  %v741 = vld [vmem:[%s707 + $0x60] sm:$0xff]
                  %742 = vst [vmem:[%s708 + $0x40] sm:$0xff] %v741
                  %v743 = vld [vmem:[%s707 + $0x68] sm:$0xff]
                  %744 = vst [vmem:[%s708 + $0x48] sm:$0xff] %v743
                  %v745 = vld [vmem:[%s707 + $0x70] sm:$0xff]
                  %746 = vst [vmem:[%s708 + $0x50] sm:$0xff] %v745
                  %v747 = vld [vmem:[%s707 + $0x78] sm:$0xff]
                  %748 = vst [vmem:[%s708 + $0x58] sm:$0xff] %v747
                  %v749 = vld [vmem:[%s707 + $0x78] sm:$0xff]
                  %750 = vst [vmem:[%s708 + $0x50] sm:$0xff] %v749
                  %v751 = vld [vmem:[%s707 + $0x80] sm:$0xff]
                  %752 = vst [vmem:[%s708 + $0x58] sm:$0xff] %v751
                  %v753 = vld [vmem:[%s707 + $0x88] sm:$0xff]
                  %754 = vst [vmem:[%s708 + $0x60] sm:$0xff] %v753
                  %v755 = vld [vmem:[%s707 + $0x90] sm:$0xff]
                  %756 = vst [vmem:[%s708 + $0x68] sm:$0xff] %v755
                  %v757 = vld [vmem:[%s707 + $0x90] sm:$0xff]
                  %758 = vst [vmem:[%s708 + $0x60] sm:$0xff] %v757
                  %v759 = vld [vmem:[%s707 + $0x98] sm:$0xff]
                  %760 = vst [vmem:[%s708 + $0x68] sm:$0xff] %v759
                  %v761 = vld [vmem:[%s707 + $0xa0] sm:$0xff]
                  %762 = vst [vmem:[%s708 + $0x70] sm:$0xff] %v761
                  %v763 = vld [vmem:[%s707 + $0xa8] sm:$0xff]
                  %764 = vst [vmem:[%s708 + $0x78] sm:$0xff] %v763
                  %v765 = vld [vmem:[%s707 + $0xa8] sm:$0xff]
                  %766 = vst [vmem:[%s708 + $0x70] sm:$0xff] %v765
                  %v767 = vld [vmem:[%s707 + $0xb0] sm:$0xff]
                  %768 = vst [vmem:[%s708 + $0x78] sm:$0xff] %v767
                  %v769 = vld [vmem:[%s707 + $0xb8] sm:$0xff]
                  %770 = vst [vmem:[%s708 + $0x80] sm:$0xff] %v769
                  %v771 = vld [vmem:[%s707 + $0xc0] sm:$0xff]
                  %772 = vst [vmem:[%s708 + $0x88] sm:$0xff] %v771
                  %v773 = vld [vmem:[%s707 + $0xc0] sm:$0xff]
                  %774 = vst [vmem:[%s708 + $0x80] sm:$0xff] %v773
                  %v775 = vld [vmem:[%s707 + $0xc8] sm:$0xff]
                  %776 = vst [vmem:[%s708 + $0x88] sm:$0xff] %v775
                  %v777 = vld [vmem:[%s707 + $0xd0] sm:$0xff]
                  %778 = vst [vmem:[%s708 + $0x90] sm:$0xff] %v777
                  %v779 = vld [vmem:[%s707 + $0xd8] sm:$0xff]
                  %780 = vst [vmem:[%s708 + $0x98] sm:$0xff] %v779
                  %v781 = vld [vmem:[%s707 + $0xd8] sm:$0xff]
                  %782 = vst [vmem:[%s708 + $0x90] sm:$0xff] %v781
                  %v783 = vld [vmem:[%s707 + $0xe0] sm:$0xff]
                  %784 = vst [vmem:[%s708 + $0x98] sm:$0xff] %v783
                  %v785 = vld [vmem:[%s707 + $0xe8] sm:$0xff]
                  %786 = vst [vmem:[%s708 + $0xa0] sm:$0xff] %v785
                  %v787 = vld [vmem:[%s707 + $0xf0] sm:$0xff]
                  %788 = vst [vmem:[%s708 + $0xa8] sm:$0xff] %v787
                  %v789 = vld [vmem:[%s707 + $0xf0] sm:$0xff]
                  %790 = vst [vmem:[%s708 + $0xa0] sm:$0xff] %v789
                  %v791 = vld [vmem:[%s707 + $0xf8] sm:$0xff]
                  %792 = vst [vmem:[%s708 + $0xa8] sm:$0xff] %v791
                  %v793 = vld [vmem:[%s707 + $0x100] sm:$0xff]
                  %794 = vst [vmem:[%s708 + $0xb0] sm:$0xff] %v793
                  %v795 = vld [vmem:[%s707 + $0x108] sm:$0xff]
                  %796 = vst [vmem:[%s708 + $0xb8] sm:$0xff] %v795
                  %v797 = vld [vmem:[%s707 + $0x108] sm:$0xff]
                  %798 = vst [vmem:[%s708 + $0xb0] sm:$0xff] %v797
                  %v799 = vld [vmem:[%s707 + $0x110] sm:$0xff]
                  %800 = vst [vmem:[%s708 + $0xb8] sm:$0xff] %v799
                  %v801 = vld [vmem:[%s707 + $0x118] sm:$0xff]
                  %802 = vst [vmem:[%s708 + $0xc0] sm:$0xff] %v801
                  %v803 = vld [vmem:[%s707 + $0x120] sm:$0xff]
                  %804 = vst [vmem:[%s708 + $0xc8] sm:$0xff] %v803
                  %v805 = vld [vmem:[%s707 + $0x120] sm:$0xff]
                  %806 = vst [vmem:[%s708 + $0xc0] sm:$0xff] %v805
                  %v807 = vld [vmem:[%s707 + $0x128] sm:$0xff]
                  %808 = vst [vmem:[%s708 + $0xc8] sm:$0xff] %v807
                  %v809 = vld [vmem:[%s707 + $0x130] sm:$0xff]
                  %810 = vst [vmem:[%s708 + $0xd0] sm:$0xff] %v809
                  %v811 = vld [vmem:[%s707 + $0x138] sm:$0xff]
                  %812 = vst [vmem:[%s708 + $0xd8] sm:$0xff] %v811
                  %v813 = vld [vmem:[%s707 + $0x138] sm:$0xff]
                  %814 = vst [vmem:[%s708 + $0xd0] sm:$0xff] %v813
                  %v815 = vld [vmem:[%s707 + $0x140] sm:$0xff]
                  %816 = vst [vmem:[%s708 + $0xd8] sm:$0xff] %v815
                  %v817 = vld [vmem:[%s707 + $0x148] sm:$0xff]
                  %818 = vst [vmem:[%s708 + $0xe0] sm:$0xff] %v817
                  %v819 = vld [vmem:[%s707 + $0x150] sm:$0xff]
                  %820 = vst [vmem:[%s708 + $0xe8] sm:$0xff] %v819
                  %v821 = vld [vmem:[%s707 + $0x150] sm:$0xff]
                  %822 = vst [vmem:[%s708 + $0xe0] sm:$0xff] %v821
                  %v823 = vld [vmem:[%s707 + $0x158] sm:$0xff]
                  %824 = vst [vmem:[%s708 + $0xe8] sm:$0xff] %v823
                  %v825 = vld [vmem:[%s707 + $0x160] sm:$0xff]
                  %826 = vst [vmem:[%s708 + $0xf0] sm:$0xff] %v825
                  %v827 = vld [vmem:[%s707 + $0x168] sm:$0xff]
                  %828 = vst [vmem:[%s708 + $0xf8] sm:$0xff] %v827
                  %v829 = vld [vmem:[%s707 + $0x168] sm:$0xff]
                  %830 = vst [vmem:[%s708 + $0xf0] sm:$0xff] %v829
                  %v831 = vld [vmem:[%s707 + $0x170] sm:$0xff]
                  %832 = vst [vmem:[%s708 + $0xf8] sm:$0xff] %v831
                  %v833 = vld [vmem:[%s707 + $0x178] sm:$0xff]
                  %834 = vst [vmem:[%s708 + $0x100] sm:$0xff] %v833
                  %v835 = vld [vmem:[%s707 + $0x180] sm:$0xff]
                  %836 = vst [vmem:[%s708 + $0x108] sm:$0xff] %v835
                  %s837 = sadd.s32 1, %s706
                  %p838 = scmp.ge.s32.totalorder %s837, %s695
                  %s839 = scalar_select %p838, 0, %s837
                  %s840 = sadd.s32 1, %s705
                  %s841 = scalar_select %p838, %s840, %s705
                  %p842 = scmp.ge.s32.totalorder %s841, %s694
                  %s843 = scalar_select %p842, 0, %s841
                  %s844 = smul.u32 %s843, 384
                  %s845 = smul.u32 %s839, 32
                  %s846 = sadd.s32 %s844, %s845
                  %s847 = smul.u32 %s843, 256
                  %s848 = smul.u32 %s839, 32
                  %s849 = sadd.s32 %s847, %s848
                  %s850 = scalar_lea.vmem %s351, %s846
                  %s851 = scalar_lea.vmem %s336, %s849 [#allocation3]
                $region123: #{tpu_custom_call.1} parent=117 // loop_footer
                  %s702 = sadd.s32 %s700, 1
                $region124: #{tpu_custom_call.1} parent=117 // loop_footer_branch
                  %699 = sbr.rel target = $region120
                $region125: #{tpu_custom_call.1} parent=117 // loop_exit
                  _
                %s852 = sshrl.u32 %s693, 2
                %s853 = sshrl.u32 %s341, 4
                %s854 = sand.u32 %s341, 15
                %s855 = smul.u32 %s853, 16
                %s856 = smul.u32 24, %s855
                %s857 = scalar_lea.vmem %s351, %s856
                %s858 = smul.u32 16, %s855
                %s859 = scalar_lea.vmem %s336, %s858 [#allocation3]
                %s860 = smul.u32 %s854, %s852
                // While loop
                $region126: #{tpu_custom_call.1} parent=117 // loop_pre_header
                  _
                $region127: #{tpu_custom_call.1} parent=117 // loop_header
                  %s864 = sphi 0, %s866
                  %p865 = scmp.ge.s32.totalorder %s864, %s860
                  %s869 = sphi 0, %s887
                  %s870 = sphi 0, %s883
                  %s871 = sphi %s857, %s894
                  %s872 = sphi %s859, %s895
                $region128: #{tpu_custom_call.1} parent=117 // loop_header_branch
                  %868 = sbr.rel (%p865) target = $region132
                $region129: #{tpu_custom_call.1} parent=117 // loop_body
                  %v873 = vld [vmem:[%s871] sm:$0xff]
                  %874 = vst [vmem:[%s872] sm:$0xff] %v873
                  %v875 = vld [vmem:[%s871 + $0x8] sm:$0xff]
                  %876 = vst [vmem:[%s872 + $0x8] sm:$0xff] %v875
                  %v877 = vld [vmem:[%s871 + $0x10] sm:$0xff]
                  %878 = vst [vmem:[%s872 + $0x10] sm:$0xff] %v877
                  %v879 = vld [vmem:[%s871 + $0x18] sm:$0xff]
                  %880 = vst [vmem:[%s872 + $0x18] sm:$0xff] %v879
                  %s881 = sadd.s32 1, %s870
                  %p882 = scmp.ge.s32.totalorder %s881, %s852
                  %s883 = scalar_select %p882, 0, %s881
                  %s884 = sadd.s32 1, %s869
                  %s885 = scalar_select %p882, %s884, %s869
                  %p886 = scmp.ge.s32.totalorder %s885, %s854
                  %s887 = scalar_select %p886, 0, %s885
                  %s888 = smul.u32 %s887, 24
                  %s889 = smul.u32 %s883, 32
                  %s890 = sadd.s32 %s888, %s889
                  %s891 = smul.u32 %s887, 16
                  %s892 = smul.u32 %s883, 32
                  %s893 = sadd.s32 %s891, %s892
                  %s894 = scalar_lea.vmem %s857, %s890
                  %s895 = scalar_lea.vmem %s859, %s893 [#allocation3]
                $region130: #{tpu_custom_call.1} parent=117 // loop_footer
                  %s866 = sadd.s32 %s864, 1
                $region131: #{tpu_custom_call.1} parent=117 // loop_footer_branch
                  %863 = sbr.rel target = $region127
                $region132: #{tpu_custom_call.1} parent=117 // loop_exit
                  _
                %s896 = sshrl.u32 %s693, 2
                %s897 = sand.u32 %s693, 3
                %s898 = smul.u32 %s896, 4
                %s899 = smul.u32 128, %s898
                %s900 = sshra.s32 %s899, 4
                %s901 = scalar_lea.vmem %s351, %s900
                %s902 = smul.u32 128, %s898
                %s903 = sshra.s32 %s902, 4
                %s904 = scalar_lea.vmem %s336, %s903 [#allocation3]
                %s905 = smul.u32 %s341, %s897
                // While loop
                $region133: #{tpu_custom_call.1} parent=117 // loop_pre_header
                  _
                $region134: #{tpu_custom_call.1} parent=117 // loop_header
                  %s909 = sphi 0, %s911
                  %p910 = scmp.ge.s32.totalorder %s909, %s905
                  %s914 = sphi 0, %s926
                  %s915 = sphi 0, %s922
                  %s916 = sphi %s901, %s933
                  %s917 = sphi %s904, %s934
                $region135: #{tpu_custom_call.1} parent=117 // loop_header_branch
                  %913 = sbr.rel (%p910) target = $region139
                $region136: #{tpu_custom_call.1} parent=117 // loop_body
                  %v918 = vld [vmem:[%s916] sm:$0xff]
                  %919 = vst [vmem:[%s917] sm:$0xff] %v918
                  %s920 = sadd.s32 1, %s915
                  %p921 = scmp.ge.s32.totalorder %s920, %s897
                  %s922 = scalar_select %p921, 0, %s920
                  %s923 = sadd.s32 1, %s914
                  %s924 = scalar_select %p921, %s923, %s914
                  %p925 = scmp.ge.s32.totalorder %s924, %s341
                  %s926 = scalar_select %p925, 0, %s924
                  %s927 = smul.u32 %s926, 24
                  %s928 = smul.u32 %s922, 8
                  %s929 = sadd.s32 %s927, %s928
                  %s930 = smul.u32 %s926, 16
                  %s931 = smul.u32 %s922, 8
                  %s932 = sadd.s32 %s930, %s931
                  %s933 = scalar_lea.vmem %s901, %s929
                  %s934 = scalar_lea.vmem %s904, %s932 [#allocation3]
                $region137: #{tpu_custom_call.1} parent=117 // loop_footer
                  %s911 = sadd.s32 %s909, 1
                $region138: #{tpu_custom_call.1} parent=117 // loop_footer_branch
                  %908 = sbr.rel target = $region134
                $region139: #{tpu_custom_call.1} parent=117 // loop_exit
                  _
                %s935 = sshllo.u32 0, %s688
                %s936 = sshrl.u32 %s341, 4
                // While loop
                $region140: #{tpu_custom_call.1} parent=117 // loop_pre_header
                  _
                $region141: #{tpu_custom_call.1} parent=117 // loop_header
                  %s938 = sphi 0, %s940
                  %p939 = scmp.ge.s32.totalorder %s938, %s936
                  %s943 = sphi 0, %s980
                  %s944 = sphi %s690, %s983
                  %s945 = sphi %s692, %s984
                $region142: #{tpu_custom_call.1} parent=117 // loop_header_branch
                  %942 = sbr.rel (%p939) target = $region146
                $region143: #{tpu_custom_call.1} parent=117 // loop_body
                  %v946 = vld [vmem:[%s944] sm:%s935]
                  %947 = vst [vmem:[%s945] sm:%s935] %v946
                  %v948 = vld [vmem:[%s944 + $0x18] sm:%s935]
                  %949 = vst [vmem:[%s945 + $0x10] sm:%s935] %v948
                  %v950 = vld [vmem:[%s944 + $0x30] sm:%s935]
                  %951 = vst [vmem:[%s945 + $0x20] sm:%s935] %v950
                  %v952 = vld [vmem:[%s944 + $0x48] sm:%s935]
                  %953 = vst [vmem:[%s945 + $0x30] sm:%s935] %v952
                  %v954 = vld [vmem:[%s944 + $0x60] sm:%s935]
                  %955 = vst [vmem:[%s945 + $0x40] sm:%s935] %v954
                  %v956 = vld [vmem:[%s944 + $0x78] sm:%s935]
                  %957 = vst [vmem:[%s945 + $0x50] sm:%s935] %v956
                  %v958 = vld [vmem:[%s944 + $0x90] sm:%s935]
                  %959 = vst [vmem:[%s945 + $0x60] sm:%s935] %v958
                  %v960 = vld [vmem:[%s944 + $0xa8] sm:%s935]
                  %961 = vst [vmem:[%s945 + $0x70] sm:%s935] %v960
                  %v962 = vld [vmem:[%s944 + $0xc0] sm:%s935]
                  %963 = vst [vmem:[%s945 + $0x80] sm:%s935] %v962
                  %v964 = vld [vmem:[%s944 + $0xd8] sm:%s935]
                  %965 = vst [vmem:[%s945 + $0x90] sm:%s935] %v964
                  %v966 = vld [vmem:[%s944 + $0xf0] sm:%s935]
                  %967 = vst [vmem:[%s945 + $0xa0] sm:%s935] %v966
                  %v968 = vld [vmem:[%s944 + $0x108] sm:%s935]
                  %969 = vst [vmem:[%s945 + $0xb0] sm:%s935] %v968
                  %v970 = vld [vmem:[%s944 + $0x120] sm:%s935]
                  %971 = vst [vmem:[%s945 + $0xc0] sm:%s935] %v970
                  %v972 = vld [vmem:[%s944 + $0x138] sm:%s935]
                  %973 = vst [vmem:[%s945 + $0xd0] sm:%s935] %v972
                  %v974 = vld [vmem:[%s944 + $0x150] sm:%s935]
                  %975 = vst [vmem:[%s945 + $0xe0] sm:%s935] %v974
                  %v976 = vld [vmem:[%s944 + $0x168] sm:%s935]
                  %977 = vst [vmem:[%s945 + $0xf0] sm:%s935] %v976
                  %s978 = sadd.s32 1, %s943
                  %p979 = scmp.ge.s32.totalorder %s978, %s936
                  %s980 = scalar_select %p979, 0, %s978
                  %s981 = smul.u32 %s980, 384
                  %s982 = smul.u32 %s980, 256
                  %s983 = scalar_lea.vmem %s690, %s981
                  %s984 = scalar_lea.vmem %s692, %s982 [#allocation3]
                $region144: #{tpu_custom_call.1} parent=117 // loop_footer
                  %s940 = sadd.s32 %s938, 1
                $region145: #{tpu_custom_call.1} parent=117 // loop_footer_branch
                  %937 = sbr.rel target = $region141
                $region146: #{tpu_custom_call.1} parent=117 // loop_exit
                  _
                %s985 = sshrl.u32 %s341, 4
                %s986 = sand.u32 %s341, 15
                %s987 = smul.u32 %s985, 16
                %s988 = smul.u32 24, %s987
                %s989 = scalar_lea.vmem %s690, %s988
                %s990 = smul.u32 16, %s987
                %s991 = scalar_lea.vmem %s692, %s990 [#allocation3]
                // While loop
                $region147: #{tpu_custom_call.1} parent=117 // loop_pre_header
                  _
                $region148: #{tpu_custom_call.1} parent=117 // loop_header
                  %s993 = sphi 0, %s995
                  %p994 = scmp.ge.s32.totalorder %s993, %s986
                  %s998 = sphi 0, %s1005
                  %s999 = sphi %s989, %s1008
                  %s1000 = sphi %s991, %s1009
                $region149: #{tpu_custom_call.1} parent=117 // loop_header_branch
                  %997 = sbr.rel (%p994) target = $region153
                $region150: #{tpu_custom_call.1} parent=117 // loop_body
                  %v1001 = vld [vmem:[%s999] sm:%s935]
                  %1002 = vst [vmem:[%s1000] sm:%s935] %v1001
                  %s1003 = sadd.s32 1, %s998
                  %p1004 = scmp.ge.s32.totalorder %s1003, %s986
                  %s1005 = scalar_select %p1004, 0, %s1003
                  %s1006 = smul.u32 %s1005, 24
                  %s1007 = smul.u32 %s1005, 16
                  %s1008 = scalar_lea.vmem %s989, %s1006
                  %s1009 = scalar_lea.vmem %s991, %s1007 [#allocation3]
                $region151: #{tpu_custom_call.1} parent=117 // loop_footer
                  %s995 = sadd.s32 %s993, 1
                $region152: #{tpu_custom_call.1} parent=117 // loop_footer_branch
                  %992 = sbr.rel target = $region148
                $region153: #{tpu_custom_call.1} parent=117 // loop_exit
                  _
              $region118: #{tpu_custom_call.1} parent=70 // pred_fallthru
                _
            $region71: #{tpu_custom_call.1} parent=66 // pred_fallthru
              _
            // Predicated region
            $region72: #{tpu_custom_call.1} parent=66 // pred_check
              %p360 = pneg %p356
            $region73: #{tpu_custom_call.1} parent=66 // pred_check_branch
              %362 = sbr.rel (%p360) target = $region75
            $region74: #{tpu_custom_call.1} parent=66 // pred_region
              %s363 = sshllo.u32 0, %s352
              %s364 = sshrl.u32 %s341, 4
              // While loop
              $region76: #{tpu_custom_call.1} parent=74 // loop_pre_header
                _
              $region77: #{tpu_custom_call.1} parent=74 // loop_header
                %s366 = sphi 0, %s368
                %p367 = scmp.ge.s32.totalorder %s366, %s364
                %s371 = sphi 0, %s408
                %s372 = sphi %s351, %s411
                %s373 = sphi %s336, %s412
              $region78: #{tpu_custom_call.1} parent=74 // loop_header_branch
                %370 = sbr.rel (%p367) target = $region82
              $region79: #{tpu_custom_call.1} parent=74 // loop_body
                %v374 = vld [vmem:[%s372] sm:%s363]
                %375 = vst [vmem:[%s373] sm:%s363] %v374
                %v376 = vld [vmem:[%s372 + $0x18] sm:%s363]
                %377 = vst [vmem:[%s373 + $0x10] sm:%s363] %v376
                %v378 = vld [vmem:[%s372 + $0x30] sm:%s363]
                %379 = vst [vmem:[%s373 + $0x20] sm:%s363] %v378
                %v380 = vld [vmem:[%s372 + $0x48] sm:%s363]
                %381 = vst [vmem:[%s373 + $0x30] sm:%s363] %v380
                %v382 = vld [vmem:[%s372 + $0x60] sm:%s363]
                %383 = vst [vmem:[%s373 + $0x40] sm:%s363] %v382
                %v384 = vld [vmem:[%s372 + $0x78] sm:%s363]
                %385 = vst [vmem:[%s373 + $0x50] sm:%s363] %v384
                %v386 = vld [vmem:[%s372 + $0x90] sm:%s363]
                %387 = vst [vmem:[%s373 + $0x60] sm:%s363] %v386
                %v388 = vld [vmem:[%s372 + $0xa8] sm:%s363]
                %389 = vst [vmem:[%s373 + $0x70] sm:%s363] %v388
                %v390 = vld [vmem:[%s372 + $0xc0] sm:%s363]
                %391 = vst [vmem:[%s373 + $0x80] sm:%s363] %v390
                %v392 = vld [vmem:[%s372 + $0xd8] sm:%s363]
                %393 = vst [vmem:[%s373 + $0x90] sm:%s363] %v392
                %v394 = vld [vmem:[%s372 + $0xf0] sm:%s363]
                %395 = vst [vmem:[%s373 + $0xa0] sm:%s363] %v394
                %v396 = vld [vmem:[%s372 + $0x108] sm:%s363]
                %397 = vst [vmem:[%s373 + $0xb0] sm:%s363] %v396
                %v398 = vld [vmem:[%s372 + $0x120] sm:%s363]
                %399 = vst [vmem:[%s373 + $0xc0] sm:%s363] %v398
                %v400 = vld [vmem:[%s372 + $0x138] sm:%s363]
                %401 = vst [vmem:[%s373 + $0xd0] sm:%s363] %v400
                %v402 = vld [vmem:[%s372 + $0x150] sm:%s363]
                %403 = vst [vmem:[%s373 + $0xe0] sm:%s363] %v402
                %v404 = vld [vmem:[%s372 + $0x168] sm:%s363]
                %405 = vst [vmem:[%s373 + $0xf0] sm:%s363] %v404
                %s406 = sadd.s32 1, %s371
                %p407 = scmp.ge.s32.totalorder %s406, %s364
                %s408 = scalar_select %p407, 0, %s406
                %s409 = smul.u32 %s408, 384
                %s410 = smul.u32 %s408, 256
                %s411 = scalar_lea.vmem %s351, %s409
                %s412 = scalar_lea.vmem %s336, %s410 [#allocation3]
              $region80: #{tpu_custom_call.1} parent=74 // loop_footer
                %s368 = sadd.s32 %s366, 1
              $region81: #{tpu_custom_call.1} parent=74 // loop_footer_branch
                %365 = sbr.rel target = $region77
              $region82: #{tpu_custom_call.1} parent=74 // loop_exit
                _
              %s413 = sshrl.u32 %s341, 4
              %s414 = sand.u32 %s341, 15
              %s415 = smul.u32 %s413, 16
              %s416 = smul.u32 24, %s415
              %s417 = scalar_lea.vmem %s351, %s416
              %s418 = smul.u32 16, %s415
              %s419 = scalar_lea.vmem %s336, %s418 [#allocation3]
              // While loop
              $region83: #{tpu_custom_call.1} parent=74 // loop_pre_header
                _
              $region84: #{tpu_custom_call.1} parent=74 // loop_header
                %s421 = sphi 0, %s423
                %p422 = scmp.ge.s32.totalorder %s421, %s414
                %s426 = sphi 0, %s433
                %s427 = sphi %s417, %s436
                %s428 = sphi %s419, %s437
              $region85: #{tpu_custom_call.1} parent=74 // loop_header_branch
                %425 = sbr.rel (%p422) target = $region89
              $region86: #{tpu_custom_call.1} parent=74 // loop_body
                %v429 = vld [vmem:[%s427] sm:%s363]
                %430 = vst [vmem:[%s428] sm:%s363] %v429
                %s431 = sadd.s32 1, %s426
                %p432 = scmp.ge.s32.totalorder %s431, %s414
                %s433 = scalar_select %p432, 0, %s431
                %s434 = smul.u32 %s433, 24
                %s435 = smul.u32 %s433, 16
                %s436 = scalar_lea.vmem %s417, %s434
                %s437 = scalar_lea.vmem %s419, %s435 [#allocation3]
              $region87: #{tpu_custom_call.1} parent=74 // loop_footer
                %s423 = sadd.s32 %s421, 1
              $region88: #{tpu_custom_call.1} parent=74 // loop_footer_branch
                %420 = sbr.rel target = $region84
              $region89: #{tpu_custom_call.1} parent=74 // loop_exit
                _
            $region75: #{tpu_custom_call.1} parent=66 // pred_fallthru
              _
          $region67: #{tpu_custom_call.1} parent=62 // pred_fallthru
            _
          %1010 = vnop
        $region63: #{tpu_custom_call.1} parent=15 // pred_fallthru
          _
      $region16: #{tpu_custom_call.1} parent=5 // pred_fallthru
        _
      %p1011 = scmp.le.s32.totalorder 1, %s13
      %p1012 = scmp.lt.s32.totalorder %s13, 7
      %p1013 = pnand %p1011, %p1012
      %p1014 = pneg %p1013
      // Predicated region
      $region154: #{tpu_custom_call.1} parent=5 // pred_check
        _
      $region155: #{tpu_custom_call.1} parent=5 // pred_check_branch
        %1016 = sbr.rel (%p1013) target = $region157
      $region156: #{tpu_custom_call.1} parent=5 // pred_region
        %s1017 = ssub.s32 %s13, 1
        %s1018 = sand.u32 %s116, 1
        %s1019 = sand.u32 %s116, 1
        %s1020 = smul.addr %s1019, 32
        %s1021 = scalar_lea.vmem [#allocation2], %s1020
        // Predicated region
        $region158: #{tpu_custom_call.1} parent=156 // pred_check
          %p1022 = pneg %p129
        $region159: #{tpu_custom_call.1} parent=156 // pred_check_branch
          %1024 = sbr.rel (%p1022) target = $region161
        $region160: #{tpu_custom_call.1} parent=156 // pred_region
          _
        $region161: #{tpu_custom_call.1} parent=156 // pred_fallthru
          _
        %s1025 = sand.u32 %s196, 1
        %s1026 = sand.u32 %s196, 1
        %s1027 = smul.addr %s1026, 256
        %s1028 = scalar_lea.vmem [#allocation3], %s1027
        // Predicated region
        $region162: #{tpu_custom_call.1} parent=156 // pred_check
          %p1029 = pneg %p209
        $region163: #{tpu_custom_call.1} parent=156 // pred_check_branch
          %1031 = sbr.rel (%p1029) target = $region165
        $region164: #{tpu_custom_call.1} parent=156 // pred_region
          _
        $region165: #{tpu_custom_call.1} parent=156 // pred_fallthru
          _
        %s1032 = smul.u32 16, %s22
        %p1033 = scmp.lt.s32.totalorder %s1032, 47
        %s1034 = scalar_select %p1033, %s1032, 47
        %s1035 = smul.addr %s1034, 8
        %s1036 = scalar_lea.vmem %s0, %s1035
        %p1037 = pneg %p51
        %p1038 = pneg %p48
        %s1039 = smul.u32 16, %s22
        %p1040 = scmp.lt.s32.totalorder %s1039, 47
        %s1041 = scalar_select %p1040, %s1039, 47
        %s1042 = smul.addr %s1041, 8
        %s1043 = scalar_lea.vmem %s1, %s1042
        %p1044 = pneg %p77
        %p1045 = pneg %p74
        %s1046 = smul.u32 16, %s22
        %p1047 = scmp.lt.s32.totalorder %s1046, 47
        %s1048 = scalar_select %p1047, %s1046, 47
        %s1049 = smul.addr %s1048, 8
        %s1050 = scalar_lea.vmem %s2, %s1049
        %p1051 = pneg %p103
        %p1052 = pneg %p100
        %s1053 = sand.u32 %s116, 1
        %s1054 = sand.u32 %s116, 1
        %s1055 = smul.addr %s1054, 32
        %s1056 = scalar_lea.vmem [#allocation2], %s1055
        %p1057 = pneg %p129
        %p1058 = pneg %p126
        %s1059 = smul.u32 2, %s23
        %p1060 = scmp.lt.s32.totalorder %s1059, 3
        %s1061 = scalar_select %p1060, %s1059, 3
        %s1062 = scalar_lea.vmem %s4, %s1061
        %p1063 = pneg %p155
        %p1064 = pneg %p152
        %s1065 = smul.u32 2, %s23
        %p1066 = scmp.lt.s32.totalorder %s1065, 3
        %s1067 = scalar_select %p1066, %s1065, 3
        %s1068 = scalar_lea.vmem %s5, %s1067
        %p1069 = pneg %p181
        %p1070 = pneg %p178
        %s1071 = sand.u32 %s196, 1
        %s1072 = sand.u32 %s196, 1
        %s1073 = smul.addr %s1072, 256
        %s1074 = scalar_lea.vmem [#allocation3], %s1073
        %p1075 = pneg %p209
        %p1076 = pneg %p206
        %p1077 = pneg %p235
        %p1078 = pneg %p232
        %s1079 = smul.u32 16, %s22
        %p1080 = scmp.lt.s32.totalorder %s1079, 47
        %s1081 = scalar_select %p1080, %s1079, 47
        %s1082 = smul.addr %s1081, 8
        %s1083 = scalar_lea.vmem %s7, %s1082
        %s1084 = smul.u32 16, %s22
        %p1085 = scmp.lt.s32.totalorder %s1084, 47
        %s1086 = scalar_select %p1085, %s1084, 47
        %s1087 = smul.addr %s1086, 8
        %s1088 = scalar_lea.vmem %s0, %s1087
        %s1089 = smul.u32 16, %s22
        %s1090 = smul.u32 16, %s22
        %p1091 = scmp.lt.s32.totalorder %s1090, 47
        %s1092 = scalar_select %p1091, %s1090, 47
        %s1093 = smul.addr %s1092, 8
        %s1094 = scalar_lea.vmem %s1, %s1093
        %s1095 = smul.u32 16, %s22
        %s1096 = smul.u32 16, %s22
        %p1097 = scmp.lt.s32.totalorder %s1096, 47
        %s1098 = scalar_select %p1097, %s1096, 47
        %s1099 = smul.addr %s1098, 8
        %s1100 = scalar_lea.vmem %s2, %s1099
        %s1101 = smul.u32 16, %s22
        %s1102 = smul.u32 2, %s23
        %s1103 = smul.u32 2, %s23
        %p1104 = scmp.lt.s32.totalorder %s1103, 3
        %s1105 = scalar_select %p1104, %s1103, 3
        %s1106 = scalar_lea.vmem %s4, %s1105
        %s1107 = smul.u32 2, %s23
        %s1108 = smul.u32 2, %s23
        %p1109 = scmp.lt.s32.totalorder %s1108, 3
        %s1110 = scalar_select %p1109, %s1108, 3
        %s1111 = scalar_lea.vmem %s5, %s1110
        %s1112 = smul.u32 2, %s23
        %s1113 = smul.u32 16, %s22
        %s1114 = smul.u32 2, %s23
        %s1115 = ssub.s32 40, %s1113
        %p1116 = scmp.lt.s32.totalorder %s1115, 16
        %s1117 = scalar_select %p1116, %s1115, 16
        %s1118 = smul.u32 128, %s1117
        %s1119 = ssub.s32 3, %s1114
        %p1120 = scmp.lt.s32.totalorder %s1119, 2
        %s1121 = scalar_select %p1120, %s1119, 2
        %s1122 = smul.u32 %s1118, %s1121
        %s1123 = smul.u32 16, %s22
        %p1124 = scmp.lt.s32.totalorder %s1123, 47
        %s1125 = scalar_select %p1124, %s1123, 47
        %s1126 = smul.addr %s1125, 8
        %s1127 = scalar_lea.vmem %s7, %s1126
        %s1128 = smul.u32 16, %s22
        %p1129 = scmp.eq.s32.totalorder %s23, 0
        // Predicated region
        $region166: #{tpu_custom_call.1} parent=156 // pred_check
          %p1130 = pneg %p1129
        $region167: #{tpu_custom_call.1} parent=156 // pred_check_branch
          %1132 = sbr.rel (%p1130) target = $region169
        $region168: #{tpu_custom_call.1} parent=156 // pred_region
          %vm1133 = vcmask 7168
          %1134 = vst.msk [vmem:[%s1127] sm:$0xff] %vm1133, 0.0
          %1135 = vst.msk [vmem:[%s1127 + $0x8] sm:$0xff] %vm1133, 0.0
          %1136 = vst.msk [vmem:[%s1127 + $0x10] sm:$0xff] %vm1133, 0.0
          %1137 = vst.msk [vmem:[%s1127 + $0x18] sm:$0xff] %vm1133, 0.0
          %1138 = vst.msk [vmem:[%s1127 + $0x20] sm:$0xff] %vm1133, 0.0
          %1139 = vst.msk [vmem:[%s1127 + $0x28] sm:$0xff] %vm1133, 0.0
          %1140 = vst.msk [vmem:[%s1127 + $0x30] sm:$0xff] %vm1133, 0.0
          %1141 = vst.msk [vmem:[%s1127 + $0x38] sm:$0xff] %vm1133, 0.0
          %1142 = vst.msk [vmem:[%s1127 + $0x40] sm:$0xff] %vm1133, 0.0
          %1143 = vst.msk [vmem:[%s1127 + $0x48] sm:$0xff] %vm1133, 0.0
          %1144 = vst.msk [vmem:[%s1127 + $0x50] sm:$0xff] %vm1133, 0.0
          %1145 = vst.msk [vmem:[%s1127 + $0x58] sm:$0xff] %vm1133, 0.0
          %1146 = vst.msk [vmem:[%s1127 + $0x60] sm:$0xff] %vm1133, 0.0
          %1147 = vst.msk [vmem:[%s1127 + $0x68] sm:$0xff] %vm1133, 0.0
          %1148 = vst.msk [vmem:[%s1127 + $0x70] sm:$0xff] %vm1133, 0.0
          %1149 = vst.msk [vmem:[%s1127 + $0x78] sm:$0xff] %vm1133, 0.0
        $region169: #{tpu_custom_call.1} parent=156 // pred_fallthru
          _
        %v1150 = vld [vmem:[%s1088] sm:$0xff]
        %v1151 = vld [vmem:[%s1088 + $0x8] sm:$0xff]
        %v1152 = vld [vmem:[%s1088 + $0x10] sm:$0xff]
        %v1153 = vld [vmem:[%s1088 + $0x18] sm:$0xff]
        %v1154 = vld [vmem:[%s1088 + $0x20] sm:$0xff]
        %v1155 = vld [vmem:[%s1088 + $0x28] sm:$0xff]
        %v1156 = vld [vmem:[%s1088 + $0x30] sm:$0xff]
        %v1157 = vld [vmem:[%s1088 + $0x38] sm:$0xff]
        %v1158 = vld [vmem:[%s1088 + $0x40] sm:$0xff]
        %v1159 = vld [vmem:[%s1088 + $0x48] sm:$0xff]
        %v1160 = vld [vmem:[%s1088 + $0x50] sm:$0xff]
        %v1161 = vld [vmem:[%s1088 + $0x58] sm:$0xff]
        %v1162 = vld [vmem:[%s1088 + $0x60] sm:$0xff]
        %v1163 = vld [vmem:[%s1088 + $0x68] sm:$0xff]
        %v1164 = vld [vmem:[%s1088 + $0x70] sm:$0xff]
        %v1165 = vld [vmem:[%s1088 + $0x78] sm:$0xff]
        %v1166 = vld [vmem:[%s1021] sm:$0xff]
        %v1167 = vld [vmem:[%s1021 + $0x8] sm:$0xff]
        %v1168 = vld [vmem:[%s1021 + $0x10] sm:$0xff]
        %v1169 = vld [vmem:[%s1021 + $0x18] sm:$0xff]
        %vm1170 = vcmask 130048
        %v1172 = vsel %vm1170, %v1150, 0
        %v1175 = vsel %vm1170, %v1151, 0
        %v1178 = vsel %vm1170, %v1152, 0
        %v1181 = vsel %vm1170, %v1153, 0
        %v1184 = vsel %vm1170, %v1154, 0
        %v1187 = vsel %vm1170, %v1155, 0
        %v1190 = vsel %vm1170, %v1156, 0
        %v1193 = vsel %vm1170, %v1157, 0
        %v1196 = vsel %vm1170, %v1158, 0
        %v1199 = vsel %vm1170, %v1159, 0
        %v1202 = vsel %vm1170, %v1160, 0
        %v1205 = vsel %vm1170, %v1161, 0
        %v1208 = vsel %vm1170, %v1162, 0
        %v1211 = vsel %vm1170, %v1163, 0
        %v1214 = vsel %vm1170, %v1164, 0
        %v1217 = vsel %vm1170, %v1165, 0
        %1219 = vmatprep.subr.mxu0 %v1167
        %1220 = vmatpush1.msra.mxu0 %v1166
        %1221 = vmatprep.subr.mxu0 %v1169
        %1222 = vmatpush1.msra.mxu0 %v1168
        %1223 = vmatprep.subr.mxu0 0.0
        %1224 = vmatpush1.msra.mxu0 0.0
        %1225 = vmatprep.subr.mxu0 0.0
        %1226 = vmatpush1.msra.mxu0 0.0
        %1227 = vmatprep.subr.mxu0 0.0
        %1228 = vmatpush1.msra.mxu0 0.0
        %1229 = vmatprep.subr.mxu0 0.0
        %1230 = vmatpush1.msra.mxu0 0.0
        %1231 = vmatprep.subr.mxu0 0.0
        %1232 = vmatpush1.msra.mxu0 0.0
        %1233 = vmatprep.subr.mxu0 0.0
        %1234 = vmatpush1.msra.mxu0 0.0
        %1235 = vmatprep.subr.mxu0 0.0
        %1236 = vmatpush1.msra.mxu0 0.0
        %1237 = vmatprep.subr.mxu0 0.0
        %1238 = vmatpush1.msra.mxu0 0.0
        %1239 = vmatprep.subr.mxu0 0.0
        %1240 = vmatpush1.msra.mxu0 0.0
        %1241 = vmatprep.subr.mxu0 0.0
        %1242 = vmatpush1.msra.mxu0 0.0
        %1243 = vmatprep.subr.mxu0 0.0
        %1244 = vmatpush1.msra.mxu0 0.0
        %1245 = vmatprep.subr.mxu0 0.0
        %1246 = vmatpush1.msra.mxu0 0.0
        %1247 = vmatprep.subr.mxu0 0.0
        %1248 = vmatpush1.msra.mxu0 0.0
        %1249 = vmatprep.subr.mxu0 0.0
        %1250 = vmatpush1.msra.mxu0 0.0
        %1251 = vmatprep.subr.mxu0 0.0
        %1252 = vmatpush1.msra.mxu0 0.0
        %1253 = vmatprep.subr.mxu0 0.0
        %1254 = vmatpush1.msra.mxu0 0.0
        %1255 = vmatprep.subr.mxu0 0.0
        %1256 = vmatpush1.msra.mxu0 0.0
        %1257 = vmatprep.subr.mxu0 0.0
        %1258 = vmatpush1.msra.mxu0 0.0
        %1259 = vmatprep.subr.mxu0 0.0
        %1260 = vmatpush1.msra.mxu0 0.0
        %1261 = vmatprep.subr.mxu0 0.0
        %1262 = vmatpush1.msra.mxu0 0.0
        %1263 = vmatprep.subr.mxu0 0.0
        %1264 = vmatpush1.msra.mxu0 0.0
        %1265 = vmatprep.subr.mxu0 0.0
        %1266 = vmatpush1.msra.mxu0 0.0
        %1267 = vmatprep.subr.mxu0 0.0
        %1268 = vmatpush1.msra.mxu0 0.0
        %1269 = vmatprep.subr.mxu0 0.0
        %1270 = vmatpush1.msra.mxu0 0.0
        %1271 = vmatprep.subr.mxu0 0.0
        %1272 = vmatpush1.msra.mxu0 0.0
        %1273 = vmatprep.subr.mxu0 0.0
        %1274 = vmatpush1.msra.mxu0 0.0
        %1275 = vmatprep.subr.mxu0 0.0
        %1276 = vmatpush1.msra.mxu0 0.0
        %1277 = vmatprep.subr.mxu0 0.0
        %1278 = vmatpush1.msra.mxu0 0.0
        %1279 = vmatprep.subr.mxu0 0.0
        %1280 = vmatpush1.msra.mxu0 0.0
        %1281 = vmatprep.subr.mxu0 0.0
        %1282 = vmatpush1.msra.mxu0 0.0
        %1283 = vmatprep.mubr.f32.mxu0 0.0
        %1284 = vmatmul.mubr.f32.gmra.mrb[0].mxu0 %v1172
        %v1285 = vpop.f32.mrb[0].mxu0
        %v1286 = vadd.f32 0.0, %v1285
        %v1287 = vpop.f32.mrb[0].mxu0
        %v1288 = vadd.f32 0.0, %v1287
        %1289 = vmatprep.mubr.f32.mxu0 0.0
        %1290 = vmatmul.mubr.f32.gmra.mrb[0].mxu0 %v1175
        %v1291 = vpop.f32.mrb[0].mxu0
        %v1292 = vadd.f32 0.0, %v1291
        %v1293 = vpop.f32.mrb[0].mxu0
        %v1294 = vadd.f32 0.0, %v1293
        %1295 = vmatprep.mubr.f32.mxu0 0.0
        %1296 = vmatmul.mubr.f32.gmra.mrb[0].mxu0 %v1178
        %v1297 = vpop.f32.mrb[0].mxu0
        %v1298 = vadd.f32 0.0, %v1297
        %v1299 = vpop.f32.mrb[0].mxu0
        %v1300 = vadd.f32 0.0, %v1299
        %1301 = vmatprep.mubr.f32.mxu0 0.0
        %1302 = vmatmul.mubr.f32.gmra.mrb[0].mxu0 %v1181
        %v1303 = vpop.f32.mrb[0].mxu0
        %v1304 = vadd.f32 0.0, %v1303
        %v1305 = vpop.f32.mrb[0].mxu0
        %v1306 = vadd.f32 0.0, %v1305
        %1307 = vmatprep.mubr.f32.mxu0 0.0
        %1308 = vmatmul.mubr.f32.gmra.mrb[0].mxu0 %v1184
        %v1309 = vpop.f32.mrb[0].mxu0
        %v1310 = vadd.f32 0.0, %v1309
        %v1311 = vpop.f32.mrb[0].mxu0
        %v1312 = vadd.f32 0.0, %v1311
        %1313 = vmatprep.mubr.f32.mxu0 0.0
        %1314 = vmatmul.mubr.f32.gmra.mrb[0].mxu0 %v1187
        %v1315 = vpop.f32.mrb[0].mxu0
        %v1316 = vadd.f32 0.0, %v1315
        %v1317 = vpop.f32.mrb[0].mxu0
        %v1318 = vadd.f32 0.0, %v1317
        %1319 = vmatprep.mubr.f32.mxu0 0.0
        %1320 = vmatmul.mubr.f32.gmra.mrb[0].mxu0 %v1190
        %v1321 = vpop.f32.mrb[0].mxu0
        %v1322 = vadd.f32 0.0, %v1321
        %v1323 = vpop.f32.mrb[0].mxu0
        %v1324 = vadd.f32 0.0, %v1323
        %1325 = vmatprep.mubr.f32.mxu0 0.0
        %1326 = vmatmul.mubr.f32.gmra.mrb[0].mxu0 %v1193
        %v1327 = vpop.f32.mrb[0].mxu0
        %v1328 = vadd.f32 0.0, %v1327
        %v1329 = vpop.f32.mrb[0].mxu0
        %v1330 = vadd.f32 0.0, %v1329
        %1331 = vmatprep.mubr.f32.mxu0 0.0
        %1332 = vmatmul.mubr.f32.gmra.mrb[0].mxu0 %v1196
        %v1333 = vpop.f32.mrb[0].mxu0
        %v1334 = vadd.f32 0.0, %v1333
        %v1335 = vpop.f32.mrb[0].mxu0
        %v1336 = vadd.f32 0.0, %v1335
        %1337 = vmatprep.mubr.f32.mxu0 0.0
        %1338 = vmatmul.mubr.f32.gmra.mrb[0].mxu0 %v1199
        %v1339 = vpop.f32.mrb[0].mxu0
        %v1340 = vadd.f32 0.0, %v1339
        %v1341 = vpop.f32.mrb[0].mxu0
        %v1342 = vadd.f32 0.0, %v1341
        %1343 = vmatprep.mubr.f32.mxu0 0.0
        %1344 = vmatmul.mubr.f32.gmra.mrb[0].mxu0 %v1202
        %v1345 = vpop.f32.mrb[0].mxu0
        %v1346 = vadd.f32 0.0, %v1345
        %v1347 = vpop.f32.mrb[0].mxu0
        %v1348 = vadd.f32 0.0, %v1347
        %1349 = vmatprep.mubr.f32.mxu0 0.0
        %1350 = vmatmul.mubr.f32.gmra.mrb[0].mxu0 %v1205
        %v1351 = vpop.f32.mrb[0].mxu0
        %v1352 = vadd.f32 0.0, %v1351
        %v1353 = vpop.f32.mrb[0].mxu0
        %v1354 = vadd.f32 0.0, %v1353
        %1355 = vmatprep.mubr.f32.mxu0 0.0
        %1356 = vmatmul.mubr.f32.gmra.mrb[0].mxu0 %v1208
        %v1357 = vpop.f32.mrb[0].mxu0
        %v1358 = vadd.f32 0.0, %v1357
        %v1359 = vpop.f32.mrb[0].mxu0
        %v1360 = vadd.f32 0.0, %v1359
        %1361 = vmatprep.mubr.f32.mxu0 0.0
        %1362 = vmatmul.mubr.f32.gmra.mrb[0].mxu0 %v1211
        %v1363 = vpop.f32.mrb[0].mxu0
        %v1364 = vadd.f32 0.0, %v1363
        %v1365 = vpop.f32.mrb[0].mxu0
        %v1366 = vadd.f32 0.0, %v1365
        %1367 = vmatprep.mubr.f32.mxu0 0.0
        %1368 = vmatmul.mubr.f32.gmra.mrb[0].mxu0 %v1214
        %v1369 = vpop.f32.mrb[0].mxu0
        %v1370 = vadd.f32 0.0, %v1369
        %v1371 = vpop.f32.mrb[0].mxu0
        %v1372 = vadd.f32 0.0, %v1371
        %1373 = vmatprep.mubr.f32.mxu0 0.0
        %1374 = vmatmul.mubr.f32.gmra.mrb[0].mxu0 %v1217
        %v1375 = vpop.f32.mrb[0].mxu0
        %v1376 = vadd.f32 0.0, %v1375
        %v1377 = vpop.f32.mrb[0].mxu0
        %v1378 = vadd.f32 0.0, %v1377
        %1379 = vdwg.mxu0
        %v1380 = vld [vmem:[%s1094] sm:$0xff]
        %v1381 = vld [vmem:[%s1094 + $0x8] sm:$0xff]
        %v1382 = vld [vmem:[%s1094 + $0x10] sm:$0xff]
        %v1383 = vld [vmem:[%s1094 + $0x18] sm:$0xff]
        %v1384 = vld [vmem:[%s1094 + $0x20] sm:$0xff]
        %v1385 = vld [vmem:[%s1094 + $0x28] sm:$0xff]
        %v1386 = vld [vmem:[%s1094 + $0x30] sm:$0xff]
        %v1387 = vld [vmem:[%s1094 + $0x38] sm:$0xff]
        %v1388 = vld [vmem:[%s1094 + $0x40] sm:$0xff]
        %v1389 = vld [vmem:[%s1094 + $0x48] sm:$0xff]
        %v1390 = vld [vmem:[%s1094 + $0x50] sm:$0xff]
        %v1391 = vld [vmem:[%s1094 + $0x58] sm:$0xff]
        %v1392 = vld [vmem:[%s1094 + $0x60] sm:$0xff]
        %v1393 = vld [vmem:[%s1094 + $0x68] sm:$0xff]
        %v1394 = vld [vmem:[%s1094 + $0x70] sm:$0xff]
        %v1395 = vld [vmem:[%s1094 + $0x78] sm:$0xff]
        %v1396 = vld [vmem:[%s1106] sm:$0x3]
        %1398 = vset.pattern.permute.xlu0 0
        %1399 = vperm.xlu0 %1398, %v1380
        %v1400 = vpop.permute.xlu0 %1399
        %1403 = vset.pattern.permute.xlu0 0
        %1404 = vperm.xlu0 %1403, %v1381
        %v1405 = vpop.permute.xlu0 %1404
        %1408 = vset.pattern.permute.xlu0 0
        %1409 = vperm.xlu0 %1408, %v1382
        %v1410 = vpop.permute.xlu0 %1409
        %1413 = vset.pattern.permute.xlu0 0
        %1414 = vperm.xlu0 %1413, %v1383
        %v1415 = vpop.permute.xlu0 %1414
        %1418 = vset.pattern.permute.xlu0 0
        %1419 = vperm.xlu0 %1418, %v1384
        %v1420 = vpop.permute.xlu0 %1419
        %1423 = vset.pattern.permute.xlu0 0
        %1424 = vperm.xlu0 %1423, %v1385
        %v1425 = vpop.permute.xlu0 %1424
        %1428 = vset.pattern.permute.xlu0 0
        %1429 = vperm.xlu0 %1428, %v1386
        %v1430 = vpop.permute.xlu0 %1429
        %1433 = vset.pattern.permute.xlu0 0
        %1434 = vperm.xlu0 %1433, %v1387
        %v1435 = vpop.permute.xlu0 %1434
        %1438 = vset.pattern.permute.xlu0 0
        %1439 = vperm.xlu0 %1438, %v1388
        %v1440 = vpop.permute.xlu0 %1439
        %1443 = vset.pattern.permute.xlu0 0
        %1444 = vperm.xlu0 %1443, %v1389
        %v1445 = vpop.permute.xlu0 %1444
        %1448 = vset.pattern.permute.xlu0 0
        %1449 = vperm.xlu0 %1448, %v1390
        %v1450 = vpop.permute.xlu0 %1449
        %1453 = vset.pattern.permute.xlu0 0
        %1454 = vperm.xlu0 %1453, %v1391
        %v1455 = vpop.permute.xlu0 %1454
        %1458 = vset.pattern.permute.xlu0 0
        %1459 = vperm.xlu0 %1458, %v1392
        %v1460 = vpop.permute.xlu0 %1459
        %1463 = vset.pattern.permute.xlu0 0
        %1464 = vperm.xlu0 %1463, %v1393
        %v1465 = vpop.permute.xlu0 %1464
        %1468 = vset.pattern.permute.xlu0 0
        %1469 = vperm.xlu0 %1468, %v1394
        %v1470 = vpop.permute.xlu0 %1469
        %1473 = vset.pattern.permute.xlu0 0
        %1474 = vperm.xlu0 %1473, %v1395
        %v1475 = vpop.permute.xlu0 %1474
        %v1478 = vlaneseq
        %v1479 = vshrl.u32 %v1478, 7
        %v1480 = vsub.s32 0, %v1479
        %v1481 = vrot.slane %v1396, %v1480
        %v1482 = vlaneseq
        %v1483 = vshrl.u32 %v1482, 7
        %v1484 = vsub.s32 1, %v1483
        %v1485 = vrot.slane %v1396, %v1484
        %v1488 = vadd.f32 %v1400, %v1481
        %v1489 = vadd.f32 %v1400, %v1485
        %v1490 = vadd.f32 %v1405, %v1481
        %v1491 = vadd.f32 %v1405, %v1485
        %v1492 = vadd.f32 %v1410, %v1481
        %v1493 = vadd.f32 %v1410, %v1485
        %v1494 = vadd.f32 %v1415, %v1481
        %v1495 = vadd.f32 %v1415, %v1485
        %v1496 = vadd.f32 %v1420, %v1481
        %v1497 = vadd.f32 %v1420, %v1485
        %v1498 = vadd.f32 %v1425, %v1481
        %v1499 = vadd.f32 %v1425, %v1485
        %v1500 = vadd.f32 %v1430, %v1481
        %v1501 = vadd.f32 %v1430, %v1485
        %v1502 = vadd.f32 %v1435, %v1481
        %v1503 = vadd.f32 %v1435, %v1485
        %v1504 = vadd.f32 %v1440, %v1481
        %v1505 = vadd.f32 %v1440, %v1485
        %v1506 = vadd.f32 %v1445, %v1481
        %v1507 = vadd.f32 %v1445, %v1485
        %v1508 = vadd.f32 %v1450, %v1481
        %v1509 = vadd.f32 %v1450, %v1485
        %v1510 = vadd.f32 %v1455, %v1481
        %v1511 = vadd.f32 %v1455, %v1485
        %v1512 = vadd.f32 %v1460, %v1481
        %v1513 = vadd.f32 %v1460, %v1485
        %v1514 = vadd.f32 %v1465, %v1481
        %v1515 = vadd.f32 %v1465, %v1485
        %v1516 = vadd.f32 %v1470, %v1481
        %v1517 = vadd.f32 %v1470, %v1485
        %v1518 = vadd.f32 %v1475, %v1481
        %v1519 = vadd.f32 %v1475, %v1485
        %v1520 = vadd.f32 %v1488, %v1286
        %v1521 = vadd.f32 %v1489, %v1288
        %v1522 = vadd.f32 %v1490, %v1292
        %v1523 = vadd.f32 %v1491, %v1294
        %v1524 = vadd.f32 %v1492, %v1298
        %v1525 = vadd.f32 %v1493, %v1300
        %v1526 = vadd.f32 %v1494, %v1304
        %v1527 = vadd.f32 %v1495, %v1306
        %v1528 = vadd.f32 %v1496, %v1310
        %v1529 = vadd.f32 %v1497, %v1312
        %v1530 = vadd.f32 %v1498, %v1316
        %v1531 = vadd.f32 %v1499, %v1318
        %v1532 = vadd.f32 %v1500, %v1322
        %v1533 = vadd.f32 %v1501, %v1324
        %v1534 = vadd.f32 %v1502, %v1328
        %v1535 = vadd.f32 %v1503, %v1330
        %v1536 = vadd.f32 %v1504, %v1334
        %v1537 = vadd.f32 %v1505, %v1336
        %v1538 = vadd.f32 %v1506, %v1340
        %v1539 = vadd.f32 %v1507, %v1342
        %v1540 = vadd.f32 %v1508, %v1346
        %v1541 = vadd.f32 %v1509, %v1348
        %v1542 = vadd.f32 %v1510, %v1352
        %v1543 = vadd.f32 %v1511, %v1354
        %v1544 = vadd.f32 %v1512, %v1358
        %v1545 = vadd.f32 %v1513, %v1360
        %v1546 = vadd.f32 %v1514, %v1364
        %v1547 = vadd.f32 %v1515, %v1366
        %v1548 = vadd.f32 %v1516, %v1370
        %v1549 = vadd.f32 %v1517, %v1372
        %v1550 = vadd.f32 %v1518, %v1376
        %v1551 = vadd.f32 %v1519, %v1378
        %v1552 = vmax.f32 %v1520, 0.0
        %v1553 = vmax.f32 %v1521, 0.0
        %v1554 = vmax.f32 %v1522, 0.0
        %v1555 = vmax.f32 %v1523, 0.0
        %v1556 = vmax.f32 %v1524, 0.0
        %v1557 = vmax.f32 %v1525, 0.0
        %v1558 = vmax.f32 %v1526, 0.0
        %v1559 = vmax.f32 %v1527, 0.0
        %v1560 = vmax.f32 %v1528, 0.0
        %v1561 = vmax.f32 %v1529, 0.0
        %v1562 = vmax.f32 %v1530, 0.0
        %v1563 = vmax.f32 %v1531, 0.0
        %v1564 = vmax.f32 %v1532, 0.0
        %v1565 = vmax.f32 %v1533, 0.0
        %v1566 = vmax.f32 %v1534, 0.0
        %v1567 = vmax.f32 %v1535, 0.0
        %v1568 = vmax.f32 %v1536, 0.0
        %v1569 = vmax.f32 %v1537, 0.0
        %v1570 = vmax.f32 %v1538, 0.0
        %v1571 = vmax.f32 %v1539, 0.0
        %v1572 = vmax.f32 %v1540, 0.0
        %v1573 = vmax.f32 %v1541, 0.0
        %v1574 = vmax.f32 %v1542, 0.0
        %v1575 = vmax.f32 %v1543, 0.0
        %v1576 = vmax.f32 %v1544, 0.0
        %v1577 = vmax.f32 %v1545, 0.0
        %v1578 = vmax.f32 %v1546, 0.0
        %v1579 = vmax.f32 %v1547, 0.0
        %v1580 = vmax.f32 %v1548, 0.0
        %v1581 = vmax.f32 %v1549, 0.0
        %v1582 = vmax.f32 %v1550, 0.0
        %v1583 = vmax.f32 %v1551, 0.0
        %vm1584 = vcmp.gt.f32.partialorder %v1552, 20.0
        %vm1585 = vcmp.gt.f32.partialorder %v1553, 20.0
        %vm1586 = vcmp.gt.f32.partialorder %v1554, 20.0
        %vm1587 = vcmp.gt.f32.partialorder %v1555, 20.0
        %vm1588 = vcmp.gt.f32.partialorder %v1556, 20.0
        %vm1589 = vcmp.gt.f32.partialorder %v1557, 20.0
        %vm1590 = vcmp.gt.f32.partialorder %v1558, 20.0
        %vm1591 = vcmp.gt.f32.partialorder %v1559, 20.0
        %vm1592 = vcmp.gt.f32.partialorder %v1560, 20.0
        %vm1593 = vcmp.gt.f32.partialorder %v1561, 20.0
        %vm1594 = vcmp.gt.f32.partialorder %v1562, 20.0
        %vm1595 = vcmp.gt.f32.partialorder %v1563, 20.0
        %vm1596 = vcmp.gt.f32.partialorder %v1564, 20.0
        %vm1597 = vcmp.gt.f32.partialorder %v1565, 20.0
        %vm1598 = vcmp.gt.f32.partialorder %v1566, 20.0
        %vm1599 = vcmp.gt.f32.partialorder %v1567, 20.0
        %vm1600 = vcmp.gt.f32.partialorder %v1568, 20.0
        %vm1601 = vcmp.gt.f32.partialorder %v1569, 20.0
        %vm1602 = vcmp.gt.f32.partialorder %v1570, 20.0
        %vm1603 = vcmp.gt.f32.partialorder %v1571, 20.0
        %vm1604 = vcmp.gt.f32.partialorder %v1572, 20.0
        %vm1605 = vcmp.gt.f32.partialorder %v1573, 20.0
        %vm1606 = vcmp.gt.f32.partialorder %v1574, 20.0
        %vm1607 = vcmp.gt.f32.partialorder %v1575, 20.0
        %vm1608 = vcmp.gt.f32.partialorder %v1576, 20.0
        %vm1609 = vcmp.gt.f32.partialorder %v1577, 20.0
        %vm1610 = vcmp.gt.f32.partialorder %v1578, 20.0
        %vm1611 = vcmp.gt.f32.partialorder %v1579, 20.0
        %vm1612 = vcmp.gt.f32.partialorder %v1580, 20.0
        %vm1613 = vcmp.gt.f32.partialorder %v1581, 20.0
        %vm1614 = vcmp.gt.f32.partialorder %v1582, 20.0
        %vm1615 = vcmp.gt.f32.partialorder %v1583, 20.0
        %v1616 = vmul.f32 %v1552, 1.442695
        %v1617 = vpow.pop %v1616
        %v1618 = vmul.f32 %v1553, 1.442695
        %v1619 = vpow.pop %v1618
        %v1620 = vmul.f32 %v1554, 1.442695
        %v1621 = vpow.pop %v1620
        %v1622 = vmul.f32 %v1555, 1.442695
        %v1623 = vpow.pop %v1622
        %v1624 = vmul.f32 %v1556, 1.442695
        %v1625 = vpow.pop %v1624
        %v1626 = vmul.f32 %v1557, 1.442695
        %v1627 = vpow.pop %v1626
        %v1628 = vmul.f32 %v1558, 1.442695
        %v1629 = vpow.pop %v1628
        %v1630 = vmul.f32 %v1559, 1.442695
        %v1631 = vpow.pop %v1630
        %v1632 = vmul.f32 %v1560, 1.442695
        %v1633 = vpow.pop %v1632
        %v1634 = vmul.f32 %v1561, 1.442695
        %v1635 = vpow.pop %v1634
        %v1636 = vmul.f32 %v1562, 1.442695
        %v1637 = vpow.pop %v1636
        %v1638 = vmul.f32 %v1563, 1.442695
        %v1639 = vpow.pop %v1638
        %v1640 = vmul.f32 %v1564, 1.442695
        %v1641 = vpow.pop %v1640
        %v1642 = vmul.f32 %v1565, 1.442695
        %v1643 = vpow.pop %v1642
        %v1644 = vmul.f32 %v1566, 1.442695
        %v1645 = vpow.pop %v1644
        %v1646 = vmul.f32 %v1567, 1.442695
        %v1647 = vpow.pop %v1646
        %v1648 = vmul.f32 %v1568, 1.442695
        %v1649 = vpow.pop %v1648
        %v1650 = vmul.f32 %v1569, 1.442695
        %v1651 = vpow.pop %v1650
        %v1652 = vmul.f32 %v1570, 1.442695
        %v1653 = vpow.pop %v1652
        %v1654 = vmul.f32 %v1571, 1.442695
        %v1655 = vpow.pop %v1654
        %v1656 = vmul.f32 %v1572, 1.442695
        %v1657 = vpow.pop %v1656
        %v1658 = vmul.f32 %v1573, 1.442695
        %v1659 = vpow.pop %v1658
        %v1660 = vmul.f32 %v1574, 1.442695
        %v1661 = vpow.pop %v1660
        %v1662 = vmul.f32 %v1575, 1.442695
        %v1663 = vpow.pop %v1662
        %v1664 = vmul.f32 %v1576, 1.442695
        %v1665 = vpow.pop %v1664
        %v1666 = vmul.f32 %v1577, 1.442695
        %v1667 = vpow.pop %v1666
        %v1668 = vmul.f32 %v1578, 1.442695
        %v1669 = vpow.pop %v1668
        %v1670 = vmul.f32 %v1579, 1.442695
        %v1671 = vpow.pop %v1670
        %v1672 = vmul.f32 %v1580, 1.442695
        %v1673 = vpow.pop %v1672
        %v1674 = vmul.f32 %v1581, 1.442695
        %v1675 = vpow.pop %v1674
        %v1676 = vmul.f32 %v1582, 1.442695
        %v1677 = vpow.pop %v1676
        %v1678 = vmul.f32 %v1583, 1.442695
        %v1679 = vpow.pop %v1678
        %v1680 = vadd.f32 %v1617, 1.0
        %v1681 = vlog2.pop %v1680
        %v1682 = vmul.f32 %v1681, 0.6931472
        %v1683 = vmul.f32 -0.5, %v1617
        %v1684 = vadd.f32 %v1683, 1.0
        %v1685 = vmul.f32 %v1684, %v1617
        %v1686 = vand.u32 2147483647, %v1617
        %vm1687 = vcmp.lt.f32.partialorder %v1686, 0.0004427343
        %v1688 = vsel %vm1687, %v1685, %v1682
        %v1689 = vadd.f32 %v1619, 1.0
        %v1690 = vlog2.pop %v1689
        %v1691 = vmul.f32 %v1690, 0.6931472
        %v1692 = vmul.f32 -0.5, %v1619
        %v1693 = vadd.f32 %v1692, 1.0
        %v1694 = vmul.f32 %v1693, %v1619
        %v1695 = vand.u32 2147483647, %v1619
        %vm1696 = vcmp.lt.f32.partialorder %v1695, 0.0004427343
        %v1697 = vsel %vm1696, %v1694, %v1691
        %v1698 = vadd.f32 %v1621, 1.0
        %v1699 = vlog2.pop %v1698
        %v1700 = vmul.f32 %v1699, 0.6931472
        %v1701 = vmul.f32 -0.5, %v1621
        %v1702 = vadd.f32 %v1701, 1.0
        %v1703 = vmul.f32 %v1702, %v1621
        %v1704 = vand.u32 2147483647, %v1621
        %vm1705 = vcmp.lt.f32.partialorder %v1704, 0.0004427343
        %v1706 = vsel %vm1705, %v1703, %v1700
        %v1707 = vadd.f32 %v1623, 1.0
        %v1708 = vlog2.pop %v1707
        %v1709 = vmul.f32 %v1708, 0.6931472
        %v1710 = vmul.f32 -0.5, %v1623
        %v1711 = vadd.f32 %v1710, 1.0
        %v1712 = vmul.f32 %v1711, %v1623
        %v1713 = vand.u32 2147483647, %v1623
        %vm1714 = vcmp.lt.f32.partialorder %v1713, 0.0004427343
        %v1715 = vsel %vm1714, %v1712, %v1709
        %v1716 = vadd.f32 %v1625, 1.0
        %v1717 = vlog2.pop %v1716
        %v1718 = vmul.f32 %v1717, 0.6931472
        %v1719 = vmul.f32 -0.5, %v1625
        %v1720 = vadd.f32 %v1719, 1.0
        %v1721 = vmul.f32 %v1720, %v1625
        %v1722 = vand.u32 2147483647, %v1625
        %vm1723 = vcmp.lt.f32.partialorder %v1722, 0.0004427343
        %v1724 = vsel %vm1723, %v1721, %v1718
        %v1725 = vadd.f32 %v1627, 1.0
        %v1726 = vlog2.pop %v1725
        %v1727 = vmul.f32 %v1726, 0.6931472
        %v1728 = vmul.f32 -0.5, %v1627
        %v1729 = vadd.f32 %v1728, 1.0
        %v1730 = vmul.f32 %v1729, %v1627
        %v1731 = vand.u32 2147483647, %v1627
        %vm1732 = vcmp.lt.f32.partialorder %v1731, 0.0004427343
        %v1733 = vsel %vm1732, %v1730, %v1727
        %v1734 = vadd.f32 %v1629, 1.0
        %v1735 = vlog2.pop %v1734
        %v1736 = vmul.f32 %v1735, 0.6931472
        %v1737 = vmul.f32 -0.5, %v1629
        %v1738 = vadd.f32 %v1737, 1.0
        %v1739 = vmul.f32 %v1738, %v1629
        %v1740 = vand.u32 2147483647, %v1629
        %vm1741 = vcmp.lt.f32.partialorder %v1740, 0.0004427343
        %v1742 = vsel %vm1741, %v1739, %v1736
        %v1743 = vadd.f32 %v1631, 1.0
        %v1744 = vlog2.pop %v1743
        %v1745 = vmul.f32 %v1744, 0.6931472
        %v1746 = vmul.f32 -0.5, %v1631
        %v1747 = vadd.f32 %v1746, 1.0
        %v1748 = vmul.f32 %v1747, %v1631
        %v1749 = vand.u32 2147483647, %v1631
        %vm1750 = vcmp.lt.f32.partialorder %v1749, 0.0004427343
        %v1751 = vsel %vm1750, %v1748, %v1745
        %v1752 = vadd.f32 %v1633, 1.0
        %v1753 = vlog2.pop %v1752
        %v1754 = vmul.f32 %v1753, 0.6931472
        %v1755 = vmul.f32 -0.5, %v1633
        %v1756 = vadd.f32 %v1755, 1.0
        %v1757 = vmul.f32 %v1756, %v1633
        %v1758 = vand.u32 2147483647, %v1633
        %vm1759 = vcmp.lt.f32.partialorder %v1758, 0.0004427343
        %v1760 = vsel %vm1759, %v1757, %v1754
        %v1761 = vadd.f32 %v1635, 1.0
        %v1762 = vlog2.pop %v1761
        %v1763 = vmul.f32 %v1762, 0.6931472
        %v1764 = vmul.f32 -0.5, %v1635
        %v1765 = vadd.f32 %v1764, 1.0
        %v1766 = vmul.f32 %v1765, %v1635
        %v1767 = vand.u32 2147483647, %v1635
        %vm1768 = vcmp.lt.f32.partialorder %v1767, 0.0004427343
        %v1769 = vsel %vm1768, %v1766, %v1763
        %v1770 = vadd.f32 %v1637, 1.0
        %v1771 = vlog2.pop %v1770
        %v1772 = vmul.f32 %v1771, 0.6931472
        %v1773 = vmul.f32 -0.5, %v1637
        %v1774 = vadd.f32 %v1773, 1.0
        %v1775 = vmul.f32 %v1774, %v1637
        %v1776 = vand.u32 2147483647, %v1637
        %vm1777 = vcmp.lt.f32.partialorder %v1776, 0.0004427343
        %v1778 = vsel %vm1777, %v1775, %v1772
        %v1779 = vadd.f32 %v1639, 1.0
        %v1780 = vlog2.pop %v1779
        %v1781 = vmul.f32 %v1780, 0.6931472
        %v1782 = vmul.f32 -0.5, %v1639
        %v1783 = vadd.f32 %v1782, 1.0
        %v1784 = vmul.f32 %v1783, %v1639
        %v1785 = vand.u32 2147483647, %v1639
        %vm1786 = vcmp.lt.f32.partialorder %v1785, 0.0004427343
        %v1787 = vsel %vm1786, %v1784, %v1781
        %v1788 = vadd.f32 %v1641, 1.0
        %v1789 = vlog2.pop %v1788
        %v1790 = vmul.f32 %v1789, 0.6931472
        %v1791 = vmul.f32 -0.5, %v1641
        %v1792 = vadd.f32 %v1791, 1.0
        %v1793 = vmul.f32 %v1792, %v1641
        %v1794 = vand.u32 2147483647, %v1641
        %vm1795 = vcmp.lt.f32.partialorder %v1794, 0.0004427343
        %v1796 = vsel %vm1795, %v1793, %v1790
        %v1797 = vadd.f32 %v1643, 1.0
        %v1798 = vlog2.pop %v1797
        %v1799 = vmul.f32 %v1798, 0.6931472
        %v1800 = vmul.f32 -0.5, %v1643
        %v1801 = vadd.f32 %v1800, 1.0
        %v1802 = vmul.f32 %v1801, %v1643
        %v1803 = vand.u32 2147483647, %v1643
        %vm1804 = vcmp.lt.f32.partialorder %v1803, 0.0004427343
        %v1805 = vsel %vm1804, %v1802, %v1799
        %v1806 = vadd.f32 %v1645, 1.0
        %v1807 = vlog2.pop %v1806
        %v1808 = vmul.f32 %v1807, 0.6931472
        %v1809 = vmul.f32 -0.5, %v1645
        %v1810 = vadd.f32 %v1809, 1.0
        %v1811 = vmul.f32 %v1810, %v1645
        %v1812 = vand.u32 2147483647, %v1645
        %vm1813 = vcmp.lt.f32.partialorder %v1812, 0.0004427343
        %v1814 = vsel %vm1813, %v1811, %v1808
        %v1815 = vadd.f32 %v1647, 1.0
        %v1816 = vlog2.pop %v1815
        %v1817 = vmul.f32 %v1816, 0.6931472
        %v1818 = vmul.f32 -0.5, %v1647
        %v1819 = vadd.f32 %v1818, 1.0
        %v1820 = vmul.f32 %v1819, %v1647
        %v1821 = vand.u32 2147483647, %v1647
        %vm1822 = vcmp.lt.f32.partialorder %v1821, 0.0004427343
        %v1823 = vsel %vm1822, %v1820, %v1817
        %v1824 = vadd.f32 %v1649, 1.0
        %v1825 = vlog2.pop %v1824
        %v1826 = vmul.f32 %v1825, 0.6931472
        %v1827 = vmul.f32 -0.5, %v1649
        %v1828 = vadd.f32 %v1827, 1.0
        %v1829 = vmul.f32 %v1828, %v1649
        %v1830 = vand.u32 2147483647, %v1649
        %vm1831 = vcmp.lt.f32.partialorder %v1830, 0.0004427343
        %v1832 = vsel %vm1831, %v1829, %v1826
        %v1833 = vadd.f32 %v1651, 1.0
        %v1834 = vlog2.pop %v1833
        %v1835 = vmul.f32 %v1834, 0.6931472
        %v1836 = vmul.f32 -0.5, %v1651
        %v1837 = vadd.f32 %v1836, 1.0
        %v1838 = vmul.f32 %v1837, %v1651
        %v1839 = vand.u32 2147483647, %v1651
        %vm1840 = vcmp.lt.f32.partialorder %v1839, 0.0004427343
        %v1841 = vsel %vm1840, %v1838, %v1835
        %v1842 = vadd.f32 %v1653, 1.0
        %v1843 = vlog2.pop %v1842
        %v1844 = vmul.f32 %v1843, 0.6931472
        %v1845 = vmul.f32 -0.5, %v1653
        %v1846 = vadd.f32 %v1845, 1.0
        %v1847 = vmul.f32 %v1846, %v1653
        %v1848 = vand.u32 2147483647, %v1653
        %vm1849 = vcmp.lt.f32.partialorder %v1848, 0.0004427343
        %v1850 = vsel %vm1849, %v1847, %v1844
        %v1851 = vadd.f32 %v1655, 1.0
        %v1852 = vlog2.pop %v1851
        %v1853 = vmul.f32 %v1852, 0.6931472
        %v1854 = vmul.f32 -0.5, %v1655
        %v1855 = vadd.f32 %v1854, 1.0
        %v1856 = vmul.f32 %v1855, %v1655
        %v1857 = vand.u32 2147483647, %v1655
        %vm1858 = vcmp.lt.f32.partialorder %v1857, 0.0004427343
        %v1859 = vsel %vm1858, %v1856, %v1853
        %v1860 = vadd.f32 %v1657, 1.0
        %v1861 = vlog2.pop %v1860
        %v1862 = vmul.f32 %v1861, 0.6931472
        %v1863 = vmul.f32 -0.5, %v1657
        %v1864 = vadd.f32 %v1863, 1.0
        %v1865 = vmul.f32 %v1864, %v1657
        %v1866 = vand.u32 2147483647, %v1657
        %vm1867 = vcmp.lt.f32.partialorder %v1866, 0.0004427343
        %v1868 = vsel %vm1867, %v1865, %v1862
        %v1869 = vadd.f32 %v1659, 1.0
        %v1870 = vlog2.pop %v1869
        %v1871 = vmul.f32 %v1870, 0.6931472
        %v1872 = vmul.f32 -0.5, %v1659
        %v1873 = vadd.f32 %v1872, 1.0
        %v1874 = vmul.f32 %v1873, %v1659
        %v1875 = vand.u32 2147483647, %v1659
        %vm1876 = vcmp.lt.f32.partialorder %v1875, 0.0004427343
        %v1877 = vsel %vm1876, %v1874, %v1871
        %v1878 = vadd.f32 %v1661, 1.0
        %v1879 = vlog2.pop %v1878
        %v1880 = vmul.f32 %v1879, 0.6931472
        %v1881 = vmul.f32 -0.5, %v1661
        %v1882 = vadd.f32 %v1881, 1.0
        %v1883 = vmul.f32 %v1882, %v1661
        %v1884 = vand.u32 2147483647, %v1661
        %vm1885 = vcmp.lt.f32.partialorder %v1884, 0.0004427343
        %v1886 = vsel %vm1885, %v1883, %v1880
        %v1887 = vadd.f32 %v1663, 1.0
        %v1888 = vlog2.pop %v1887
        %v1889 = vmul.f32 %v1888, 0.6931472
        %v1890 = vmul.f32 -0.5, %v1663
        %v1891 = vadd.f32 %v1890, 1.0
        %v1892 = vmul.f32 %v1891, %v1663
        %v1893 = vand.u32 2147483647, %v1663
        %vm1894 = vcmp.lt.f32.partialorder %v1893, 0.0004427343
        %v1895 = vsel %vm1894, %v1892, %v1889
        %v1896 = vadd.f32 %v1665, 1.0
        %v1897 = vlog2.pop %v1896
        %v1898 = vmul.f32 %v1897, 0.6931472
        %v1899 = vmul.f32 -0.5, %v1665
        %v1900 = vadd.f32 %v1899, 1.0
        %v1901 = vmul.f32 %v1900, %v1665
        %v1902 = vand.u32 2147483647, %v1665
        %vm1903 = vcmp.lt.f32.partialorder %v1902, 0.0004427343
        %v1904 = vsel %vm1903, %v1901, %v1898
        %v1905 = vadd.f32 %v1667, 1.0
        %v1906 = vlog2.pop %v1905
        %v1907 = vmul.f32 %v1906, 0.6931472
        %v1908 = vmul.f32 -0.5, %v1667
        %v1909 = vadd.f32 %v1908, 1.0
        %v1910 = vmul.f32 %v1909, %v1667
        %v1911 = vand.u32 2147483647, %v1667
        %vm1912 = vcmp.lt.f32.partialorder %v1911, 0.0004427343
        %v1913 = vsel %vm1912, %v1910, %v1907
        %v1914 = vadd.f32 %v1669, 1.0
        %v1915 = vlog2.pop %v1914
        %v1916 = vmul.f32 %v1915, 0.6931472
        %v1917 = vmul.f32 -0.5, %v1669
        %v1918 = vadd.f32 %v1917, 1.0
        %v1919 = vmul.f32 %v1918, %v1669
        %v1920 = vand.u32 2147483647, %v1669
        %vm1921 = vcmp.lt.f32.partialorder %v1920, 0.0004427343
        %v1922 = vsel %vm1921, %v1919, %v1916
        %v1923 = vadd.f32 %v1671, 1.0
        %v1924 = vlog2.pop %v1923
        %v1925 = vmul.f32 %v1924, 0.6931472
        %v1926 = vmul.f32 -0.5, %v1671
        %v1927 = vadd.f32 %v1926, 1.0
        %v1928 = vmul.f32 %v1927, %v1671
        %v1929 = vand.u32 2147483647, %v1671
        %vm1930 = vcmp.lt.f32.partialorder %v1929, 0.0004427343
        %v1931 = vsel %vm1930, %v1928, %v1925
        %v1932 = vadd.f32 %v1673, 1.0
        %v1933 = vlog2.pop %v1932
        %v1934 = vmul.f32 %v1933, 0.6931472
        %v1935 = vmul.f32 -0.5, %v1673
        %v1936 = vadd.f32 %v1935, 1.0
        %v1937 = vmul.f32 %v1936, %v1673
        %v1938 = vand.u32 2147483647, %v1673
        %vm1939 = vcmp.lt.f32.partialorder %v1938, 0.0004427343
        %v1940 = vsel %vm1939, %v1937, %v1934
        %v1941 = vadd.f32 %v1675, 1.0
        %v1942 = vlog2.pop %v1941
        %v1943 = vmul.f32 %v1942, 0.6931472
        %v1944 = vmul.f32 -0.5, %v1675
        %v1945 = vadd.f32 %v1944, 1.0
        %v1946 = vmul.f32 %v1945, %v1675
        %v1947 = vand.u32 2147483647, %v1675
        %vm1948 = vcmp.lt.f32.partialorder %v1947, 0.0004427343
        %v1949 = vsel %vm1948, %v1946, %v1943
        %v1950 = vadd.f32 %v1677, 1.0
        %v1951 = vlog2.pop %v1950
        %v1952 = vmul.f32 %v1951, 0.6931472
        %v1953 = vmul.f32 -0.5, %v1677
        %v1954 = vadd.f32 %v1953, 1.0
        %v1955 = vmul.f32 %v1954, %v1677
        %v1956 = vand.u32 2147483647, %v1677
        %vm1957 = vcmp.lt.f32.partialorder %v1956, 0.0004427343
        %v1958 = vsel %vm1957, %v1955, %v1952
        %v1959 = vadd.f32 %v1679, 1.0
        %v1960 = vlog2.pop %v1959
        %v1961 = vmul.f32 %v1960, 0.6931472
        %v1962 = vmul.f32 -0.5, %v1679
        %v1963 = vadd.f32 %v1962, 1.0
        %v1964 = vmul.f32 %v1963, %v1679
        %v1965 = vand.u32 2147483647, %v1679
        %vm1966 = vcmp.lt.f32.partialorder %v1965, 0.0004427343
        %v1967 = vsel %vm1966, %v1964, %v1961
        %v1968 = vsel %vm1584, %v1552, %v1688
        %v1969 = vsel %vm1585, %v1553, %v1697
        %v1970 = vsel %vm1586, %v1554, %v1706
        %v1971 = vsel %vm1587, %v1555, %v1715
        %v1972 = vsel %vm1588, %v1556, %v1724
        %v1973 = vsel %vm1589, %v1557, %v1733
        %v1974 = vsel %vm1590, %v1558, %v1742
        %v1975 = vsel %vm1591, %v1559, %v1751
        %v1976 = vsel %vm1592, %v1560, %v1760
        %v1977 = vsel %vm1593, %v1561, %v1769
        %v1978 = vsel %vm1594, %v1562, %v1778
        %v1979 = vsel %vm1595, %v1563, %v1787
        %v1980 = vsel %vm1596, %v1564, %v1796
        %v1981 = vsel %vm1597, %v1565, %v1805
        %v1982 = vsel %vm1598, %v1566, %v1814
        %v1983 = vsel %vm1599, %v1567, %v1823
        %v1984 = vsel %vm1600, %v1568, %v1832
        %v1985 = vsel %vm1601, %v1569, %v1841
        %v1986 = vsel %vm1602, %v1570, %v1850
        %v1987 = vsel %vm1603, %v1571, %v1859
        %v1988 = vsel %vm1604, %v1572, %v1868
        %v1989 = vsel %vm1605, %v1573, %v1877
        %v1990 = vsel %vm1606, %v1574, %v1886
        %v1991 = vsel %vm1607, %v1575, %v1895
        %v1992 = vsel %vm1608, %v1576, %v1904
        %v1993 = vsel %vm1609, %v1577, %v1913
        %v1994 = vsel %vm1610, %v1578, %v1922
        %v1995 = vsel %vm1611, %v1579, %v1931
        %v1996 = vsel %vm1612, %v1580, %v1940
        %v1997 = vsel %vm1613, %v1581, %v1949
        %v1998 = vsel %vm1614, %v1582, %v1958
        %v1999 = vsel %vm1615, %v1583, %v1967
        %v2000 = vrcp.pop %v1968
        %v2001 = vrcp.pop %v1969
        %v2002 = vrcp.pop %v1970
        %v2003 = vrcp.pop %v1971
        %v2004 = vrcp.pop %v1972
        %v2005 = vrcp.pop %v1973
        %v2006 = vrcp.pop %v1974
        %v2007 = vrcp.pop %v1975
        %v2008 = vrcp.pop %v1976
        %v2009 = vrcp.pop %v1977
        %v2010 = vrcp.pop %v1978
        %v2011 = vrcp.pop %v1979
        %v2012 = vrcp.pop %v1980
        %v2013 = vrcp.pop %v1981
        %v2014 = vrcp.pop %v1982
        %v2015 = vrcp.pop %v1983
        %v2016 = vrcp.pop %v1984
        %v2017 = vrcp.pop %v1985
        %v2018 = vrcp.pop %v1986
        %v2019 = vrcp.pop %v1987
        %v2020 = vrcp.pop %v1988
        %v2021 = vrcp.pop %v1989
        %v2022 = vrcp.pop %v1990
        %v2023 = vrcp.pop %v1991
        %v2024 = vrcp.pop %v1992
        %v2025 = vrcp.pop %v1993
        %v2026 = vrcp.pop %v1994
        %v2027 = vrcp.pop %v1995
        %v2028 = vrcp.pop %v1996
        %v2029 = vrcp.pop %v1997
        %v2030 = vrcp.pop %v1998
        %v2031 = vrcp.pop %v1999
        %v2032 = vmul.f32 %v1968, %v2000
        %v2033 = vmul.f32 %v1969, %v2001
        %v2034 = vmul.f32 %v1970, %v2002
        %v2035 = vmul.f32 %v1971, %v2003
        %v2036 = vmul.f32 %v1972, %v2004
        %v2037 = vmul.f32 %v1973, %v2005
        %v2038 = vmul.f32 %v1974, %v2006
        %v2039 = vmul.f32 %v1975, %v2007
        %v2040 = vmul.f32 %v1976, %v2008
        %v2041 = vmul.f32 %v1977, %v2009
        %v2042 = vmul.f32 %v1978, %v2010
        %v2043 = vmul.f32 %v1979, %v2011
        %v2044 = vmul.f32 %v1980, %v2012
        %v2045 = vmul.f32 %v1981, %v2013
        %v2046 = vmul.f32 %v1982, %v2014
        %v2047 = vmul.f32 %v1983, %v2015
        %v2048 = vmul.f32 %v1984, %v2016
        %v2049 = vmul.f32 %v1985, %v2017
        %v2050 = vmul.f32 %v1986, %v2018
        %v2051 = vmul.f32 %v1987, %v2019
        %v2052 = vmul.f32 %v1988, %v2020
        %v2053 = vmul.f32 %v1989, %v2021
        %v2054 = vmul.f32 %v1990, %v2022
        %v2055 = vmul.f32 %v1991, %v2023
        %v2056 = vmul.f32 %v1992, %v2024
        %v2057 = vmul.f32 %v1993, %v2025
        %v2058 = vmul.f32 %v1994, %v2026
        %v2059 = vmul.f32 %v1995, %v2027
        %v2060 = vmul.f32 %v1996, %v2028
        %v2061 = vmul.f32 %v1997, %v2029
        %v2062 = vmul.f32 %v1998, %v2030
        %v2063 = vmul.f32 %v1999, %v2031
        %v2064 = vsub.f32 2.0, %v2032
        %v2065 = vsub.f32 2.0, %v2033
        %v2066 = vsub.f32 2.0, %v2034
        %v2067 = vsub.f32 2.0, %v2035
        %v2068 = vsub.f32 2.0, %v2036
        %v2069 = vsub.f32 2.0, %v2037
        %v2070 = vsub.f32 2.0, %v2038
        %v2071 = vsub.f32 2.0, %v2039
        %v2072 = vsub.f32 2.0, %v2040
        %v2073 = vsub.f32 2.0, %v2041
        %v2074 = vsub.f32 2.0, %v2042
        %v2075 = vsub.f32 2.0, %v2043
        %v2076 = vsub.f32 2.0, %v2044
        %v2077 = vsub.f32 2.0, %v2045
        %v2078 = vsub.f32 2.0, %v2046
        %v2079 = vsub.f32 2.0, %v2047
        %v2080 = vsub.f32 2.0, %v2048
        %v2081 = vsub.f32 2.0, %v2049
        %v2082 = vsub.f32 2.0, %v2050
        %v2083 = vsub.f32 2.0, %v2051
        %v2084 = vsub.f32 2.0, %v2052
        %v2085 = vsub.f32 2.0, %v2053
        %v2086 = vsub.f32 2.0, %v2054
        %v2087 = vsub.f32 2.0, %v2055
        %v2088 = vsub.f32 2.0, %v2056
        %v2089 = vsub.f32 2.0, %v2057
        %v2090 = vsub.f32 2.0, %v2058
        %v2091 = vsub.f32 2.0, %v2059
        %v2092 = vsub.f32 2.0, %v2060
        %v2093 = vsub.f32 2.0, %v2061
        %v2094 = vsub.f32 2.0, %v2062
        %v2095 = vsub.f32 2.0, %v2063
        %v2096 = vmul.f32 %v2000, %v2064
        %v2097 = vmul.f32 %v2001, %v2065
        %v2098 = vmul.f32 %v2002, %v2066
        %v2099 = vmul.f32 %v2003, %v2067
        %v2100 = vmul.f32 %v2004, %v2068
        %v2101 = vmul.f32 %v2005, %v2069
        %v2102 = vmul.f32 %v2006, %v2070
        %v2103 = vmul.f32 %v2007, %v2071
        %v2104 = vmul.f32 %v2008, %v2072
        %v2105 = vmul.f32 %v2009, %v2073
        %v2106 = vmul.f32 %v2010, %v2074
        %v2107 = vmul.f32 %v2011, %v2075
        %v2108 = vmul.f32 %v2012, %v2076
        %v2109 = vmul.f32 %v2013, %v2077
        %v2110 = vmul.f32 %v2014, %v2078
        %v2111 = vmul.f32 %v2015, %v2079
        %v2112 = vmul.f32 %v2016, %v2080
        %v2113 = vmul.f32 %v2017, %v2081
        %v2114 = vmul.f32 %v2018, %v2082
        %v2115 = vmul.f32 %v2019, %v2083
        %v2116 = vmul.f32 %v2020, %v2084
        %v2117 = vmul.f32 %v2021, %v2085
        %v2118 = vmul.f32 %v2022, %v2086
        %v2119 = vmul.f32 %v2023, %v2087
        %v2120 = vmul.f32 %v2024, %v2088
        %v2121 = vmul.f32 %v2025, %v2089
        %v2122 = vmul.f32 %v2026, %v2090
        %v2123 = vmul.f32 %v2027, %v2091
        %v2124 = vmul.f32 %v2028, %v2092
        %v2125 = vmul.f32 %v2029, %v2093
        %v2126 = vmul.f32 %v2030, %v2094
        %v2127 = vmul.f32 %v2031, %v2095
        %v2128 = vld [vmem:[%s1028] sm:$0xff]
        %v2129 = vld [vmem:[%s1028 + $0x8] sm:$0xff]
        %v2130 = vld [vmem:[%s1028 + $0x10] sm:$0xff]
        %v2131 = vld [vmem:[%s1028 + $0x18] sm:$0xff]
        %v2132 = vld [vmem:[%s1028 + $0x20] sm:$0xff]
        %v2133 = vld [vmem:[%s1028 + $0x28] sm:$0xff]
        %v2134 = vld [vmem:[%s1028 + $0x30] sm:$0xff]
        %v2135 = vld [vmem:[%s1028 + $0x38] sm:$0xff]
        %v2136 = vld [vmem:[%s1028 + $0x40] sm:$0xff]
        %v2137 = vld [vmem:[%s1028 + $0x48] sm:$0xff]
        %v2138 = vld [vmem:[%s1028 + $0x50] sm:$0xff]
        %v2139 = vld [vmem:[%s1028 + $0x58] sm:$0xff]
        %v2140 = vld [vmem:[%s1028 + $0x60] sm:$0xff]
        %v2141 = vld [vmem:[%s1028 + $0x68] sm:$0xff]
        %v2142 = vld [vmem:[%s1028 + $0x70] sm:$0xff]
        %v2143 = vld [vmem:[%s1028 + $0x78] sm:$0xff]
        %v2144 = vld [vmem:[%s1028 + $0x80] sm:$0xff]
        %v2145 = vld [vmem:[%s1028 + $0x88] sm:$0xff]
        %v2146 = vld [vmem:[%s1028 + $0x90] sm:$0xff]
        %v2147 = vld [vmem:[%s1028 + $0x98] sm:$0xff]
        %v2148 = vld [vmem:[%s1028 + $0xa0] sm:$0xff]
        %v2149 = vld [vmem:[%s1028 + $0xa8] sm:$0xff]
        %v2150 = vld [vmem:[%s1028 + $0xb0] sm:$0xff]
        %v2151 = vld [vmem:[%s1028 + $0xb8] sm:$0xff]
        %v2152 = vld [vmem:[%s1028 + $0xc0] sm:$0xff]
        %v2153 = vld [vmem:[%s1028 + $0xc8] sm:$0xff]
        %v2154 = vld [vmem:[%s1028 + $0xd0] sm:$0xff]
        %v2155 = vld [vmem:[%s1028 + $0xd8] sm:$0xff]
        %v2156 = vld [vmem:[%s1028 + $0xe0] sm:$0xff]
        %v2157 = vld [vmem:[%s1028 + $0xe8] sm:$0xff]
        %v2158 = vld [vmem:[%s1028 + $0xf0] sm:$0xff]
        %v2159 = vld [vmem:[%s1028 + $0xf8] sm:$0xff]
        %v2160 = vld [vmem:[%s1111] sm:$0x3]
        %v2162 = vlaneseq
        %v2163 = vshrl.u32 %v2162, 7
        %v2164 = vsub.s32 0, %v2163
        %v2165 = vrot.slane %v2160, %v2164
        %v2166 = vlaneseq
        %v2167 = vshrl.u32 %v2166, 7
        %v2168 = vsub.s32 1, %v2167
        %v2169 = vrot.slane %v2160, %v2168
        %v2172 = vmul.f32 %v2128, %v2165
        %v2173 = vmul.f32 %v2129, %v2169
        %v2174 = vmul.f32 %v2130, %v2165
        %v2175 = vmul.f32 %v2131, %v2169
        %v2176 = vmul.f32 %v2132, %v2165
        %v2177 = vmul.f32 %v2133, %v2169
        %v2178 = vmul.f32 %v2134, %v2165
        %v2179 = vmul.f32 %v2135, %v2169
        %v2180 = vmul.f32 %v2136, %v2165
        %v2181 = vmul.f32 %v2137, %v2169
        %v2182 = vmul.f32 %v2138, %v2165
        %v2183 = vmul.f32 %v2139, %v2169
        %v2184 = vmul.f32 %v2140, %v2165
        %v2185 = vmul.f32 %v2141, %v2169
        %v2186 = vmul.f32 %v2142, %v2165
        %v2187 = vmul.f32 %v2143, %v2169
        %v2188 = vmul.f32 %v2144, %v2165
        %v2189 = vmul.f32 %v2145, %v2169
        %v2190 = vmul.f32 %v2146, %v2165
        %v2191 = vmul.f32 %v2147, %v2169
        %v2192 = vmul.f32 %v2148, %v2165
        %v2193 = vmul.f32 %v2149, %v2169
        %v2194 = vmul.f32 %v2150, %v2165
        %v2195 = vmul.f32 %v2151, %v2169
        %v2196 = vmul.f32 %v2152, %v2165
        %v2197 = vmul.f32 %v2153, %v2169
        %v2198 = vmul.f32 %v2154, %v2165
        %v2199 = vmul.f32 %v2155, %v2169
        %v2200 = vmul.f32 %v2156, %v2165
        %v2201 = vmul.f32 %v2157, %v2169
        %v2202 = vmul.f32 %v2158, %v2165
        %v2203 = vmul.f32 %v2159, %v2169
        %v2204 = vmul.f32 %v2096, %v2096
        %v2205 = vmul.f32 %v2097, %v2097
        %v2206 = vmul.f32 %v2098, %v2098
        %v2207 = vmul.f32 %v2099, %v2099
        %v2208 = vmul.f32 %v2100, %v2100
        %v2209 = vmul.f32 %v2101, %v2101
        %v2210 = vmul.f32 %v2102, %v2102
        %v2211 = vmul.f32 %v2103, %v2103
        %v2212 = vmul.f32 %v2104, %v2104
        %v2213 = vmul.f32 %v2105, %v2105
        %v2214 = vmul.f32 %v2106, %v2106
        %v2215 = vmul.f32 %v2107, %v2107
        %v2216 = vmul.f32 %v2108, %v2108
        %v2217 = vmul.f32 %v2109, %v2109
        %v2218 = vmul.f32 %v2110, %v2110
        %v2219 = vmul.f32 %v2111, %v2111
        %v2220 = vmul.f32 %v2112, %v2112
        %v2221 = vmul.f32 %v2113, %v2113
        %v2222 = vmul.f32 %v2114, %v2114
        %v2223 = vmul.f32 %v2115, %v2115
        %v2224 = vmul.f32 %v2116, %v2116
        %v2225 = vmul.f32 %v2117, %v2117
        %v2226 = vmul.f32 %v2118, %v2118
        %v2227 = vmul.f32 %v2119, %v2119
        %v2228 = vmul.f32 %v2120, %v2120
        %v2229 = vmul.f32 %v2121, %v2121
        %v2230 = vmul.f32 %v2122, %v2122
        %v2231 = vmul.f32 %v2123, %v2123
        %v2232 = vmul.f32 %v2124, %v2124
        %v2233 = vmul.f32 %v2125, %v2125
        %v2234 = vmul.f32 %v2126, %v2126
        %v2235 = vmul.f32 %v2127, %v2127
        %v2236 = vsub.f32 %v2204, %v2096
        %v2237 = vsub.f32 %v2205, %v2097
        %v2238 = vsub.f32 %v2206, %v2098
        %v2239 = vsub.f32 %v2207, %v2099
        %v2240 = vsub.f32 %v2208, %v2100
        %v2241 = vsub.f32 %v2209, %v2101
        %v2242 = vsub.f32 %v2210, %v2102
        %v2243 = vsub.f32 %v2211, %v2103
        %v2244 = vsub.f32 %v2212, %v2104
        %v2245 = vsub.f32 %v2213, %v2105
        %v2246 = vsub.f32 %v2214, %v2106
        %v2247 = vsub.f32 %v2215, %v2107
        %v2248 = vsub.f32 %v2216, %v2108
        %v2249 = vsub.f32 %v2217, %v2109
        %v2250 = vsub.f32 %v2218, %v2110
        %v2251 = vsub.f32 %v2219, %v2111
        %v2252 = vsub.f32 %v2220, %v2112
        %v2253 = vsub.f32 %v2221, %v2113
        %v2254 = vsub.f32 %v2222, %v2114
        %v2255 = vsub.f32 %v2223, %v2115
        %v2256 = vsub.f32 %v2224, %v2116
        %v2257 = vsub.f32 %v2225, %v2117
        %v2258 = vsub.f32 %v2226, %v2118
        %v2259 = vsub.f32 %v2227, %v2119
        %v2260 = vsub.f32 %v2228, %v2120
        %v2261 = vsub.f32 %v2229, %v2121
        %v2262 = vsub.f32 %v2230, %v2122
        %v2263 = vsub.f32 %v2231, %v2123
        %v2264 = vsub.f32 %v2232, %v2124
        %v2265 = vsub.f32 %v2233, %v2125
        %v2266 = vsub.f32 %v2234, %v2126
        %v2267 = vsub.f32 %v2235, %v2127
        %v2268 = vmul.f32 %v2172, %v2236
        %v2269 = vmul.f32 %v2173, %v2237
        %v2270 = vmul.f32 %v2174, %v2238
        %v2271 = vmul.f32 %v2175, %v2239
        %v2272 = vmul.f32 %v2176, %v2240
        %v2273 = vmul.f32 %v2177, %v2241
        %v2274 = vmul.f32 %v2178, %v2242
        %v2275 = vmul.f32 %v2179, %v2243
        %v2276 = vmul.f32 %v2180, %v2244
        %v2277 = vmul.f32 %v2181, %v2245
        %v2278 = vmul.f32 %v2182, %v2246
        %v2279 = vmul.f32 %v2183, %v2247
        %v2280 = vmul.f32 %v2184, %v2248
        %v2281 = vmul.f32 %v2185, %v2249
        %v2282 = vmul.f32 %v2186, %v2250
        %v2283 = vmul.f32 %v2187, %v2251
        %v2284 = vmul.f32 %v2188, %v2252
        %v2285 = vmul.f32 %v2189, %v2253
        %v2286 = vmul.f32 %v2190, %v2254
        %v2287 = vmul.f32 %v2191, %v2255
        %v2288 = vmul.f32 %v2192, %v2256
        %v2289 = vmul.f32 %v2193, %v2257
        %v2290 = vmul.f32 %v2194, %v2258
        %v2291 = vmul.f32 %v2195, %v2259
        %v2292 = vmul.f32 %v2196, %v2260
        %v2293 = vmul.f32 %v2197, %v2261
        %v2294 = vmul.f32 %v2198, %v2262
        %v2295 = vmul.f32 %v2199, %v2263
        %v2296 = vmul.f32 %v2200, %v2264
        %v2297 = vmul.f32 %v2201, %v2265
        %v2298 = vmul.f32 %v2202, %v2266
        %v2299 = vmul.f32 %v2203, %v2267
        %s2300 = smul.u32 %s22, 128
        %s2301 = smul.u32 %s23, 256
        %s2302 = sadd.s32 %s2301, 256
        %p2303 = scmp.lt.s32.totalorder %s2300, %s2302
        %s2304 = sadd.s32 %s2300, 128
        %p2305 = scmp.lt.s32.totalorder %s2301, %s2304
        %p2306 = pnand %p2303, %p2305
        %p2307 = pneg %p2306
        %p2308 = scmp.gt.s32.totalorder %s2302, 320
        %p2309 = por %p2307, %p2308
        // Predicated region
        $region170: #{tpu_custom_call.1} parent=156 // pred_check
          %p2310 = pneg %p2309
        $region171: #{tpu_custom_call.1} parent=156 // pred_check_branch
          %2312 = sbr.rel (%p2310) target = $region173
        $region172: #{tpu_custom_call.1} parent=156 // pred_region
          %v2313 = vlaneseq
          %v2314 = vshrl.u32 %v2313, 7
          %v2315 = vadd.s32 %v2314, 8
          %v2316 = vadd.s32 %v2314, 16
          %v2317 = vadd.s32 %v2314, 24
          %v2318 = vadd.s32 %v2314, 32
          %v2319 = vadd.s32 %v2314, 40
          %v2320 = vadd.s32 %v2314, 48
          %v2321 = vadd.s32 %v2314, 56
          %v2322 = vadd.s32 %v2314, 64
          %v2323 = vadd.s32 %v2314, 72
          %v2324 = vadd.s32 %v2314, 80
          %v2325 = vadd.s32 %v2314, 88
          %v2326 = vadd.s32 %v2314, 96
          %v2327 = vadd.s32 %v2314, 104
          %v2328 = vadd.s32 %v2314, 112
          %v2329 = vadd.s32 %v2314, 120
          %v2330 = vstv %s2300
          %v2331 = vadd.s32 %v2330, %v2314
          %v2332 = vadd.s32 %v2330, %v2315
          %v2333 = vadd.s32 %v2330, %v2316
          %v2334 = vadd.s32 %v2330, %v2317
          %v2335 = vadd.s32 %v2330, %v2318
          %v2336 = vadd.s32 %v2330, %v2319
          %v2337 = vadd.s32 %v2330, %v2320
          %v2338 = vadd.s32 %v2330, %v2321
          %v2339 = vadd.s32 %v2330, %v2322
          %v2340 = vadd.s32 %v2330, %v2323
          %v2341 = vadd.s32 %v2330, %v2324
          %v2342 = vadd.s32 %v2330, %v2325
          %v2343 = vadd.s32 %v2330, %v2326
          %v2344 = vadd.s32 %v2330, %v2327
          %v2345 = vadd.s32 %v2330, %v2328
          %v2346 = vadd.s32 %v2330, %v2329
          %v2347 = vlaneseq
          %v2348 = vand.u32 %v2347, 127
          %v2349 = vadd.s32 %v2348, 128
          %v2350 = vstv %s2301
          %v2351 = vadd.s32 %v2350, %v2348
          %v2352 = vadd.s32 %v2350, %v2349
          %vm2353 = vcmp.lt.s32.totalorder %v2351, 320
          %vm2354 = vcmp.lt.s32.totalorder %v2352, 320
          %vm2355 = vcmp.ne.s32.totalorder %v2331, %v2351
          %vm2356 = vcmp.ne.s32.totalorder %v2331, %v2352
          %vm2357 = vcmp.ne.s32.totalorder %v2332, %v2351
          %vm2358 = vcmp.ne.s32.totalorder %v2332, %v2352
          %vm2359 = vcmp.ne.s32.totalorder %v2333, %v2351
          %vm2360 = vcmp.ne.s32.totalorder %v2333, %v2352
          %vm2361 = vcmp.ne.s32.totalorder %v2334, %v2351
          %vm2362 = vcmp.ne.s32.totalorder %v2334, %v2352
          %vm2363 = vcmp.ne.s32.totalorder %v2335, %v2351
          %vm2364 = vcmp.ne.s32.totalorder %v2335, %v2352
          %vm2365 = vcmp.ne.s32.totalorder %v2336, %v2351
          %vm2366 = vcmp.ne.s32.totalorder %v2336, %v2352
          %vm2367 = vcmp.ne.s32.totalorder %v2337, %v2351
          %vm2368 = vcmp.ne.s32.totalorder %v2337, %v2352
          %vm2369 = vcmp.ne.s32.totalorder %v2338, %v2351
          %vm2370 = vcmp.ne.s32.totalorder %v2338, %v2352
          %vm2371 = vcmp.ne.s32.totalorder %v2339, %v2351
          %vm2372 = vcmp.ne.s32.totalorder %v2339, %v2352
          %vm2373 = vcmp.ne.s32.totalorder %v2340, %v2351
          %vm2374 = vcmp.ne.s32.totalorder %v2340, %v2352
          %vm2375 = vcmp.ne.s32.totalorder %v2341, %v2351
          %vm2376 = vcmp.ne.s32.totalorder %v2341, %v2352
          %vm2377 = vcmp.ne.s32.totalorder %v2342, %v2351
          %vm2378 = vcmp.ne.s32.totalorder %v2342, %v2352
          %vm2379 = vcmp.ne.s32.totalorder %v2343, %v2351
          %vm2380 = vcmp.ne.s32.totalorder %v2343, %v2352
          %vm2381 = vcmp.ne.s32.totalorder %v2344, %v2351
          %vm2382 = vcmp.ne.s32.totalorder %v2344, %v2352
          %vm2383 = vcmp.ne.s32.totalorder %v2345, %v2351
          %vm2384 = vcmp.ne.s32.totalorder %v2345, %v2352
          %vm2385 = vcmp.ne.s32.totalorder %v2346, %v2351
          %vm2386 = vcmp.ne.s32.totalorder %v2346, %v2352
          %vm2387 = vmand %vm2353, %vm2355
          %vm2388 = vmand %vm2354, %vm2356
          %vm2389 = vmand %vm2353, %vm2357
          %vm2390 = vmand %vm2354, %vm2358
          %vm2391 = vmand %vm2353, %vm2359
          %vm2392 = vmand %vm2354, %vm2360
          %vm2393 = vmand %vm2353, %vm2361
          %vm2394 = vmand %vm2354, %vm2362
          %vm2395 = vmand %vm2353, %vm2363
          %vm2396 = vmand %vm2354, %vm2364
          %vm2397 = vmand %vm2353, %vm2365
          %vm2398 = vmand %vm2354, %vm2366
          %vm2399 = vmand %vm2353, %vm2367
          %vm2400 = vmand %vm2354, %vm2368
          %vm2401 = vmand %vm2353, %vm2369
          %vm2402 = vmand %vm2354, %vm2370
          %vm2403 = vmand %vm2353, %vm2371
          %vm2404 = vmand %vm2354, %vm2372
          %vm2405 = vmand %vm2353, %vm2373
          %vm2406 = vmand %vm2354, %vm2374
          %vm2407 = vmand %vm2353, %vm2375
          %vm2408 = vmand %vm2354, %vm2376
          %vm2409 = vmand %vm2353, %vm2377
          %vm2410 = vmand %vm2354, %vm2378
          %vm2411 = vmand %vm2353, %vm2379
          %vm2412 = vmand %vm2354, %vm2380
          %vm2413 = vmand %vm2353, %vm2381
          %vm2414 = vmand %vm2354, %vm2382
          %vm2415 = vmand %vm2353, %vm2383
          %vm2416 = vmand %vm2354, %vm2384
          %vm2417 = vmand %vm2353, %vm2385
          %vm2418 = vmand %vm2354, %vm2386
          %v2419 = vsel %vm2387, %v2268, 0.0
          %v2420 = vsel %vm2388, %v2269, 0.0
          %v2421 = vsel %vm2389, %v2270, 0.0
          %v2422 = vsel %vm2390, %v2271, 0.0
          %v2423 = vsel %vm2391, %v2272, 0.0
          %v2424 = vsel %vm2392, %v2273, 0.0
          %v2425 = vsel %vm2393, %v2274, 0.0
          %v2426 = vsel %vm2394, %v2275, 0.0
          %v2427 = vsel %vm2395, %v2276, 0.0
          %v2428 = vsel %vm2396, %v2277, 0.0
          %v2429 = vsel %vm2397, %v2278, 0.0
          %v2430 = vsel %vm2398, %v2279, 0.0
          %v2431 = vsel %vm2399, %v2280, 0.0
          %v2432 = vsel %vm2400, %v2281, 0.0
          %v2433 = vsel %vm2401, %v2282, 0.0
          %v2434 = vsel %vm2402, %v2283, 0.0
          %v2435 = vsel %vm2403, %v2284, 0.0
          %v2436 = vsel %vm2404, %v2285, 0.0
          %v2437 = vsel %vm2405, %v2286, 0.0
          %v2438 = vsel %vm2406, %v2287, 0.0
          %v2439 = vsel %vm2407, %v2288, 0.0
          %v2440 = vsel %vm2408, %v2289, 0.0
          %v2441 = vsel %vm2409, %v2290, 0.0
          %v2442 = vsel %vm2410, %v2291, 0.0
          %v2443 = vsel %vm2411, %v2292, 0.0
          %v2444 = vsel %vm2412, %v2293, 0.0
          %v2445 = vsel %vm2413, %v2294, 0.0
          %v2446 = vsel %vm2414, %v2295, 0.0
          %v2447 = vsel %vm2415, %v2296, 0.0
          %v2448 = vsel %vm2416, %v2297, 0.0
          %v2449 = vsel %vm2417, %v2298, 0.0
          %v2450 = vsel %vm2418, %v2299, 0.0
          %v2451 = vld [vmem:[%s1127] sm:$0xff]
          %v2452 = vld [vmem:[%s1127 + $0x8] sm:$0xff]
          %v2453 = vld [vmem:[%s1127 + $0x10] sm:$0xff]
          %v2454 = vld [vmem:[%s1127 + $0x18] sm:$0xff]
          %v2455 = vld [vmem:[%s1127 + $0x20] sm:$0xff]
          %v2456 = vld [vmem:[%s1127 + $0x28] sm:$0xff]
          %v2457 = vld [vmem:[%s1127 + $0x30] sm:$0xff]
          %v2458 = vld [vmem:[%s1127 + $0x38] sm:$0xff]
          %v2459 = vld [vmem:[%s1127 + $0x40] sm:$0xff]
          %v2460 = vld [vmem:[%s1127 + $0x48] sm:$0xff]
          %v2461 = vld [vmem:[%s1127 + $0x50] sm:$0xff]
          %v2462 = vld [vmem:[%s1127 + $0x58] sm:$0xff]
          %v2463 = vld [vmem:[%s1127 + $0x60] sm:$0xff]
          %v2464 = vld [vmem:[%s1127 + $0x68] sm:$0xff]
          %v2465 = vld [vmem:[%s1127 + $0x70] sm:$0xff]
          %v2466 = vld [vmem:[%s1127 + $0x78] sm:$0xff]
          %2467 = vmatprep.subr.mxu0 0.0
          %2468 = vmatpush1.msra.mxu0 1.0
          %2469 = vmatprep.subr.mxu0 0.0
          %2470 = vmatpush1.msra.mxu0 1.0
          %2471 = vmatprep.subr.mxu0 0.0
          %2472 = vmatpush1.msra.mxu0 1.0
          %2473 = vmatprep.subr.mxu0 0.0
          %2474 = vmatpush1.msra.mxu0 1.0
          %2475 = vmatprep.subr.mxu0 0.0
          %2476 = vmatpush1.msra.mxu0 1.0
          %2477 = vmatprep.subr.mxu0 0.0
          %2478 = vmatpush1.msra.mxu0 1.0
          %2479 = vmatprep.subr.mxu0 0.0
          %2480 = vmatpush1.msra.mxu0 1.0
          %2481 = vmatprep.subr.mxu0 0.0
          %2482 = vmatpush1.msra.mxu0 1.0
          %2483 = vmatprep.subr.mxu0 0.0
          %2484 = vmatpush1.msra.mxu0 1.0
          %2485 = vmatprep.subr.mxu0 0.0
          %2486 = vmatpush1.msra.mxu0 1.0
          %2487 = vmatprep.subr.mxu0 0.0
          %2488 = vmatpush1.msra.mxu0 1.0
          %2489 = vmatprep.subr.mxu0 0.0
          %2490 = vmatpush1.msra.mxu0 1.0
          %2491 = vmatprep.subr.mxu0 0.0
          %2492 = vmatpush1.msra.mxu0 1.0
          %2493 = vmatprep.subr.mxu0 0.0
          %2494 = vmatpush1.msra.mxu0 1.0
          %2495 = vmatprep.subr.mxu0 0.0
          %2496 = vmatpush1.msra.mxu0 1.0
          %2497 = vmatprep.subr.mxu0 0.0
          %2498 = vmatpush1.msra.mxu0 1.0
          %2499 = vmatprep.subr.mxu0 0.0
          %2500 = vmatpush1.msra.mxu0 1.0
          %2501 = vmatprep.subr.mxu0 0.0
          %2502 = vmatpush1.msra.mxu0 1.0
          %2503 = vmatprep.subr.mxu0 0.0
          %2504 = vmatpush1.msra.mxu0 1.0
          %2505 = vmatprep.subr.mxu0 0.0
          %2506 = vmatpush1.msra.mxu0 1.0
          %2507 = vmatprep.subr.mxu0 0.0
          %2508 = vmatpush1.msra.mxu0 1.0
          %2509 = vmatprep.subr.mxu0 0.0
          %2510 = vmatpush1.msra.mxu0 1.0
          %2511 = vmatprep.subr.mxu0 0.0
          %2512 = vmatpush1.msra.mxu0 1.0
          %2513 = vmatprep.subr.mxu0 0.0
          %2514 = vmatpush1.msra.mxu0 1.0
          %2515 = vmatprep.subr.mxu0 0.0
          %2516 = vmatpush1.msra.mxu0 1.0
          %2517 = vmatprep.subr.mxu0 0.0
          %2518 = vmatpush1.msra.mxu0 1.0
          %2519 = vmatprep.subr.mxu0 0.0
          %2520 = vmatpush1.msra.mxu0 1.0
          %2521 = vmatprep.subr.mxu0 0.0
          %2522 = vmatpush1.msra.mxu0 1.0
          %2523 = vmatprep.subr.mxu0 0.0
          %2524 = vmatpush1.msra.mxu0 1.0
          %2525 = vmatprep.subr.mxu0 0.0
          %2526 = vmatpush1.msra.mxu0 1.0
          %2527 = vmatprep.subr.mxu0 0.0
          %2528 = vmatpush1.msra.mxu0 1.0
          %2529 = vmatprep.subr.mxu0 0.0
          %2530 = vmatpush1.msra.mxu0 1.0
          %2531 = vmatprep.mubr.f32.mxu0 %v2420
          %2532 = vmatmul.mubr.f32.gmra.mrb[0].mxu0 %v2419
          %v2533 = vpop.f32.mrb[0].mxu0
          %v2534 = vadd.f32 0.0, %v2533
          %v2535 = vpop.f32.mrb[0].mxu0
          %2536 = vmatprep.mubr.f32.mxu0 %v2422
          %2537 = vmatmul.mubr.f32.gmra.mrb[0].mxu0 %v2421
          %v2538 = vpop.f32.mrb[0].mxu0
          %v2539 = vadd.f32 0.0, %v2538
          %v2540 = vpop.f32.mrb[0].mxu0
          %2541 = vmatprep.mubr.f32.mxu0 %v2424
          %2542 = vmatmul.mubr.f32.gmra.mrb[0].mxu0 %v2423
          %v2543 = vpop.f32.mrb[0].mxu0
          %v2544 = vadd.f32 0.0, %v2543
          %v2545 = vpop.f32.mrb[0].mxu0
          %2546 = vmatprep.mubr.f32.mxu0 %v2426
          %2547 = vmatmul.mubr.f32.gmra.mrb[0].mxu0 %v2425
          %v2548 = vpop.f32.mrb[0].mxu0
          %v2549 = vadd.f32 0.0, %v2548
          %v2550 = vpop.f32.mrb[0].mxu0
          %2551 = vmatprep.mubr.f32.mxu0 %v2428
          %2552 = vmatmul.mubr.f32.gmra.mrb[0].mxu0 %v2427
          %v2553 = vpop.f32.mrb[0].mxu0
          %v2554 = vadd.f32 0.0, %v2553
          %v2555 = vpop.f32.mrb[0].mxu0
          %2556 = vmatprep.mubr.f32.mxu0 %v2430
          %2557 = vmatmul.mubr.f32.gmra.mrb[0].mxu0 %v2429
          %v2558 = vpop.f32.mrb[0].mxu0
          %v2559 = vadd.f32 0.0, %v2558
          %v2560 = vpop.f32.mrb[0].mxu0
          %2561 = vmatprep.mubr.f32.mxu0 %v2432
          %2562 = vmatmul.mubr.f32.gmra.mrb[0].mxu0 %v2431
          %v2563 = vpop.f32.mrb[0].mxu0
          %v2564 = vadd.f32 0.0, %v2563
          %v2565 = vpop.f32.mrb[0].mxu0
          %2566 = vmatprep.mubr.f32.mxu0 %v2434
          %2567 = vmatmul.mubr.f32.gmra.mrb[0].mxu0 %v2433
          %v2568 = vpop.f32.mrb[0].mxu0
          %v2569 = vadd.f32 0.0, %v2568
          %v2570 = vpop.f32.mrb[0].mxu0
          %2571 = vmatprep.mubr.f32.mxu0 %v2436
          %2572 = vmatmul.mubr.f32.gmra.mrb[0].mxu0 %v2435
          %v2573 = vpop.f32.mrb[0].mxu0
          %v2574 = vadd.f32 0.0, %v2573
          %v2575 = vpop.f32.mrb[0].mxu0
          %2576 = vmatprep.mubr.f32.mxu0 %v2438
          %2577 = vmatmul.mubr.f32.gmra.mrb[0].mxu0 %v2437
          %v2578 = vpop.f32.mrb[0].mxu0
          %v2579 = vadd.f32 0.0, %v2578
          %v2580 = vpop.f32.mrb[0].mxu0
          %2581 = vmatprep.mubr.f32.mxu0 %v2440
          %2582 = vmatmul.mubr.f32.gmra.mrb[0].mxu0 %v2439
          %v2583 = vpop.f32.mrb[0].mxu0
          %v2584 = vadd.f32 0.0, %v2583
          %v2585 = vpop.f32.mrb[0].mxu0
          %2586 = vmatprep.mubr.f32.mxu0 %v2442
          %2587 = vmatmul.mubr.f32.gmra.mrb[0].mxu0 %v2441
          %v2588 = vpop.f32.mrb[0].mxu0
          %v2589 = vadd.f32 0.0, %v2588
          %v2590 = vpop.f32.mrb[0].mxu0
          %2591 = vmatprep.mubr.f32.mxu0 %v2444
          %2592 = vmatmul.mubr.f32.gmra.mrb[0].mxu0 %v2443
          %v2593 = vpop.f32.mrb[0].mxu0
          %v2594 = vadd.f32 0.0, %v2593
          %v2595 = vpop.f32.mrb[0].mxu0
          %2596 = vmatprep.mubr.f32.mxu0 %v2446
          %2597 = vmatmul.mubr.f32.gmra.mrb[0].mxu0 %v2445
          %v2598 = vpop.f32.mrb[0].mxu0
          %v2599 = vadd.f32 0.0, %v2598
          %v2600 = vpop.f32.mrb[0].mxu0
          %2601 = vmatprep.mubr.f32.mxu0 %v2448
          %2602 = vmatmul.mubr.f32.gmra.mrb[0].mxu0 %v2447
          %v2603 = vpop.f32.mrb[0].mxu0
          %v2604 = vadd.f32 0.0, %v2603
          %v2605 = vpop.f32.mrb[0].mxu0
          %2606 = vmatprep.mubr.f32.mxu0 %v2450
          %2607 = vmatmul.mubr.f32.gmra.mrb[0].mxu0 %v2449
          %v2608 = vpop.f32.mrb[0].mxu0
          %v2609 = vadd.f32 0.0, %v2608
          %v2610 = vpop.f32.mrb[0].mxu0
          %2611 = vdwg.mxu0
          %v2612 = vadd.f32 %v2451, %v2534
          %v2613 = vadd.f32 %v2452, %v2539
          %v2614 = vadd.f32 %v2453, %v2544
          %v2615 = vadd.f32 %v2454, %v2549
          %v2616 = vadd.f32 %v2455, %v2554
          %v2617 = vadd.f32 %v2456, %v2559
          %v2618 = vadd.f32 %v2457, %v2564
          %v2619 = vadd.f32 %v2458, %v2569
          %v2620 = vadd.f32 %v2459, %v2574
          %v2621 = vadd.f32 %v2460, %v2579
          %v2622 = vadd.f32 %v2461, %v2584
          %v2623 = vadd.f32 %v2462, %v2589
          %v2624 = vadd.f32 %v2463, %v2594
          %v2625 = vadd.f32 %v2464, %v2599
          %v2626 = vadd.f32 %v2465, %v2604
          %v2627 = vadd.f32 %v2466, %v2609
          %vm2628 = vcmask 7168
          %2629 = vst.msk [vmem:[%s1127] sm:$0xff] %vm2628, %v2612
          %2630 = vst.msk [vmem:[%s1127 + $0x8] sm:$0xff] %vm2628, %v2613
          %2631 = vst.msk [vmem:[%s1127 + $0x10] sm:$0xff] %vm2628, %v2614
          %2632 = vst.msk [vmem:[%s1127 + $0x18] sm:$0xff] %vm2628, %v2615
          %2633 = vst.msk [vmem:[%s1127 + $0x20] sm:$0xff] %vm2628, %v2616
          %2634 = vst.msk [vmem:[%s1127 + $0x28] sm:$0xff] %vm2628, %v2617
          %2635 = vst.msk [vmem:[%s1127 + $0x30] sm:$0xff] %vm2628, %v2618
          %2636 = vst.msk [vmem:[%s1127 + $0x38] sm:$0xff] %vm2628, %v2619
          %2637 = vst.msk [vmem:[%s1127 + $0x40] sm:$0xff] %vm2628, %v2620
          %2638 = vst.msk [vmem:[%s1127 + $0x48] sm:$0xff] %vm2628, %v2621
          %2639 = vst.msk [vmem:[%s1127 + $0x50] sm:$0xff] %vm2628, %v2622
          %2640 = vst.msk [vmem:[%s1127 + $0x58] sm:$0xff] %vm2628, %v2623
          %2641 = vst.msk [vmem:[%s1127 + $0x60] sm:$0xff] %vm2628, %v2624
          %2642 = vst.msk [vmem:[%s1127 + $0x68] sm:$0xff] %vm2628, %v2625
          %2643 = vst.msk [vmem:[%s1127 + $0x70] sm:$0xff] %vm2628, %v2626
          %2644 = vst.msk [vmem:[%s1127 + $0x78] sm:$0xff] %vm2628, %v2627
        $region173: #{tpu_custom_call.1} parent=156 // pred_fallthru
          _
        %p2645 = pneg %p2309
        // Predicated region
        $region174: #{tpu_custom_call.1} parent=156 // pred_check
          _
        $region175: #{tpu_custom_call.1} parent=156 // pred_check_branch
          %2647 = sbr.rel (%p2309) target = $region177
        $region176: #{tpu_custom_call.1} parent=156 // pred_region
          %v2648 = vld [vmem:[%s1127] sm:$0xff]
          %v2649 = vld [vmem:[%s1127 + $0x8] sm:$0xff]
          %v2650 = vld [vmem:[%s1127 + $0x10] sm:$0xff]
          %v2651 = vld [vmem:[%s1127 + $0x18] sm:$0xff]
          %v2652 = vld [vmem:[%s1127 + $0x20] sm:$0xff]
          %v2653 = vld [vmem:[%s1127 + $0x28] sm:$0xff]
          %v2654 = vld [vmem:[%s1127 + $0x30] sm:$0xff]
          %v2655 = vld [vmem:[%s1127 + $0x38] sm:$0xff]
          %v2656 = vld [vmem:[%s1127 + $0x40] sm:$0xff]
          %v2657 = vld [vmem:[%s1127 + $0x48] sm:$0xff]
          %v2658 = vld [vmem:[%s1127 + $0x50] sm:$0xff]
          %v2659 = vld [vmem:[%s1127 + $0x58] sm:$0xff]
          %v2660 = vld [vmem:[%s1127 + $0x60] sm:$0xff]
          %v2661 = vld [vmem:[%s1127 + $0x68] sm:$0xff]
          %v2662 = vld [vmem:[%s1127 + $0x70] sm:$0xff]
          %v2663 = vld [vmem:[%s1127 + $0x78] sm:$0xff]
          %2664 = vmatprep.subr.mxu0 0.0
          %2665 = vmatpush1.msra.mxu0 1.0
          %2666 = vmatprep.subr.mxu0 0.0
          %2667 = vmatpush1.msra.mxu0 1.0
          %2668 = vmatprep.subr.mxu0 0.0
          %2669 = vmatpush1.msra.mxu0 1.0
          %2670 = vmatprep.subr.mxu0 0.0
          %2671 = vmatpush1.msra.mxu0 1.0
          %2672 = vmatprep.subr.mxu0 0.0
          %2673 = vmatpush1.msra.mxu0 1.0
          %2674 = vmatprep.subr.mxu0 0.0
          %2675 = vmatpush1.msra.mxu0 1.0
          %2676 = vmatprep.subr.mxu0 0.0
          %2677 = vmatpush1.msra.mxu0 1.0
          %2678 = vmatprep.subr.mxu0 0.0
          %2679 = vmatpush1.msra.mxu0 1.0
          %2680 = vmatprep.subr.mxu0 0.0
          %2681 = vmatpush1.msra.mxu0 1.0
          %2682 = vmatprep.subr.mxu0 0.0
          %2683 = vmatpush1.msra.mxu0 1.0
          %2684 = vmatprep.subr.mxu0 0.0
          %2685 = vmatpush1.msra.mxu0 1.0
          %2686 = vmatprep.subr.mxu0 0.0
          %2687 = vmatpush1.msra.mxu0 1.0
          %2688 = vmatprep.subr.mxu0 0.0
          %2689 = vmatpush1.msra.mxu0 1.0
          %2690 = vmatprep.subr.mxu0 0.0
          %2691 = vmatpush1.msra.mxu0 1.0
          %2692 = vmatprep.subr.mxu0 0.0
          %2693 = vmatpush1.msra.mxu0 1.0
          %2694 = vmatprep.subr.mxu0 0.0
          %2695 = vmatpush1.msra.mxu0 1.0
          %2696 = vmatprep.subr.mxu0 0.0
          %2697 = vmatpush1.msra.mxu0 1.0
          %2698 = vmatprep.subr.mxu0 0.0
          %2699 = vmatpush1.msra.mxu0 1.0
          %2700 = vmatprep.subr.mxu0 0.0
          %2701 = vmatpush1.msra.mxu0 1.0
          %2702 = vmatprep.subr.mxu0 0.0
          %2703 = vmatpush1.msra.mxu0 1.0
          %2704 = vmatprep.subr.mxu0 0.0
          %2705 = vmatpush1.msra.mxu0 1.0
          %2706 = vmatprep.subr.mxu0 0.0
          %2707 = vmatpush1.msra.mxu0 1.0
          %2708 = vmatprep.subr.mxu0 0.0
          %2709 = vmatpush1.msra.mxu0 1.0
          %2710 = vmatprep.subr.mxu0 0.0
          %2711 = vmatpush1.msra.mxu0 1.0
          %2712 = vmatprep.subr.mxu0 0.0
          %2713 = vmatpush1.msra.mxu0 1.0
          %2714 = vmatprep.subr.mxu0 0.0
          %2715 = vmatpush1.msra.mxu0 1.0
          %2716 = vmatprep.subr.mxu0 0.0
          %2717 = vmatpush1.msra.mxu0 1.0
          %2718 = vmatprep.subr.mxu0 0.0
          %2719 = vmatpush1.msra.mxu0 1.0
          %2720 = vmatprep.subr.mxu0 0.0
          %2721 = vmatpush1.msra.mxu0 1.0
          %2722 = vmatprep.subr.mxu0 0.0
          %2723 = vmatpush1.msra.mxu0 1.0
          %2724 = vmatprep.subr.mxu0 0.0
          %2725 = vmatpush1.msra.mxu0 1.0
          %2726 = vmatprep.subr.mxu0 0.0
          %2727 = vmatpush1.msra.mxu0 1.0
          %2728 = vmatprep.mubr.f32.mxu0 %v2269
          %2729 = vmatmul.mubr.f32.gmra.mrb[0].mxu0 %v2268
          %v2730 = vpop.f32.mrb[0].mxu0
          %v2731 = vadd.f32 0.0, %v2730
          %v2732 = vpop.f32.mrb[0].mxu0
          %2733 = vmatprep.mubr.f32.mxu0 %v2271
          %2734 = vmatmul.mubr.f32.gmra.mrb[0].mxu0 %v2270
          %v2735 = vpop.f32.mrb[0].mxu0
          %v2736 = vadd.f32 0.0, %v2735
          %v2737 = vpop.f32.mrb[0].mxu0
          %2738 = vmatprep.mubr.f32.mxu0 %v2273
          %2739 = vmatmul.mubr.f32.gmra.mrb[0].mxu0 %v2272
          %v2740 = vpop.f32.mrb[0].mxu0
          %v2741 = vadd.f32 0.0, %v2740
          %v2742 = vpop.f32.mrb[0].mxu0
          %2743 = vmatprep.mubr.f32.mxu0 %v2275
          %2744 = vmatmul.mubr.f32.gmra.mrb[0].mxu0 %v2274
          %v2745 = vpop.f32.mrb[0].mxu0
          %v2746 = vadd.f32 0.0, %v2745
          %v2747 = vpop.f32.mrb[0].mxu0
          %2748 = vmatprep.mubr.f32.mxu0 %v2277
          %2749 = vmatmul.mubr.f32.gmra.mrb[0].mxu0 %v2276
          %v2750 = vpop.f32.mrb[0].mxu0
          %v2751 = vadd.f32 0.0, %v2750
          %v2752 = vpop.f32.mrb[0].mxu0
          %2753 = vmatprep.mubr.f32.mxu0 %v2279
          %2754 = vmatmul.mubr.f32.gmra.mrb[0].mxu0 %v2278
          %v2755 = vpop.f32.mrb[0].mxu0
          %v2756 = vadd.f32 0.0, %v2755
          %v2757 = vpop.f32.mrb[0].mxu0
          %2758 = vmatprep.mubr.f32.mxu0 %v2281
          %2759 = vmatmul.mubr.f32.gmra.mrb[0].mxu0 %v2280
          %v2760 = vpop.f32.mrb[0].mxu0
          %v2761 = vadd.f32 0.0, %v2760
          %v2762 = vpop.f32.mrb[0].mxu0
          %2763 = vmatprep.mubr.f32.mxu0 %v2283
          %2764 = vmatmul.mubr.f32.gmra.mrb[0].mxu0 %v2282
          %v2765 = vpop.f32.mrb[0].mxu0
          %v2766 = vadd.f32 0.0, %v2765
          %v2767 = vpop.f32.mrb[0].mxu0
          %2768 = vmatprep.mubr.f32.mxu0 %v2285
          %2769 = vmatmul.mubr.f32.gmra.mrb[0].mxu0 %v2284
          %v2770 = vpop.f32.mrb[0].mxu0
          %v2771 = vadd.f32 0.0, %v2770
          %v2772 = vpop.f32.mrb[0].mxu0
          %2773 = vmatprep.mubr.f32.mxu0 %v2287
          %2774 = vmatmul.mubr.f32.gmra.mrb[0].mxu0 %v2286
          %v2775 = vpop.f32.mrb[0].mxu0
          %v2776 = vadd.f32 0.0, %v2775
          %v2777 = vpop.f32.mrb[0].mxu0
          %2778 = vmatprep.mubr.f32.mxu0 %v2289
          %2779 = vmatmul.mubr.f32.gmra.mrb[0].mxu0 %v2288
          %v2780 = vpop.f32.mrb[0].mxu0
          %v2781 = vadd.f32 0.0, %v2780
          %v2782 = vpop.f32.mrb[0].mxu0
          %2783 = vmatprep.mubr.f32.mxu0 %v2291
          %2784 = vmatmul.mubr.f32.gmra.mrb[0].mxu0 %v2290
          %v2785 = vpop.f32.mrb[0].mxu0
          %v2786 = vadd.f32 0.0, %v2785
          %v2787 = vpop.f32.mrb[0].mxu0
          %2788 = vmatprep.mubr.f32.mxu0 %v2293
          %2789 = vmatmul.mubr.f32.gmra.mrb[0].mxu0 %v2292
          %v2790 = vpop.f32.mrb[0].mxu0
          %v2791 = vadd.f32 0.0, %v2790
          %v2792 = vpop.f32.mrb[0].mxu0
          %2793 = vmatprep.mubr.f32.mxu0 %v2295
          %2794 = vmatmul.mubr.f32.gmra.mrb[0].mxu0 %v2294
          %v2795 = vpop.f32.mrb[0].mxu0
          %v2796 = vadd.f32 0.0, %v2795
          %v2797 = vpop.f32.mrb[0].mxu0
          %2798 = vmatprep.mubr.f32.mxu0 %v2297
          %2799 = vmatmul.mubr.f32.gmra.mrb[0].mxu0 %v2296
          %v2800 = vpop.f32.mrb[0].mxu0
          %v2801 = vadd.f32 0.0, %v2800
          %v2802 = vpop.f32.mrb[0].mxu0
          %2803 = vmatprep.mubr.f32.mxu0 %v2299
          %2804 = vmatmul.mubr.f32.gmra.mrb[0].mxu0 %v2298
          %v2805 = vpop.f32.mrb[0].mxu0
          %v2806 = vadd.f32 0.0, %v2805
          %v2807 = vpop.f32.mrb[0].mxu0
          %2808 = vdwg.mxu0
          %v2809 = vadd.f32 %v2648, %v2731
          %v2810 = vadd.f32 %v2649, %v2736
          %v2811 = vadd.f32 %v2650, %v2741
          %v2812 = vadd.f32 %v2651, %v2746
          %v2813 = vadd.f32 %v2652, %v2751
          %v2814 = vadd.f32 %v2653, %v2756
          %v2815 = vadd.f32 %v2654, %v2761
          %v2816 = vadd.f32 %v2655, %v2766
          %v2817 = vadd.f32 %v2656, %v2771
          %v2818 = vadd.f32 %v2657, %v2776
          %v2819 = vadd.f32 %v2658, %v2781
          %v2820 = vadd.f32 %v2659, %v2786
          %v2821 = vadd.f32 %v2660, %v2791
          %v2822 = vadd.f32 %v2661, %v2796
          %v2823 = vadd.f32 %v2662, %v2801
          %v2824 = vadd.f32 %v2663, %v2806
          %vm2825 = vcmask 7168
          %2826 = vst.msk [vmem:[%s1127] sm:$0xff] %vm2825, %v2809
          %2827 = vst.msk [vmem:[%s1127 + $0x8] sm:$0xff] %vm2825, %v2810
          %2828 = vst.msk [vmem:[%s1127 + $0x10] sm:$0xff] %vm2825, %v2811
          %2829 = vst.msk [vmem:[%s1127 + $0x18] sm:$0xff] %vm2825, %v2812
          %2830 = vst.msk [vmem:[%s1127 + $0x20] sm:$0xff] %vm2825, %v2813
          %2831 = vst.msk [vmem:[%s1127 + $0x28] sm:$0xff] %vm2825, %v2814
          %2832 = vst.msk [vmem:[%s1127 + $0x30] sm:$0xff] %vm2825, %v2815
          %2833 = vst.msk [vmem:[%s1127 + $0x38] sm:$0xff] %vm2825, %v2816
          %2834 = vst.msk [vmem:[%s1127 + $0x40] sm:$0xff] %vm2825, %v2817
          %2835 = vst.msk [vmem:[%s1127 + $0x48] sm:$0xff] %vm2825, %v2818
          %2836 = vst.msk [vmem:[%s1127 + $0x50] sm:$0xff] %vm2825, %v2819
          %2837 = vst.msk [vmem:[%s1127 + $0x58] sm:$0xff] %vm2825, %v2820
          %2838 = vst.msk [vmem:[%s1127 + $0x60] sm:$0xff] %vm2825, %v2821
          %2839 = vst.msk [vmem:[%s1127 + $0x68] sm:$0xff] %vm2825, %v2822
          %2840 = vst.msk [vmem:[%s1127 + $0x70] sm:$0xff] %vm2825, %v2823
          %2841 = vst.msk [vmem:[%s1127 + $0x78] sm:$0xff] %vm2825, %v2824
        $region177: #{tpu_custom_call.1} parent=156 // pred_fallthru
          _
        %p2842 = scmp.eq.s32.totalorder %s23, 1
        // Predicated region
        $region178: #{tpu_custom_call.1} parent=156 // pred_check
          %p2843 = pneg %p2842
        $region179: #{tpu_custom_call.1} parent=156 // pred_check_branch
          %2845 = sbr.rel (%p2843) target = $region181
        $region180: #{tpu_custom_call.1} parent=156 // pred_region
          %v2846 = vld [vmem:[%s1127] sm:$0xff]
          %v2847 = vld [vmem:[%s1127 + $0x8] sm:$0xff]
          %v2848 = vld [vmem:[%s1127 + $0x10] sm:$0xff]
          %v2849 = vld [vmem:[%s1127 + $0x18] sm:$0xff]
          %v2850 = vld [vmem:[%s1127 + $0x20] sm:$0xff]
          %v2851 = vld [vmem:[%s1127 + $0x28] sm:$0xff]
          %v2852 = vld [vmem:[%s1127 + $0x30] sm:$0xff]
          %v2853 = vld [vmem:[%s1127 + $0x38] sm:$0xff]
          %v2854 = vld [vmem:[%s1127 + $0x40] sm:$0xff]
          %v2855 = vld [vmem:[%s1127 + $0x48] sm:$0xff]
          %v2856 = vld [vmem:[%s1127 + $0x50] sm:$0xff]
          %v2857 = vld [vmem:[%s1127 + $0x58] sm:$0xff]
          %v2858 = vld [vmem:[%s1127 + $0x60] sm:$0xff]
          %v2859 = vld [vmem:[%s1127 + $0x68] sm:$0xff]
          %v2860 = vld [vmem:[%s1127 + $0x70] sm:$0xff]
          %v2861 = vld [vmem:[%s1127 + $0x78] sm:$0xff]
          %v2862 = vld [vmem:[%s1100] sm:$0xff]
          %v2863 = vld [vmem:[%s1100 + $0x8] sm:$0xff]
          %v2864 = vld [vmem:[%s1100 + $0x10] sm:$0xff]
          %v2865 = vld [vmem:[%s1100 + $0x18] sm:$0xff]
          %v2866 = vld [vmem:[%s1100 + $0x20] sm:$0xff]
          %v2867 = vld [vmem:[%s1100 + $0x28] sm:$0xff]
          %v2868 = vld [vmem:[%s1100 + $0x30] sm:$0xff]
          %v2869 = vld [vmem:[%s1100 + $0x38] sm:$0xff]
          %v2870 = vld [vmem:[%s1100 + $0x40] sm:$0xff]
          %v2871 = vld [vmem:[%s1100 + $0x48] sm:$0xff]
          %v2872 = vld [vmem:[%s1100 + $0x50] sm:$0xff]
          %v2873 = vld [vmem:[%s1100 + $0x58] sm:$0xff]
          %v2874 = vld [vmem:[%s1100 + $0x60] sm:$0xff]
          %v2875 = vld [vmem:[%s1100 + $0x68] sm:$0xff]
          %v2876 = vld [vmem:[%s1100 + $0x70] sm:$0xff]
          %v2877 = vld [vmem:[%s1100 + $0x78] sm:$0xff]
          %v2878 = vmul.f32 %v2846, %v2862
          %v2879 = vmul.f32 %v2847, %v2863
          %v2880 = vmul.f32 %v2848, %v2864
          %v2881 = vmul.f32 %v2849, %v2865
          %v2882 = vmul.f32 %v2850, %v2866
          %v2883 = vmul.f32 %v2851, %v2867
          %v2884 = vmul.f32 %v2852, %v2868
          %v2885 = vmul.f32 %v2853, %v2869
          %v2886 = vmul.f32 %v2854, %v2870
          %v2887 = vmul.f32 %v2855, %v2871
          %v2888 = vmul.f32 %v2856, %v2872
          %v2889 = vmul.f32 %v2857, %v2873
          %v2890 = vmul.f32 %v2858, %v2874
          %v2891 = vmul.f32 %v2859, %v2875
          %v2892 = vmul.f32 %v2860, %v2876
          %v2893 = vmul.f32 %v2861, %v2877
          %vm2894 = vcmask 7168
          %2895 = vst.msk [vmem:[%s1127] sm:$0xff] %vm2894, %v2878
          %2896 = vst.msk [vmem:[%s1127 + $0x8] sm:$0xff] %vm2894, %v2879
          %2897 = vst.msk [vmem:[%s1127 + $0x10] sm:$0xff] %vm2894, %v2880
          %2898 = vst.msk [vmem:[%s1127 + $0x18] sm:$0xff] %vm2894, %v2881
          %2899 = vst.msk [vmem:[%s1127 + $0x20] sm:$0xff] %vm2894, %v2882
          %2900 = vst.msk [vmem:[%s1127 + $0x28] sm:$0xff] %vm2894, %v2883
          %2901 = vst.msk [vmem:[%s1127 + $0x30] sm:$0xff] %vm2894, %v2884
          %2902 = vst.msk [vmem:[%s1127 + $0x38] sm:$0xff] %vm2894, %v2885
          %2903 = vst.msk [vmem:[%s1127 + $0x40] sm:$0xff] %vm2894, %v2886
          %2904 = vst.msk [vmem:[%s1127 + $0x48] sm:$0xff] %vm2894, %v2887
          %2905 = vst.msk [vmem:[%s1127 + $0x50] sm:$0xff] %vm2894, %v2888
          %2906 = vst.msk [vmem:[%s1127 + $0x58] sm:$0xff] %vm2894, %v2889
          %2907 = vst.msk [vmem:[%s1127 + $0x60] sm:$0xff] %vm2894, %v2890
          %2908 = vst.msk [vmem:[%s1127 + $0x68] sm:$0xff] %vm2894, %v2891
          %2909 = vst.msk [vmem:[%s1127 + $0x70] sm:$0xff] %vm2894, %v2892
          %2910 = vst.msk [vmem:[%s1127 + $0x78] sm:$0xff] %vm2894, %v2893
        $region181: #{tpu_custom_call.1} parent=156 // pred_fallthru
          _
        %s2911 = smul.u32 16, %s22
        %p2912 = scmp.lt.s32.totalorder %s2911, 47
        %s2913 = scalar_select %p2912, %s2911, 47
        %s2914 = smul.addr %s2913, 8
        %s2915 = scalar_lea.vmem %s7, %s2914
        // Predicated region
        $region182: #{tpu_custom_call.1} parent=156 // pred_check
          %p2916 = pneg %p232
        $region183: #{tpu_custom_call.1} parent=156 // pred_check_branch
          %2918 = sbr.rel (%p2916) target = $region185
        $region184: #{tpu_custom_call.1} parent=156 // pred_region
          %s2919 = smul.u32 16, %s22
        $region185: #{tpu_custom_call.1} parent=156 // pred_fallthru
          _
      $region157: #{tpu_custom_call.1} parent=5 // pred_fallthru
        _
      %p2920 = scmp.le.s32.totalorder 2, %s13
      // Predicated region
      $region186: #{tpu_custom_call.1} parent=5 // pred_check
        %p2921 = pneg %p2920
      $region187: #{tpu_custom_call.1} parent=5 // pred_check_branch
        %2923 = sbr.rel (%p2921) target = $region189
      $region188: #{tpu_custom_call.1} parent=5 // pred_region
        %s2924 = ssub.s32 %s13, 2
        // Predicated region
        $region190: #{tpu_custom_call.1} parent=188 // pred_check
          %p2925 = pneg %p238
        $region191: #{tpu_custom_call.1} parent=188 // pred_check_branch
          %2927 = sbr.rel (%p2925) target = $region193
        $region192: #{tpu_custom_call.1} parent=188 // pred_region
          %s2928 = smul.u32 16, %s24
          %p2929 = scmp.lt.s32.totalorder %s2928, 47
          %s2930 = scalar_select %p2929, %s2928, 47
          %s2931 = smul.addr %s2930, 8
          %s2932 = scalar_lea.vmem %s7, %s2931
        $region193: #{tpu_custom_call.1} parent=188 // pred_fallthru
          _
      $region189: #{tpu_custom_call.1} parent=5 // pred_fallthru
        _
    $region6: #{tpu_custom_call.1} parent=1 // loop_footer
      %s17 = sadd.s32 1, %s13
    $region7: #{tpu_custom_call.1} parent=1 // loop_footer_branch
      %12 = sbr.rel target = $region3
    $region8: #{tpu_custom_call.1} parent=1 // loop_exit
      _

</llo_original>
